<compile_context>
chip_gen: v7x
topology: tpu7x:2x2x1
jax: 0.10.0
libtpu: 0.0.40
codegen_flags: <defaults>
</compile_context>

<pallas_src>
import math
import numpy as np
import jax
import jax.numpy as jnp
from jax import lax
from jax.experimental import pallas as pl
from jax.experimental.pallas import tpu as pltpu

WINDOW_SIZE = 11
SIGMA = 1.5
C1 = 0.01 ** 2
C2 = 0.03 ** 2


def _gaussian_1d(window_size: int, sigma: float) -> np.ndarray:
    # Same construction as gaussian2 (deterministic, no checkpoint).
    g = np.array(
        [math.exp(-((x - window_size // 2) ** 2) / float(2 * sigma ** 2))
         for x in range(window_size)],
        dtype=np.float64,
    )
    return g / g.sum()


def _banded_gaussian(n: int, window_size: int, sigma: float) -> np.ndarray:
    """(n, n) banded matrix G with G[i, j] = g1d[j - i + pad] on the band.

    (G @ x) is the 1-D zero-padded "same" Gaussian convolution of x along
    axis 0, i.e. exactly what F.conv2d(..., padding=K//2) does on that axis.
    """
    g1d = _gaussian_1d(window_size, sigma)
    pad = window_size // 2
    G = np.zeros((n, n), dtype=np.float64)
    for i in range(n):
        for t in range(window_size):
            j = i + t - pad
            if 0 <= j < n:
                G[i, j] = g1d[t]
    return G.astype(np.float32)


_WINDOW_2D = np.outer(_gaussian_1d(WINDOW_SIZE, SIGMA),
                      _gaussian_1d(WINDOW_SIZE, SIGMA)).astype(np.float32)


def _make_ssim_kernel(H: int, W: int, CB: int):
    def kernel(img1_ref, img2_ref, gh_ref, gwt_ref, out_ref):
        gh = gh_ref[...]     # (H, H) f32, resident across the grid
        gwt = gwt_ref[...]   # (W, W) f32

        def conv(m):
            t = jnp.dot(gh, m, preferred_element_type=jnp.float32)
            return jnp.dot(t, gwt, preferred_element_type=jnp.float32)

        for c in range(CB):   # CB is small (<= C); static unroll
            x1 = img1_ref[0, c, :, :].astype(jnp.float32)   # (H, W)
            x2 = img2_ref[0, c, :, :].astype(jnp.float32)

            mu1 = conv(x1)
            mu2 = conv(x2)
            s11 = conv(x1 * x1)
            s22 = conv(x2 * x2)
            s12 = conv(x1 * x2)

            mu1_sq = mu1 * mu1
            mu2_sq = mu2 * mu2
            mu1mu2 = mu1 * mu2
            sigma1_sq = s11 - mu1_sq
            sigma2_sq = s22 - mu2_sq
            sigma12 = s12 - mu1mu2

            num = (2.0 * mu1mu2 + C1) * (2.0 * sigma12 + C2)
            # NOTE: reproduces the reference's operator precedence exactly:
            # denominator is (mu1^2 + mu2^2 + C1) * sigma1^2 + sigma2^2 + C2.
            den = (mu1_sq + mu2_sq + C1) * sigma1_sq + sigma2_sq + C2
            ssim_map = num * pl.reciprocal(den, approx=False)

            # Fused reduction: only the per-plane sum leaves the kernel.
            plane_sum = jnp.sum(
                jnp.sum(ssim_map, axis=-1, keepdims=True), axis=-2, keepdims=True)
            out_ref[0, c, :, :] = plane_sum    # (1, 1)

    return kernel


def ssim(img1, img2, window_size: int = WINDOW_SIZE, size_average: bool = True):
    assert img1.shape == img2.shape
    B, C, H, W = img1.shape

    gh = jnp.asarray(_banded_gaussian(H, window_size, SIGMA))       # (H, H)
    gwt = jnp.asarray(_banded_gaussian(W, window_size, SIGMA).T)    # (W, W)

    # Per-step VMEM working set: 2 inputs x 2 pipeline buffers + ~8 HxW f32
    # temporaries per channel.  Fold channels into one block when small.
    in_bytes = H * W * img1.dtype.itemsize
    per_channel = 2 * 2 * in_bytes + 8 * H * W * 4
    CB = C if C * per_channel < 8 * 1024 * 1024 else 1
    # TODO(synk): for very large planes (>= ~1080p on v7x's 64 MiB VMEM) also
    # strip-tile H with a (K-1)-row halo instead of relying on CB=1 alone.

    kernel = _make_ssim_kernel(H, W, CB)

    sums = pl.pallas_call(
        kernel,
        out_shape=jax.ShapeDtypeStruct((B, C, 1, 1), jnp.float32),
        grid_spec=pltpu.PrefetchScalarGridSpec(
            num_scalar_prefetch=0,
            grid=(B, C // CB),
            in_specs=[
                pl.BlockSpec((1, CB, H, W), lambda b, c: (b, c, 0, 0)),
                pl.BlockSpec((1, CB, H, W), lambda b, c: (b, c, 0, 0)),
                pl.BlockSpec((H, H), lambda b, c: (0, 0)),
                pl.BlockSpec((W, W), lambda b, c: (0, 0)),
            ],
            out_specs=pl.BlockSpec((1, CB, 1, 1), lambda b, c: (b, c, 0, 0)),
        ),
        compiler_params=pltpu.CompilerParams(
            dimension_semantics=("parallel", "parallel")),
    )(img1, img2, gh, gwt)

    sums = sums.reshape(B, C)
    if size_average:
        return sums.sum() / (B * C * H * W)
    return sums.sum(axis=1) / (C * H * W)   # matches .mean(1).mean(1).mean(1)


def _ssim_reference(img1, img2, size_average: bool = True):
    """Pure-JAX reference (lax depthwise conv) for correctness check."""
    B, C, H, W = img1.shape
    K = WINDOW_SIZE
    w = jnp.tile(jnp.asarray(_WINDOW_2D)[None, None], (C, 1, 1, 1))  # (C,1,K,K)

    def dwconv(x):
        return lax.conv_general_dilated(
            x, w, window_strides=(1, 1), padding=[(K // 2, K // 2)] * 2,
            dimension_numbers=("NCHW", "OIHW", "NCHW"), feature_group_count=C)

    x1 = img1.astype(jnp.float32)
    x2 = img2.astype(jnp.float32)
    mu1 = dwconv(x1)
    mu2 = dwconv(x2)
    mu1_sq, mu2_sq, mu1mu2 = mu1 * mu1, mu2 * mu2, mu1 * mu2
    sigma1_sq = dwconv(x1 * x1) - mu1_sq
    sigma2_sq = dwconv(x2 * x2) - mu2_sq
    sigma12 = dwconv(x1 * x2) - mu1mu2
    ssim_map = ((2 * mu1mu2 + C1) * (2 * sigma12 + C2)
                / ((mu1_sq + mu2_sq + C1) * sigma1_sq + sigma2_sq + C2))
    if size_average:
        return ssim_map.mean()
    return ssim_map.mean(axis=(1, 2, 3))


if __name__ == "__main__":
    key = jax.random.PRNGKey(0)
    k1, k2 = jax.random.split(key)
    B, C, H, W = 2, 3, 16, 16          # channel=3 matches SSIM.__init__ default
    img1 = jax.random.uniform(k1, (B, C, H, W), dtype=jnp.float32)
    img2 = jax.random.uniform(k2, (B, C, H, W), dtype=jnp.float32)

    out = ssim(img1, img2, size_average=True)
    jax.block_until_ready(out)
    ref = _ssim_reference(img1, img2, size_average=True)
    assert jnp.allclose(out, ref, atol=1e-4, rtol=1e-4), (out, ref)

    out_b = ssim(img1, img2, size_average=False)
    jax.block_until_ready(out_b)
    ref_b = _ssim_reference(img1, img2, size_average=False)
    assert jnp.allclose(out_b, ref_b, atol=1e-4, rtol=1e-4), (out_b, ref_b)

    print("KERNEL_OK")
</pallas_src>

<mosaic_0001>
module attributes {stable_mosaic.version = 11 : i64} {
  func.func @kernel(%arg0: i32, %arg1: i32, %arg2: memref<1x3x16x16xf32, #tpu.memory_space<vmem>>, %arg3: memref<1x3x16x16xf32, #tpu.memory_space<vmem>>, %arg4: memref<16x16xf32, #tpu.memory_space<vmem>>, %arg5: memref<16x16xf32, #tpu.memory_space<vmem>>, %arg6: memref<1x3x1x1xf32, #tpu.memory_space<vmem>>) attributes {dimension_semantics = [#tpu.dimension_semantics<parallel>, #tpu.dimension_semantics<parallel>], iteration_bounds = array<i64: 2, 1>, scalar_prefetch = 0 : i64, scratch_operands = 0 : i64, tpu.core_type = #tpu.core_type<tc>, window_params = [{transform_indices = @transform_0, window_bounds = array<i64: 1, 3, 16, 16>}, {transform_indices = @transform_1, window_bounds = array<i64: 1, 3, 16, 16>}, {pipeline_mode = #tpu.pipeline_mode<synchronous>, transform_indices = @transform_2, window_bounds = array<i64: 16, 16>}, {pipeline_mode = #tpu.pipeline_mode<synchronous>, transform_indices = @transform_3, window_bounds = array<i64: 16, 16>}, {transform_indices = @transform_4, window_bounds = array<i64: 1, 3, 1, 1>}]} {
    %c0 = arith.constant 0 : index
    %c0_0 = arith.constant 0 : index
    %0 = vector.load %arg4[%c0, %c0_0] : memref<16x16xf32, #tpu.memory_space<vmem>>, vector<16x16xf32>
    %c0_1 = arith.constant 0 : index
    %c0_2 = arith.constant 0 : index
    %1 = vector.load %arg5[%c0_1, %c0_2] : memref<16x16xf32, #tpu.memory_space<vmem>>, vector<16x16xf32>
    %c0_3 = arith.constant 0 : index
    %c0_4 = arith.constant 0 : index
    %c0_5 = arith.constant 0 : index
    %c0_6 = arith.constant 0 : index
    %2 = vector.load %arg2[%c0_3, %c0_4, %c0_5, %c0_6] : memref<1x3x16x16xf32, #tpu.memory_space<vmem>>, vector<1x1x16x16xf32>
    %3 = vector.shape_cast %2 : vector<1x1x16x16xf32> to vector<16x16xf32>
    %c0_7 = arith.constant 0 : index
    %c0_8 = arith.constant 0 : index
    %c0_9 = arith.constant 0 : index
    %c0_10 = arith.constant 0 : index
    %4 = vector.load %arg3[%c0_7, %c0_8, %c0_9, %c0_10] : memref<1x3x16x16xf32, #tpu.memory_space<vmem>>, vector<1x1x16x16xf32>
    %5 = vector.shape_cast %4 : vector<1x1x16x16xf32> to vector<16x16xf32>
    %cst = arith.constant dense<0.000000e+00> : vector<16x16xf32>
    %6 = tpu.matmul %0, %3, %cst {dimension_numbers = #tpu.dot_dimension_numbers<[1], [0], [0], [1], [0, 0, 1, 1], [], []>} : vector<16x16xf32>, vector<16x16xf32>, vector<16x16xf32> -> vector<16x16xf32>
    %cst_11 = arith.constant dense<0.000000e+00> : vector<16x16xf32>
    %7 = tpu.matmul %6, %1, %cst_11 {dimension_numbers = #tpu.dot_dimension_numbers<[1], [0], [0], [1], [0, 0, 1, 1], [], []>} : vector<16x16xf32>, vector<16x16xf32>, vector<16x16xf32> -> vector<16x16xf32>
    %cst_12 = arith.constant dense<0.000000e+00> : vector<16x16xf32>
    %8 = tpu.matmul %0, %5, %cst_12 {dimension_numbers = #tpu.dot_dimension_numbers<[1], [0], [0], [1], [0, 0, 1, 1], [], []>} : vector<16x16xf32>, vector<16x16xf32>, vector<16x16xf32> -> vector<16x16xf32>
    %cst_13 = arith.constant dense<0.000000e+00> : vector<16x16xf32>
    %9 = tpu.matmul %8, %1, %cst_13 {dimension_numbers = #tpu.dot_dimension_numbers<[1], [0], [0], [1], [0, 0, 1, 1], [], []>} : vector<16x16xf32>, vector<16x16xf32>, vector<16x16xf32> -> vector<16x16xf32>
    %10 = arith.mulf %3, %3 : vector<16x16xf32>
    %cst_14 = arith.constant dense<0.000000e+00> : vector<16x16xf32>
    %11 = tpu.matmul %0, %10, %cst_14 {dimension_numbers = #tpu.dot_dimension_numbers<[1], [0], [0], [1], [0, 0, 1, 1], [], []>} : vector<16x16xf32>, vector<16x16xf32>, vector<16x16xf32> -> vector<16x16xf32>
    %cst_15 = arith.constant dense<0.000000e+00> : vector<16x16xf32>
    %12 = tpu.matmul %11, %1, %cst_15 {dimension_numbers = #tpu.dot_dimension_numbers<[1], [0], [0], [1], [0, 0, 1, 1], [], []>} : vector<16x16xf32>, vector<16x16xf32>, vector<16x16xf32> -> vector<16x16xf32>
    %13 = arith.mulf %5, %5 : vector<16x16xf32>
    %cst_16 = arith.constant dense<0.000000e+00> : vector<16x16xf32>
    %14 = tpu.matmul %0, %13, %cst_16 {dimension_numbers = #tpu.dot_dimension_numbers<[1], [0], [0], [1], [0, 0, 1, 1], [], []>} : vector<16x16xf32>, vector<16x16xf32>, vector<16x16xf32> -> vector<16x16xf32>
    %cst_17 = arith.constant dense<0.000000e+00> : vector<16x16xf32>
    %15 = tpu.matmul %14, %1, %cst_17 {dimension_numbers = #tpu.dot_dimension_numbers<[1], [0], [0], [1], [0, 0, 1, 1], [], []>} : vector<16x16xf32>, vector<16x16xf32>, vector<16x16xf32> -> vector<16x16xf32>
    %16 = arith.mulf %3, %5 : vector<16x16xf32>
    %cst_18 = arith.constant dense<0.000000e+00> : vector<16x16xf32>
    %17 = tpu.matmul %0, %16, %cst_18 {dimension_numbers = #tpu.dot_dimension_numbers<[1], [0], [0], [1], [0, 0, 1, 1], [], []>} : vector<16x16xf32>, vector<16x16xf32>, vector<16x16xf32> -> vector<16x16xf32>
    %cst_19 = arith.constant dense<0.000000e+00> : vector<16x16xf32>
    %18 = tpu.matmul %17, %1, %cst_19 {dimension_numbers = #tpu.dot_dimension_numbers<[1], [0], [0], [1], [0, 0, 1, 1], [], []>} : vector<16x16xf32>, vector<16x16xf32>, vector<16x16xf32> -> vector<16x16xf32>
    %19 = arith.mulf %7, %7 : vector<16x16xf32>
    %20 = arith.mulf %9, %9 : vector<16x16xf32>
    %21 = arith.mulf %7, %9 : vector<16x16xf32>
    %22 = arith.subf %12, %19 : vector<16x16xf32>
    %23 = arith.subf %15, %20 : vector<16x16xf32>
    %24 = arith.subf %18, %21 : vector<16x16xf32>
    %cst_20 = arith.constant 2.000000e+00 : f32
    %25 = vector.broadcast %cst_20 : f32 to vector<16x16xf32>
    %26 = arith.mulf %25, %21 : vector<16x16xf32>
    %cst_21 = arith.constant 9.99999974E-5 : f32
    %27 = vector.broadcast %cst_21 : f32 to vector<16x16xf32>
    %28 = arith.addf %26, %27 : vector<16x16xf32>
    %cst_22 = arith.constant 2.000000e+00 : f32
    %29 = vector.broadcast %cst_22 : f32 to vector<16x16xf32>
    %30 = arith.mulf %29, %24 : vector<16x16xf32>
    %cst_23 = arith.constant 8.99999984E-4 : f32
    %31 = vector.broadcast %cst_23 : f32 to vector<16x16xf32>
    %32 = arith.addf %30, %31 : vector<16x16xf32>
    %33 = arith.mulf %28, %32 : vector<16x16xf32>
    %34 = arith.addf %19, %20 : vector<16x16xf32>
    %cst_24 = arith.constant 9.99999974E-5 : f32
    %35 = vector.broadcast %cst_24 : f32 to vector<16x16xf32>
    %36 = arith.addf %34, %35 : vector<16x16xf32>
    %37 = arith.mulf %36, %22 : vector<16x16xf32>
    %38 = arith.addf %37, %23 : vector<16x16xf32>
    %cst_25 = arith.constant 8.99999984E-4 : f32
    %39 = vector.broadcast %cst_25 : f32 to vector<16x16xf32>
    %40 = arith.addf %38, %39 : vector<16x16xf32>
    %41 = tpu.reciprocal %40 : vector<16x16xf32> -> vector<16x16xf32>
    %42 = arith.mulf %33, %41 : vector<16x16xf32>
    %cst_26 = arith.constant dense<0.000000e+00> : vector<16xf32>
    %43 = vector.multi_reduction <add>, %42, %cst_26 [1] : vector<16x16xf32> to vector<16xf32>
    %44 = vector.shape_cast %43 : vector<16xf32> to vector<16x1xf32>
    %cst_27 = arith.constant dense<0.000000e+00> : vector<1xf32>
    %45 = vector.multi_reduction <add>, %44, %cst_27 [0] : vector<16x1xf32> to vector<1xf32>
    %46 = vector.shape_cast %45 : vector<1xf32> to vector<1x1xf32>
    %c0_28 = arith.constant 0 : index
    %c0_29 = arith.constant 0 : index
    %c0_30 = arith.constant 0 : index
    %c0_31 = arith.constant 0 : index
    %47 = vector.load %arg6[%c0_28, %c0_29, %c0_30, %c0_31] : memref<1x3x1x1xf32, #tpu.memory_space<vmem>>, vector<1x1x1x1xf32>
    %48 = vector.shape_cast %47 : vector<1x1x1x1xf32> to vector<1x1xf32>
    %49 = vector.shape_cast %46 : vector<1x1xf32> to vector<1x1x1x1xf32>
    tpu.vector_store %arg6[%c0_28, %c0_29, %c0_30, %c0_31], %49 {strides = array<i32>} : memref<1x3x1x1xf32, #tpu.memory_space<vmem>>, vector<1x1x1x1xf32>,
    %c0_32 = arith.constant 0 : index
    %c1 = arith.constant 1 : index
    %c0_33 = arith.constant 0 : index
    %c0_34 = arith.constant 0 : index
    %50 = vector.load %arg2[%c0_32, %c1, %c0_33, %c0_34] : memref<1x3x16x16xf32, #tpu.memory_space<vmem>>, vector<1x1x16x16xf32>
    %51 = vector.shape_cast %50 : vector<1x1x16x16xf32> to vector<16x16xf32>
    %c0_35 = arith.constant 0 : index
    %c1_36 = arith.constant 1 : index
    %c0_37 = arith.constant 0 : index
    %c0_38 = arith.constant 0 : index
    %52 = vector.load %arg3[%c0_35, %c1_36, %c0_37, %c0_38] : memref<1x3x16x16xf32, #tpu.memory_space<vmem>>, vector<1x1x16x16xf32>
    %53 = vector.shape_cast %52 : vector<1x1x16x16xf32> to vector<16x16xf32>
    %cst_39 = arith.constant dense<0.000000e+00> : vector<16x16xf32>
    %54 = tpu.matmul %0, %51, %cst_39 {dimension_numbers = #tpu.dot_dimension_numbers<[1], [0], [0], [1], [0, 0, 1, 1], [], []>} : vector<16x16xf32>, vector<16x16xf32>, vector<16x16xf32> -> vector<16x16xf32>
    %cst_40 = arith.constant dense<0.000000e+00> : vector<16x16xf32>
    %55 = tpu.matmul %54, %1, %cst_40 {dimension_numbers = #tpu.dot_dimension_numbers<[1], [0], [0], [1], [0, 0, 1, 1], [], []>} : vector<16x16xf32>, vector<16x16xf32>, vector<16x16xf32> -> vector<16x16xf32>
    %cst_41 = arith.constant dense<0.000000e+00> : vector<16x16xf32>
    %56 = tpu.matmul %0, %53, %cst_41 {dimension_numbers = #tpu.dot_dimension_numbers<[1], [0], [0], [1], [0, 0, 1, 1], [], []>} : vector<16x16xf32>, vector<16x16xf32>, vector<16x16xf32> -> vector<16x16xf32>
    %cst_42 = arith.constant dense<0.000000e+00> : vector<16x16xf32>
    %57 = tpu.matmul %56, %1, %cst_42 {dimension_numbers = #tpu.dot_dimension_numbers<[1], [0], [0], [1], [0, 0, 1, 1], [], []>} : vector<16x16xf32>, vector<16x16xf32>, vector<16x16xf32> -> vector<16x16xf32>
    %58 = arith.mulf %51, %51 : vector<16x16xf32>
    %cst_43 = arith.constant dense<0.000000e+00> : vector<16x16xf32>
    %59 = tpu.matmul %0, %58, %cst_43 {dimension_numbers = #tpu.dot_dimension_numbers<[1], [0], [0], [1], [0, 0, 1, 1], [], []>} : vector<16x16xf32>, vector<16x16xf32>, vector<16x16xf32> -> vector<16x16xf32>
    %cst_44 = arith.constant dense<0.000000e+00> : vector<16x16xf32>
    %60 = tpu.matmul %59, %1, %cst_44 {dimension_numbers = #tpu.dot_dimension_numbers<[1], [0], [0], [1], [0, 0, 1, 1], [], []>} : vector<16x16xf32>, vector<16x16xf32>, vector<16x16xf32> -> vector<16x16xf32>
    %61 = arith.mulf %53, %53 : vector<16x16xf32>
    %cst_45 = arith.constant dense<0.000000e+00> : vector<16x16xf32>
    %62 = tpu.matmul %0, %61, %cst_45 {dimension_numbers = #tpu.dot_dimension_numbers<[1], [0], [0], [1], [0, 0, 1, 1], [], []>} : vector<16x16xf32>, vector<16x16xf32>, vector<16x16xf32> -> vector<16x16xf32>
    %cst_46 = arith.constant dense<0.000000e+00> : vector<16x16xf32>
    %63 = tpu.matmul %62, %1, %cst_46 {dimension_numbers = #tpu.dot_dimension_numbers<[1], [0], [0], [1], [0, 0, 1, 1], [], []>} : vector<16x16xf32>, vector<16x16xf32>, vector<16x16xf32> -> vector<16x16xf32>
    %64 = arith.mulf %51, %53 : vector<16x16xf32>
    %cst_47 = arith.constant dense<0.000000e+00> : vector<16x16xf32>
    %65 = tpu.matmul %0, %64, %cst_47 {dimension_numbers = #tpu.dot_dimension_numbers<[1], [0], [0], [1], [0, 0, 1, 1], [], []>} : vector<16x16xf32>, vector<16x16xf32>, vector<16x16xf32> -> vector<16x16xf32>
    %cst_48 = arith.constant dense<0.000000e+00> : vector<16x16xf32>
    %66 = tpu.matmul %65, %1, %cst_48 {dimension_numbers = #tpu.dot_dimension_numbers<[1], [0], [0], [1], [0, 0, 1, 1], [], []>} : vector<16x16xf32>, vector<16x16xf32>, vector<16x16xf32> -> vector<16x16xf32>
    %67 = arith.mulf %55, %55 : vector<16x16xf32>
    %68 = arith.mulf %57, %57 : vector<16x16xf32>
    %69 = arith.mulf %55, %57 : vector<16x16xf32>
    %70 = arith.subf %60, %67 : vector<16x16xf32>
    %71 = arith.subf %63, %68 : vector<16x16xf32>
    %72 = arith.subf %66, %69 : vector<16x16xf32>
    %cst_49 = arith.constant 2.000000e+00 : f32
    %73 = vector.broadcast %cst_49 : f32 to vector<16x16xf32>
    %74 = arith.mulf %73, %69 : vector<16x16xf32>
    %cst_50 = arith.constant 9.99999974E-5 : f32
    %75 = vector.broadcast %cst_50 : f32 to vector<16x16xf32>
    %76 = arith.addf %74, %75 : vector<16x16xf32>
    %cst_51 = arith.constant 2.000000e+00 : f32
    %77 = vector.broadcast %cst_51 : f32 to vector<16x16xf32>
    %78 = arith.mulf %77, %72 : vector<16x16xf32>
    %cst_52 = arith.constant 8.99999984E-4 : f32
    %79 = vector.broadcast %cst_52 : f32 to vector<16x16xf32>
    %80 = arith.addf %78, %79 : vector<16x16xf32>
    %81 = arith.mulf %76, %80 : vector<16x16xf32>
    %82 = arith.addf %67, %68 : vector<16x16xf32>
    %cst_53 = arith.constant 9.99999974E-5 : f32
    %83 = vector.broadcast %cst_53 : f32 to vector<16x16xf32>
    %84 = arith.addf %82, %83 : vector<16x16xf32>
    %85 = arith.mulf %84, %70 : vector<16x16xf32>
    %86 = arith.addf %85, %71 : vector<16x16xf32>
    %cst_54 = arith.constant 8.99999984E-4 : f32
    %87 = vector.broadcast %cst_54 : f32 to vector<16x16xf32>
    %88 = arith.addf %86, %87 : vector<16x16xf32>
    %89 = tpu.reciprocal %88 : vector<16x16xf32> -> vector<16x16xf32>
    %90 = arith.mulf %81, %89 : vector<16x16xf32>
    %cst_55 = arith.constant dense<0.000000e+00> : vector<16xf32>
    %91 = vector.multi_reduction <add>, %90, %cst_55 [1] : vector<16x16xf32> to vector<16xf32>
    %92 = vector.shape_cast %91 : vector<16xf32> to vector<16x1xf32>
    %cst_56 = arith.constant dense<0.000000e+00> : vector<1xf32>
    %93 = vector.multi_reduction <add>, %92, %cst_56 [0] : vector<16x1xf32> to vector<1xf32>
    %94 = vector.shape_cast %93 : vector<1xf32> to vector<1x1xf32>
    %c0_57 = arith.constant 0 : index
    %c1_58 = arith.constant 1 : index
    %c0_59 = arith.constant 0 : index
    %c0_60 = arith.constant 0 : index
    %95 = vector.load %arg6[%c0_57, %c1_58, %c0_59, %c0_60] : memref<1x3x1x1xf32, #tpu.memory_space<vmem>>, vector<1x1x1x1xf32>
    %96 = vector.shape_cast %95 : vector<1x1x1x1xf32> to vector<1x1xf32>
    %97 = vector.shape_cast %94 : vector<1x1xf32> to vector<1x1x1x1xf32>
    tpu.vector_store %arg6[%c0_57, %c1_58, %c0_59, %c0_60], %97 {strides = array<i32>} : memref<1x3x1x1xf32, #tpu.memory_space<vmem>>, vector<1x1x1x1xf32>,
    %c0_61 = arith.constant 0 : index
    %c2 = arith.constant 2 : index
    %c0_62 = arith.constant 0 : index
    %c0_63 = arith.constant 0 : index
    %98 = vector.load %arg2[%c0_61, %c2, %c0_62, %c0_63] : memref<1x3x16x16xf32, #tpu.memory_space<vmem>>, vector<1x1x16x16xf32>
    %99 = vector.shape_cast %98 : vector<1x1x16x16xf32> to vector<16x16xf32>
    %c0_64 = arith.constant 0 : index
    %c2_65 = arith.constant 2 : index
    %c0_66 = arith.constant 0 : index
    %c0_67 = arith.constant 0 : index
    %100 = vector.load %arg3[%c0_64, %c2_65, %c0_66, %c0_67] : memref<1x3x16x16xf32, #tpu.memory_space<vmem>>, vector<1x1x16x16xf32>
    %101 = vector.shape_cast %100 : vector<1x1x16x16xf32> to vector<16x16xf32>
    %cst_68 = arith.constant dense<0.000000e+00> : vector<16x16xf32>
    %102 = tpu.matmul %0, %99, %cst_68 {dimension_numbers = #tpu.dot_dimension_numbers<[1], [0], [0], [1], [0, 0, 1, 1], [], []>} : vector<16x16xf32>, vector<16x16xf32>, vector<16x16xf32> -> vector<16x16xf32>
    %cst_69 = arith.constant dense<0.000000e+00> : vector<16x16xf32>
    %103 = tpu.matmul %102, %1, %cst_69 {dimension_numbers = #tpu.dot_dimension_numbers<[1], [0], [0], [1], [0, 0, 1, 1], [], []>} : vector<16x16xf32>, vector<16x16xf32>, vector<16x16xf32> -> vector<16x16xf32>
    %cst_70 = arith.constant dense<0.000000e+00> : vector<16x16xf32>
    %104 = tpu.matmul %0, %101, %cst_70 {dimension_numbers = #tpu.dot_dimension_numbers<[1], [0], [0], [1], [0, 0, 1, 1], [], []>} : vector<16x16xf32>, vector<16x16xf32>, vector<16x16xf32> -> vector<16x16xf32>
    %cst_71 = arith.constant dense<0.000000e+00> : vector<16x16xf32>
    %105 = tpu.matmul %104, %1, %cst_71 {dimension_numbers = #tpu.dot_dimension_numbers<[1], [0], [0], [1], [0, 0, 1, 1], [], []>} : vector<16x16xf32>, vector<16x16xf32>, vector<16x16xf32> -> vector<16x16xf32>
    %106 = arith.mulf %99, %99 : vector<16x16xf32>
    %cst_72 = arith.constant dense<0.000000e+00> : vector<16x16xf32>
    %107 = tpu.matmul %0, %106, %cst_72 {dimension_numbers = #tpu.dot_dimension_numbers<[1], [0], [0], [1], [0, 0, 1, 1], [], []>} : vector<16x16xf32>, vector<16x16xf32>, vector<16x16xf32> -> vector<16x16xf32>
    %cst_73 = arith.constant dense<0.000000e+00> : vector<16x16xf32>
    %108 = tpu.matmul %107, %1, %cst_73 {dimension_numbers = #tpu.dot_dimension_numbers<[1], [0], [0], [1], [0, 0, 1, 1], [], []>} : vector<16x16xf32>, vector<16x16xf32>, vector<16x16xf32> -> vector<16x16xf32>
    %109 = arith.mulf %101, %101 : vector<16x16xf32>
    %cst_74 = arith.constant dense<0.000000e+00> : vector<16x16xf32>
    %110 = tpu.matmul %0, %109, %cst_74 {dimension_numbers = #tpu.dot_dimension_numbers<[1], [0], [0], [1], [0, 0, 1, 1], [], []>} : vector<16x16xf32>, vector<16x16xf32>, vector<16x16xf32> -> vector<16x16xf32>
    %cst_75 = arith.constant dense<0.000000e+00> : vector<16x16xf32>
    %111 = tpu.matmul %110, %1, %cst_75 {dimension_numbers = #tpu.dot_dimension_numbers<[1], [0], [0], [1], [0, 0, 1, 1], [], []>} : vector<16x16xf32>, vector<16x16xf32>, vector<16x16xf32> -> vector<16x16xf32>
    %112 = arith.mulf %99, %101 : vector<16x16xf32>
    %cst_76 = arith.constant dense<0.000000e+00> : vector<16x16xf32>
    %113 = tpu.matmul %0, %112, %cst_76 {dimension_numbers = #tpu.dot_dimension_numbers<[1], [0], [0], [1], [0, 0, 1, 1], [], []>} : vector<16x16xf32>, vector<16x16xf32>, vector<16x16xf32> -> vector<16x16xf32>
    %cst_77 = arith.constant dense<0.000000e+00> : vector<16x16xf32>
    %114 = tpu.matmul %113, %1, %cst_77 {dimension_numbers = #tpu.dot_dimension_numbers<[1], [0], [0], [1], [0, 0, 1, 1], [], []>} : vector<16x16xf32>, vector<16x16xf32>, vector<16x16xf32> -> vector<16x16xf32>
    %115 = arith.mulf %103, %103 : vector<16x16xf32>
    %116 = arith.mulf %105, %105 : vector<16x16xf32>
    %117 = arith.mulf %103, %105 : vector<16x16xf32>
    %118 = arith.subf %108, %115 : vector<16x16xf32>
    %119 = arith.subf %111, %116 : vector<16x16xf32>
    %120 = arith.subf %114, %117 : vector<16x16xf32>
    %cst_78 = arith.constant 2.000000e+00 : f32
    %121 = vector.broadcast %cst_78 : f32 to vector<16x16xf32>
    %122 = arith.mulf %121, %117 : vector<16x16xf32>
    %cst_79 = arith.constant 9.99999974E-5 : f32
    %123 = vector.broadcast %cst_79 : f32 to vector<16x16xf32>
    %124 = arith.addf %122, %123 : vector<16x16xf32>
    %cst_80 = arith.constant 2.000000e+00 : f32
    %125 = vector.broadcast %cst_80 : f32 to vector<16x16xf32>
    %126 = arith.mulf %125, %120 : vector<16x16xf32>
    %cst_81 = arith.constant 8.99999984E-4 : f32
    %127 = vector.broadcast %cst_81 : f32 to vector<16x16xf32>
    %128 = arith.addf %126, %127 : vector<16x16xf32>
    %129 = arith.mulf %124, %128 : vector<16x16xf32>
    %130 = arith.addf %115, %116 : vector<16x16xf32>
    %cst_82 = arith.constant 9.99999974E-5 : f32
    %131 = vector.broadcast %cst_82 : f32 to vector<16x16xf32>
    %132 = arith.addf %130, %131 : vector<16x16xf32>
    %133 = arith.mulf %132, %118 : vector<16x16xf32>
    %134 = arith.addf %133, %119 : vector<16x16xf32>
    %cst_83 = arith.constant 8.99999984E-4 : f32
    %135 = vector.broadcast %cst_83 : f32 to vector<16x16xf32>
    %136 = arith.addf %134, %135 : vector<16x16xf32>
    %137 = tpu.reciprocal %136 : vector<16x16xf32> -> vector<16x16xf32>
    %138 = arith.mulf %129, %137 : vector<16x16xf32>
    %cst_84 = arith.constant dense<0.000000e+00> : vector<16xf32>
    %139 = vector.multi_reduction <add>, %138, %cst_84 [1] : vector<16x16xf32> to vector<16xf32>
    %140 = vector.shape_cast %139 : vector<16xf32> to vector<16x1xf32>
    %cst_85 = arith.constant dense<0.000000e+00> : vector<1xf32>
    %141 = vector.multi_reduction <add>, %140, %cst_85 [0] : vector<16x1xf32> to vector<1xf32>
    %142 = vector.shape_cast %141 : vector<1xf32> to vector<1x1xf32>
    %c0_86 = arith.constant 0 : index
    %c2_87 = arith.constant 2 : index
    %c0_88 = arith.constant 0 : index
    %c0_89 = arith.constant 0 : index
    %143 = vector.load %arg6[%c0_86, %c2_87, %c0_88, %c0_89] : memref<1x3x1x1xf32, #tpu.memory_space<vmem>>, vector<1x1x1x1xf32>
    %144 = vector.shape_cast %143 : vector<1x1x1x1xf32> to vector<1x1xf32>
    %145 = vector.shape_cast %142 : vector<1x1xf32> to vector<1x1x1x1xf32>
    tpu.vector_store %arg6[%c0_86, %c2_87, %c0_88, %c0_89], %145 {strides = array<i32>} : memref<1x3x1x1xf32, #tpu.memory_space<vmem>>, vector<1x1x1x1xf32>,
    return
  }
  func.func @transform_0(%arg0: i32, %arg1: i32) -> (i32, i32, i32, i32) {
    %c0_i32 = arith.constant 0 : i32
    %c0_i32_0 = arith.constant 0 : i32
    %c0_i32_1 = arith.constant 0 : i32
    return %arg0, %arg1, %c0_i32, %c0_i32_0 : i32, i32, i32, i32
  }
  func.func @transform_1(%arg0: i32, %arg1: i32) -> (i32, i32, i32, i32) {
    %c0_i32 = arith.constant 0 : i32
    %c0_i32_0 = arith.constant 0 : i32
    %c0_i32_1 = arith.constant 0 : i32
    return %arg0, %arg1, %c0_i32, %c0_i32_0 : i32, i32, i32, i32
  }
  func.func @transform_2(%arg0: i32, %arg1: i32) -> (i32, i32) {
    %c0_i32 = arith.constant 0 : i32
    %c0_i32_0 = arith.constant 0 : i32
    %c0_i32_1 = arith.constant 0 : i32
    return %c0_i32, %c0_i32_0 : i32, i32
  }
  func.func @transform_3(%arg0: i32, %arg1: i32) -> (i32, i32) {
    %c0_i32 = arith.constant 0 : i32
    %c0_i32_0 = arith.constant 0 : i32
    %c0_i32_1 = arith.constant 0 : i32
    return %c0_i32, %c0_i32_0 : i32, i32
  }
  func.func @transform_4(%arg0: i32, %arg1: i32) -> (i32, i32, i32, i32) {
    %c0_i32 = arith.constant 0 : i32
    %c0_i32_0 = arith.constant 0 : i32
    %c0_i32_1 = arith.constant 0 : i32
    return %arg0, %arg1, %c0_i32, %c0_i32_0 : i32, i32, i32, i32
  }
}

</mosaic_0001>

<llo_original>
// kernel: tpu_custom_call.1
$region0: #{tpu_custom_call.1}
  #allocation0 [shape = 'u32[]', space=smem, size = 0x4, offset = 0x4, fixed_abs, tag = 'smem constant byte address 0x4 - core index']
  #allocation1 [shape = 'u32[144,128]{1,0:T(1,128)}', space=vmem, size = 0x12000, scoped, tag = 'internal scratch']
  %s0 = inlined_call_operand.hbm [shape: f32[2,3,16,16], index: 0, kind: input, shape index: {}]
  %s1 = inlined_call_operand.hbm [shape: f32[2,3,16,16], index: 1, kind: input, shape index: {}]
  %s2 = inlined_call_operand.hbm [shape: f32[16,16], index: 2, kind: input, shape index: {}]
  %s3 = inlined_call_operand.hbm [shape: f32[16,16], index: 3, kind: input, shape index: {}]
  %s4 = inlined_call_operand.vmem [shape: f32[2,3,1,1], index: 4, kind: output, shape index: {}]
  %s5 = sld [smem:[#allocation0]]
  $region65: #{tpu_custom_call.1} parent=0
    _
  %s7 = ssub.s32 1, %s5
  %s8 = scalar_select 0, %s7, %s5
  $region1: #{tpu_custom_call.1} parent=0
    #allocation2 [shape = 'u8[49152]{0}', space=vmem, size = 0xc000, scoped, tag = 'input window, operand 0']
    #allocation3 [shape = 's32[2]{0}', space=sflag, size = 0x8, scoped, tag = 'scoped memory for tpu_custom_call.1']
    #allocation4 [shape = 'u8[49152]{0}', space=vmem, size = 0xc000, scoped, tag = 'input window, operand 1']
    #allocation5 [shape = 's32[2]{0}', space=sflag, size = 0x8, scoped, tag = 'scoped memory for tpu_custom_call.1']
    #allocation6 [shape = 'u8[8192]{0}', space=vmem, size = 0x2000, scoped, tag = 'input window, operand 2, single buffered']
    #allocation7 [shape = 'u8[8192]{0}', space=vmem, size = 0x2000, scoped, tag = 'input window, operand 3, single buffered']
    #allocation8 [shape = 's32[1]{0}', space=sflag, size = 0x4, scoped, tag = 'scoped memory for tpu_custom_call.1']
    %9 = vsyncpa [#allocation3], 0
    %s10 = scalar_lea.sflag [#allocation3], 1
    %11 = vsyncpa %s10, 0
    %12 = vsyncpa [#allocation5], 0
    %s13 = scalar_lea.sflag [#allocation5], 1
    %14 = vsyncpa %s13, 0
    %15 = vsyncpa [#allocation8], 0
    loop: start=0, step=1, limit=4
    $region2: #{tpu_custom_call.1} parent=1 // loop_pre_header
      _
    $region3: #{tpu_custom_call.1} parent=1 // loop_header
      %s17 = sphi 0, %s21
      %p18 = scmp.ge.s32.totalorder %s17, 4
      %s24 = sphi 0, %s36
      %s25 = sphi 0, %s32
      %s26 = sphi 0, %s24
      %s27 = sphi 0, %s25
      %s28 = sphi 0, %s26
      %s29 = sphi 0, %s27
      %s41 = sphi 0, %s43
      %s44 = sphi 0, %s41
      %s45 = sphi 0, %s44
      %s61 = sphi 0, %s45
      %s69 = sphi 0, %s71
      %s72 = sphi 0, %s69
      %s73 = sphi 0, %s72
      %s89 = sphi 0, %s73
      %s93 = sphi 0, %s93
      %s95 = sphi 0, %s93
      %s96 = sphi 0, %s95
      %s110 = sphi 0, %s96
      %s114 = sphi 0, %s114
      %s116 = sphi 0, %s114
      %s117 = sphi 0, %s116
      %s131 = sphi 0, %s117
      %s139 = sphi 0, %s141
      %s142 = sphi 0, %s139
      %s143 = sphi 0, %s142
      %s159 = sphi 0, %s143
    $region4: #{tpu_custom_call.1} parent=1 // loop_header_branch
      %20 = sbr.rel (%p18) target = $region8
    $region5: #{tpu_custom_call.1} parent=1 // loop_body
      %s22 = ssub.s32 %s17, 1
      %s23 = ssub.s32 %s17, 2
      %s30 = sadd.s32 1, %s25
      %p31 = scmp.ge.s32.totalorder %s30, 1
      %s32 = scalar_select %p31, 0, %s30
      %s33 = sadd.s32 1, %s24
      %s34 = scalar_select %p31, %s33, %s24
      %p35 = scmp.ge.s32.totalorder %s34, 2
      %s36 = scalar_select %p35, 0, %s34
      %s37 = ssub.s32 %s24, %s36
      %s38 = ssub.s32 %s25, %s32
      %s39 = sor.u32 %s37, %s38
      %p40 = scmp.eq.s32.totalorder %s39, 0
      %s42 = sadd.s32 %s41, 1
      %s43 = scalar_select %p40, %s41, %s42
      %p46 = pneg %p40
      %p47 = scmp.eq.s32.totalorder %s17, 1
      %p48 = por %p46, %p47
      %p49 = scmp.ne.s32.totalorder %s41, %s44
      %p50 = scmp.eq.s32.totalorder %s17, 0
      %p51 = por %p49, %p50
      %p52 = scmp.ne.s32.totalorder %s41, %s44
      %p53 = scmp.eq.s32.totalorder %s22, 1
      %p54 = por %p52, %p53
      %p55 = scmp.ne.s32.totalorder %s44, %s45
      %p56 = scmp.eq.s32.totalorder %s22, 0
      %p57 = por %p55, %p56
      %p58 = scmp.ne.s32.totalorder %s44, %s45
      %p59 = scmp.eq.s32.totalorder %s23, 1
      %p60 = por %p58, %p59
      %p62 = scmp.ne.s32.totalorder %s45, %s61
      %p63 = scmp.eq.s32.totalorder %s23, 0
      %p64 = por %p62, %p63
      %s65 = ssub.s32 %s24, %s36
      %s66 = ssub.s32 %s25, %s32
      %s67 = sor.u32 %s65, %s66
      %p68 = scmp.eq.s32.totalorder %s67, 0
      %s70 = sadd.s32 %s69, 1
      %s71 = scalar_select %p68, %s69, %s70
      %p74 = pneg %p68
      %p75 = scmp.eq.s32.totalorder %s17, 1
      %p76 = por %p74, %p75
      %p77 = scmp.ne.s32.totalorder %s69, %s72
      %p78 = scmp.eq.s32.totalorder %s17, 0
      %p79 = por %p77, %p78
      %p80 = scmp.ne.s32.totalorder %s69, %s72
      %p81 = scmp.eq.s32.totalorder %s22, 1
      %p82 = por %p80, %p81
      %p83 = scmp.ne.s32.totalorder %s72, %s73
      %p84 = scmp.eq.s32.totalorder %s22, 0
      %p85 = por %p83, %p84
      %p86 = scmp.ne.s32.totalorder %s72, %s73
      %p87 = scmp.eq.s32.totalorder %s23, 1
      %p88 = por %p86, %p87
      %p90 = scmp.ne.s32.totalorder %s73, %s89
      %p91 = scmp.eq.s32.totalorder %s23, 0
      %p92 = por %p90, %p91
      %s94 = sadd.s32 %s93, 1
      %p97 = scmp.eq.s32.totalorder %s17, 1
      %p98 = scmp.ne.s32.totalorder %s93, %s95
      %p99 = scmp.eq.s32.totalorder %s17, 0
      %p100 = por %p98, %p99
      %p101 = scmp.ne.s32.totalorder %s93, %s95
      %p102 = scmp.eq.s32.totalorder %s22, 1
      %p103 = por %p101, %p102
      %p104 = scmp.ne.s32.totalorder %s95, %s96
      %p105 = scmp.eq.s32.totalorder %s22, 0
      %p106 = por %p104, %p105
      %p107 = scmp.ne.s32.totalorder %s95, %s96
      %p108 = scmp.eq.s32.totalorder %s23, 1
      %p109 = por %p107, %p108
      %p111 = scmp.ne.s32.totalorder %s96, %s110
      %p112 = scmp.eq.s32.totalorder %s23, 0
      %p113 = por %p111, %p112
      %s115 = sadd.s32 %s114, 1
      %p118 = scmp.eq.s32.totalorder %s17, 1
      %p119 = scmp.ne.s32.totalorder %s114, %s116
      %p120 = scmp.eq.s32.totalorder %s17, 0
      %p121 = por %p119, %p120
      %p122 = scmp.ne.s32.totalorder %s114, %s116
      %p123 = scmp.eq.s32.totalorder %s22, 1
      %p124 = por %p122, %p123
      %p125 = scmp.ne.s32.totalorder %s116, %s117
      %p126 = scmp.eq.s32.totalorder %s22, 0
      %p127 = por %p125, %p126
      %p128 = scmp.ne.s32.totalorder %s116, %s117
      %p129 = scmp.eq.s32.totalorder %s23, 1
      %p130 = por %p128, %p129
      %p132 = scmp.ne.s32.totalorder %s117, %s131
      %p133 = scmp.eq.s32.totalorder %s23, 0
      %p134 = por %p132, %p133
      %s135 = ssub.s32 %s24, %s36
      %s136 = ssub.s32 %s25, %s32
      %s137 = sor.u32 %s135, %s136
      %p138 = scmp.eq.s32.totalorder %s137, 0
      %s140 = sadd.s32 %s139, 1
      %s141 = scalar_select %p138, %s139, %s140
      %p144 = pneg %p138
      %p145 = scmp.eq.s32.totalorder %s17, 1
      %p146 = por %p144, %p145
      %p147 = scmp.ne.s32.totalorder %s139, %s142
      %p148 = scmp.eq.s32.totalorder %s17, 0
      %p149 = por %p147, %p148
      %p150 = scmp.ne.s32.totalorder %s139, %s142
      %p151 = scmp.eq.s32.totalorder %s22, 1
      %p152 = por %p150, %p151
      %p153 = scmp.ne.s32.totalorder %s142, %s143
      %p154 = scmp.eq.s32.totalorder %s22, 0
      %p155 = por %p153, %p154
      %p156 = scmp.ne.s32.totalorder %s142, %s143
      %p157 = scmp.eq.s32.totalorder %s23, 1
      %p158 = por %p156, %p157
      %p160 = scmp.ne.s32.totalorder %s143, %s159
      %p161 = scmp.eq.s32.totalorder %s23, 0
      %p162 = por %p160, %p161
      %p163 = scmp.le.s32.totalorder 1, %s17
      %p164 = scmp.lt.s32.totalorder %s17, 3
      %p165 = pnand %p163, %p164
      %p166 = pneg %p165
      // Predicated region
      $region9: #{tpu_custom_call.1} parent=5 // pred_check
        _
      $region10: #{tpu_custom_call.1} parent=5 // pred_check_branch
        %168 = sbr.rel (%p165) target = $region12
      $region11: #{tpu_custom_call.1} parent=5 // pred_region
        %s169 = ssub.s32 %s17, 1
        // Predicated region
        $region13: #{tpu_custom_call.1} parent=11 // pred_check
          %p170 = pneg %p106
        $region14: #{tpu_custom_call.1} parent=11 // pred_check_branch
          %172 = sbr.rel (%p170) target = $region16
        $region15: #{tpu_custom_call.1} parent=11 // pred_region
          %s174 = ssub.s32 256, 256
          %175 = vsyncadd [#allocation5], %s174
          %s176 = sshll.u32 [#allocation6], 4
          %s177 = int_to_ptr.vmem [resolvable:$true] %s176
          %182 = dma.hbm_to_vmem [thread:$0]  %s2, 256, %s177, [#allocation5], 128, 128, 8
        $region16: #{tpu_custom_call.1} parent=11 // pred_fallthru
          _
        // Predicated region
        $region17: #{tpu_custom_call.1} parent=11 // pred_check
          %p183 = pneg %p127
        $region18: #{tpu_custom_call.1} parent=11 // pred_check_branch
          %185 = sbr.rel (%p183) target = $region20
        $region19: #{tpu_custom_call.1} parent=11 // pred_region
          %s187 = ssub.s32 256, 256
          %188 = vsyncadd [#allocation8], %s187
          %s189 = sshll.u32 [#allocation7], 4
          %s190 = int_to_ptr.vmem [resolvable:$true] %s189
          %195 = dma.hbm_to_vmem [thread:$0]  %s3, 256, %s190, [#allocation8], 128, 128, 8
        $region20: #{tpu_custom_call.1} parent=11 // pred_fallthru
          _
      $region12: #{tpu_custom_call.1} parent=5 // pred_fallthru
        _
      %p196 = scmp.lt.s32.totalorder %s17, 2
      // Predicated region
      $region21: #{tpu_custom_call.1} parent=5 // pred_check
        %p197 = pneg %p196
      $region22: #{tpu_custom_call.1} parent=5 // pred_check_branch
        %199 = sbr.rel (%p197) target = $region24
      $region23: #{tpu_custom_call.1} parent=5 // pred_region
        // Predicated region
        $region25: #{tpu_custom_call.1} parent=23 // pred_check
          %p200 = pneg %p51
        $region26: #{tpu_custom_call.1} parent=23 // pred_check_branch
          %202 = sbr.rel (%p200) target = $region28
        $region27: #{tpu_custom_call.1} parent=23 // pred_region
          %s203 = sand.u32 %s41, 1
          %s204 = scalar_lea.sflag [#allocation3], %s203
          %s205 = sand.u32 %s41, 1
          %s206 = smul.addr %s205, 48
          %s207 = scalar_lea.vmem [#allocation2], %s206
          %s208 = smul.u32 3, %s25
          %s210 = ssub.s32 768, 768
          %211 = vsyncadd %s204, %s210
          %s212 = smul.addr %s208, 2
          %s213 = smul.addr %s24, 6
          %s214 = sadd.s32 %s212, %s213
          %s215 = smul.addr %s214, 128
          %s216 = scalar_lea.hbm %s0, %s215
          %s217 = sshll.u32 %s207, 4
          %s218 = int_to_ptr.vmem [resolvable:$true] %s217
          %223 = dma.hbm_to_vmem [thread:$0]  %s216, 768, %s218, %s204, 128, 128, 8
        $region28: #{tpu_custom_call.1} parent=23 // pred_fallthru
          _
        // Predicated region
        $region29: #{tpu_custom_call.1} parent=23 // pred_check
          %p224 = pneg %p79
        $region30: #{tpu_custom_call.1} parent=23 // pred_check_branch
          %226 = sbr.rel (%p224) target = $region32
        $region31: #{tpu_custom_call.1} parent=23 // pred_region
          %s227 = sand.u32 %s17, 1
          %s228 = scalar_lea.sflag [#allocation5], %s227
          %s229 = sand.u32 %s69, 1
          %s230 = smul.addr %s229, 48
          %s231 = scalar_lea.vmem [#allocation4], %s230
          %s232 = smul.u32 3, %s25
          %s234 = ssub.s32 768, 768
          %235 = vsyncadd %s228, %s234
          %s236 = smul.addr %s232, 2
          %s237 = smul.addr %s24, 6
          %s238 = sadd.s32 %s236, %s237
          %s239 = smul.addr %s238, 128
          %s240 = scalar_lea.hbm %s1, %s239
          %s241 = sshll.u32 %s231, 4
          %s242 = int_to_ptr.vmem [resolvable:$true] %s241
          %247 = dma.hbm_to_vmem [thread:$0]  %s240, 768, %s242, %s228, 128, 128, 8
        $region32: #{tpu_custom_call.1} parent=23 // pred_fallthru
          _
      $region24: #{tpu_custom_call.1} parent=5 // pred_fallthru
        _
      %p248 = scmp.le.s32.totalorder 1, %s17
      %p249 = scmp.lt.s32.totalorder %s17, 3
      %p250 = pnand %p248, %p249
      %p251 = pneg %p250
      // Predicated region
      $region33: #{tpu_custom_call.1} parent=5 // pred_check
        _
      $region34: #{tpu_custom_call.1} parent=5 // pred_check_branch
        %253 = sbr.rel (%p250) target = $region36
      $region35: #{tpu_custom_call.1} parent=5 // pred_region
        %s254 = ssub.s32 %s17, 1
        %s255 = sand.u32 %s44, 1
        %s256 = scalar_lea.sflag [#allocation3], %s255
        %s257 = sand.u32 %s44, 1
        %s258 = smul.addr %s257, 48
        %s259 = scalar_lea.vmem [#allocation2], %s258
        // Predicated region
        $region37: #{tpu_custom_call.1} parent=35 // pred_check
          %p260 = pneg %p57
        $region38: #{tpu_custom_call.1} parent=35 // pred_check_branch
          %262 = sbr.rel (%p260) target = $region40
        $region39: #{tpu_custom_call.1} parent=35 // pred_region
          %263 = dma.done %s256, 768
        $region40: #{tpu_custom_call.1} parent=35 // pred_fallthru
          _
        %s264 = sand.u32 %s22, 1
        %s265 = scalar_lea.sflag [#allocation5], %s264
        %s266 = sand.u32 %s72, 1
        %s267 = smul.addr %s266, 48
        %s268 = scalar_lea.vmem [#allocation4], %s267
        // Predicated region
        $region41: #{tpu_custom_call.1} parent=35 // pred_check
          %p269 = pneg %p85
        $region42: #{tpu_custom_call.1} parent=35 // pred_check_branch
          %271 = sbr.rel (%p269) target = $region44
        $region43: #{tpu_custom_call.1} parent=35 // pred_region
          %272 = dma.done %s265, 768
        $region44: #{tpu_custom_call.1} parent=35 // pred_fallthru
          _
        // Predicated region
        $region45: #{tpu_custom_call.1} parent=35 // pred_check
          %p273 = pneg %p106
        $region46: #{tpu_custom_call.1} parent=35 // pred_check_branch
          %275 = sbr.rel (%p273) target = $region48
        $region47: #{tpu_custom_call.1} parent=35 // pred_region
          %276 = dma.done [#allocation5], 256
        $region48: #{tpu_custom_call.1} parent=35 // pred_fallthru
          _
        // Predicated region
        $region49: #{tpu_custom_call.1} parent=35 // pred_check
          %p277 = pneg %p127
        $region50: #{tpu_custom_call.1} parent=35 // pred_check_branch
          %279 = sbr.rel (%p277) target = $region52
        $region51: #{tpu_custom_call.1} parent=35 // pred_region
          %280 = dma.done [#allocation8], 256
        $region52: #{tpu_custom_call.1} parent=35 // pred_fallthru
          _
        %s281 = sand.u32 %s44, 1
        %s282 = scalar_lea.sflag [#allocation3], %s281
        %s283 = sand.u32 %s44, 1
        %s284 = smul.addr %s283, 48
        %s285 = scalar_lea.vmem [#allocation2], %s284
        %p286 = pneg %p57
        %p287 = pneg %p54
        %s288 = sand.u32 %s22, 1
        %s289 = scalar_lea.sflag [#allocation5], %s288
        %s290 = sand.u32 %s72, 1
        %s291 = smul.addr %s290, 48
        %s292 = scalar_lea.vmem [#allocation4], %s291
        %p293 = pneg %p85
        %p294 = pneg %p82
        %p295 = pneg %p106
        %p296 = pneg %p103
        %p297 = pneg %p127
        %p298 = pneg %p124
        %p299 = pneg %p155
        %p300 = pneg %p152
        %s301 = smul.u32 3, %s27
        %p302 = scmp.lt.s32.totalorder %s26, 1
        %s303 = scalar_select %p302, %s26, 1
        %p304 = scmp.lt.s32.totalorder %s301, 2
        %s305 = scalar_select %p304, %s301, 2
        %s306 = smul.addr %s303, 3
        %s307 = sadd.s32 %s305, %s306
        %s308 = scalar_lea.vmem %s4, %s307
        %s309 = smul.u32 3, %s27
        %s310 = smul.u32 3, %s27
        %s311 = smul.u32 3, %s27
        %p312 = scmp.lt.s32.totalorder %s26, 1
        %s313 = scalar_select %p312, %s26, 1
        %p314 = scmp.lt.s32.totalorder %s311, 2
        %s315 = scalar_select %p314, %s311, 2
        %s316 = smul.addr %s313, 3
        %s317 = sadd.s32 %s315, %s316
        %s318 = scalar_lea.vmem %s4, %s317
        %s319 = smul.u32 3, %s27
        %v320 = vld [vmem:[#allocation6] sm:$0xff]
        %v321 = vld [vmem:[#allocation6 + $0x8] sm:$0xff]
        %v322 = vld [vmem:[#allocation7] sm:$0xff]
        %v323 = vld [vmem:[#allocation7 + $0x8] sm:$0xff]
        %v324 = vld [vmem:[%s259] sm:$0xff]
        %v325 = vld [vmem:[%s259 + $0x8] sm:$0xff]
        %v326 = vld [vmem:[%s268] sm:$0xff]
        %v327 = vld [vmem:[%s268 + $0x8] sm:$0xff]
        %vm328 = vcmask 130048
        %v330 = vsel %vm328, %v320, 0
        %v333 = vsel %vm328, %v321, 0
        %335 = vmatprep.subr.mxu0 0.0
        %336 = vmatpush1.msra.mxu0 %v324
        %337 = vmatprep.subr.mxu0 0.0
        %338 = vmatpush1.msra.mxu0 %v325
        %339 = vmatprep.subr.mxu0 0.0
        %340 = vmatpush1.msra.mxu0 0.0
        %341 = vmatprep.subr.mxu0 0.0
        %342 = vmatpush1.msra.mxu0 0.0
        %343 = vmatprep.subr.mxu0 0.0
        %344 = vmatpush1.msra.mxu0 0.0
        %345 = vmatprep.subr.mxu0 0.0
        %346 = vmatpush1.msra.mxu0 0.0
        %347 = vmatprep.subr.mxu0 0.0
        %348 = vmatpush1.msra.mxu0 0.0
        %349 = vmatprep.subr.mxu0 0.0
        %350 = vmatpush1.msra.mxu0 0.0
        %351 = vmatprep.subr.mxu0 0.0
        %352 = vmatpush1.msra.mxu0 0.0
        %353 = vmatprep.subr.mxu0 0.0
        %354 = vmatpush1.msra.mxu0 0.0
        %355 = vmatprep.subr.mxu0 0.0
        %356 = vmatpush1.msra.mxu0 0.0
        %357 = vmatprep.subr.mxu0 0.0
        %358 = vmatpush1.msra.mxu0 0.0
        %359 = vmatprep.subr.mxu0 0.0
        %360 = vmatpush1.msra.mxu0 0.0
        %361 = vmatprep.subr.mxu0 0.0
        %362 = vmatpush1.msra.mxu0 0.0
        %363 = vmatprep.subr.mxu0 0.0
        %364 = vmatpush1.msra.mxu0 0.0
        %365 = vmatprep.subr.mxu0 0.0
        %366 = vmatpush1.msra.mxu0 0.0
        %367 = vmatprep.subr.mxu0 0.0
        %368 = vmatpush1.msra.mxu0 0.0
        %369 = vmatprep.subr.mxu0 0.0
        %370 = vmatpush1.msra.mxu0 0.0
        %371 = vmatprep.subr.mxu0 0.0
        %372 = vmatpush1.msra.mxu0 0.0
        %373 = vmatprep.subr.mxu0 0.0
        %374 = vmatpush1.msra.mxu0 0.0
        %375 = vmatprep.subr.mxu0 0.0
        %376 = vmatpush1.msra.mxu0 0.0
        %377 = vmatprep.subr.mxu0 0.0
        %378 = vmatpush1.msra.mxu0 0.0
        %379 = vmatprep.subr.mxu0 0.0
        %380 = vmatpush1.msra.mxu0 0.0
        %381 = vmatprep.subr.mxu0 0.0
        %382 = vmatpush1.msra.mxu0 0.0
        %383 = vmatprep.subr.mxu0 0.0
        %384 = vmatpush1.msra.mxu0 0.0
        %385 = vmatprep.subr.mxu0 0.0
        %386 = vmatpush1.msra.mxu0 0.0
        %387 = vmatprep.subr.mxu0 0.0
        %388 = vmatpush1.msra.mxu0 0.0
        %389 = vmatprep.subr.mxu0 0.0
        %390 = vmatpush1.msra.mxu0 0.0
        %391 = vmatprep.subr.mxu0 0.0
        %392 = vmatpush1.msra.mxu0 0.0
        %393 = vmatprep.subr.mxu0 0.0
        %394 = vmatpush1.msra.mxu0 0.0
        %395 = vmatprep.subr.mxu0 0.0
        %396 = vmatpush1.msra.mxu0 0.0
        %397 = vmatprep.subr.mxu0 0.0
        %398 = vmatpush1.msra.mxu0 0.0
        %399 = vmatprep.mubr.f32.mxu0 0.0
        %400 = vmatmul.mubr.f32.gmra.mrb[0].mxu0 %v330
        %v401 = vpop.f32.mrb[0].mxu0
        %v402 = vadd.f32 0.0, %v401
        %v403 = vpop.f32.mrb[0].mxu0
        %404 = vmatprep.mubr.f32.mxu0 0.0
        %405 = vmatmul.mubr.f32.gmra.mrb[0].mxu0 %v333
        %v406 = vpop.f32.mrb[0].mxu0
        %v407 = vadd.f32 0.0, %v406
        %v408 = vpop.f32.mrb[0].mxu0
        %409 = vdwg.mxu0
        %v411 = vsel %vm328, %v402, 0
        %v414 = vsel %vm328, %v407, 0
        %416 = vmatprep.subr.mxu0 0.0
        %417 = vmatpush1.msra.mxu0 %v322
        %418 = vmatprep.subr.mxu0 0.0
        %419 = vmatpush1.msra.mxu0 %v323
        %420 = vmatprep.subr.mxu0 0.0
        %421 = vmatpush1.msra.mxu0 0.0
        %422 = vmatprep.subr.mxu0 0.0
        %423 = vmatpush1.msra.mxu0 0.0
        %424 = vmatprep.subr.mxu0 0.0
        %425 = vmatpush1.msra.mxu0 0.0
        %426 = vmatprep.subr.mxu0 0.0
        %427 = vmatpush1.msra.mxu0 0.0
        %428 = vmatprep.subr.mxu0 0.0
        %429 = vmatpush1.msra.mxu0 0.0
        %430 = vmatprep.subr.mxu0 0.0
        %431 = vmatpush1.msra.mxu0 0.0
        %432 = vmatprep.subr.mxu0 0.0
        %433 = vmatpush1.msra.mxu0 0.0
        %434 = vmatprep.subr.mxu0 0.0
        %435 = vmatpush1.msra.mxu0 0.0
        %436 = vmatprep.subr.mxu0 0.0
        %437 = vmatpush1.msra.mxu0 0.0
        %438 = vmatprep.subr.mxu0 0.0
        %439 = vmatpush1.msra.mxu0 0.0
        %440 = vmatprep.subr.mxu0 0.0
        %441 = vmatpush1.msra.mxu0 0.0
        %442 = vmatprep.subr.mxu0 0.0
        %443 = vmatpush1.msra.mxu0 0.0
        %444 = vmatprep.subr.mxu0 0.0
        %445 = vmatpush1.msra.mxu0 0.0
        %446 = vmatprep.subr.mxu0 0.0
        %447 = vmatpush1.msra.mxu0 0.0
        %448 = vmatprep.subr.mxu0 0.0
        %449 = vmatpush1.msra.mxu0 0.0
        %450 = vmatprep.subr.mxu0 0.0
        %451 = vmatpush1.msra.mxu0 0.0
        %452 = vmatprep.subr.mxu0 0.0
        %453 = vmatpush1.msra.mxu0 0.0
        %454 = vmatprep.subr.mxu0 0.0
        %455 = vmatpush1.msra.mxu0 0.0
        %456 = vmatprep.subr.mxu0 0.0
        %457 = vmatpush1.msra.mxu0 0.0
        %458 = vmatprep.subr.mxu0 0.0
        %459 = vmatpush1.msra.mxu0 0.0
        %460 = vmatprep.subr.mxu0 0.0
        %461 = vmatpush1.msra.mxu0 0.0
        %462 = vmatprep.subr.mxu0 0.0
        %463 = vmatpush1.msra.mxu0 0.0
        %464 = vmatprep.subr.mxu0 0.0
        %465 = vmatpush1.msra.mxu0 0.0
        %466 = vmatprep.subr.mxu0 0.0
        %467 = vmatpush1.msra.mxu0 0.0
        %468 = vmatprep.subr.mxu0 0.0
        %469 = vmatpush1.msra.mxu0 0.0
        %470 = vmatprep.subr.mxu0 0.0
        %471 = vmatpush1.msra.mxu0 0.0
        %472 = vmatprep.subr.mxu0 0.0
        %473 = vmatpush1.msra.mxu0 0.0
        %474 = vmatprep.subr.mxu0 0.0
        %475 = vmatpush1.msra.mxu0 0.0
        %476 = vmatprep.subr.mxu0 0.0
        %477 = vmatpush1.msra.mxu0 0.0
        %478 = vmatprep.subr.mxu0 0.0
        %479 = vmatpush1.msra.mxu0 0.0
        %480 = vmatprep.mubr.f32.mxu0 0.0
        %481 = vmatmul.mubr.f32.gmra.mrb[0].mxu0 %v411
        %v482 = vpop.f32.mrb[0].mxu0
        %v483 = vadd.f32 0.0, %v482
        %v484 = vpop.f32.mrb[0].mxu0
        %485 = vmatprep.mubr.f32.mxu0 0.0
        %486 = vmatmul.mubr.f32.gmra.mrb[0].mxu0 %v414
        %v487 = vpop.f32.mrb[0].mxu0
        %v488 = vadd.f32 0.0, %v487
        %v489 = vpop.f32.mrb[0].mxu0
        %490 = vdwg.mxu0
        %491 = vmatprep.subr.mxu0 0.0
        %492 = vmatpush1.msra.mxu0 %v326
        %493 = vmatprep.subr.mxu0 0.0
        %494 = vmatpush1.msra.mxu0 %v327
        %495 = vmatprep.subr.mxu0 0.0
        %496 = vmatpush1.msra.mxu0 0.0
        %497 = vmatprep.subr.mxu0 0.0
        %498 = vmatpush1.msra.mxu0 0.0
        %499 = vmatprep.subr.mxu0 0.0
        %500 = vmatpush1.msra.mxu0 0.0
        %501 = vmatprep.subr.mxu0 0.0
        %502 = vmatpush1.msra.mxu0 0.0
        %503 = vmatprep.subr.mxu0 0.0
        %504 = vmatpush1.msra.mxu0 0.0
        %505 = vmatprep.subr.mxu0 0.0
        %506 = vmatpush1.msra.mxu0 0.0
        %507 = vmatprep.subr.mxu0 0.0
        %508 = vmatpush1.msra.mxu0 0.0
        %509 = vmatprep.subr.mxu0 0.0
        %510 = vmatpush1.msra.mxu0 0.0
        %511 = vmatprep.subr.mxu0 0.0
        %512 = vmatpush1.msra.mxu0 0.0
        %513 = vmatprep.subr.mxu0 0.0
        %514 = vmatpush1.msra.mxu0 0.0
        %515 = vmatprep.subr.mxu0 0.0
        %516 = vmatpush1.msra.mxu0 0.0
        %517 = vmatprep.subr.mxu0 0.0
        %518 = vmatpush1.msra.mxu0 0.0
        %519 = vmatprep.subr.mxu0 0.0
        %520 = vmatpush1.msra.mxu0 0.0
        %521 = vmatprep.subr.mxu0 0.0
        %522 = vmatpush1.msra.mxu0 0.0
        %523 = vmatprep.subr.mxu0 0.0
        %524 = vmatpush1.msra.mxu0 0.0
        %525 = vmatprep.subr.mxu0 0.0
        %526 = vmatpush1.msra.mxu0 0.0
        %527 = vmatprep.subr.mxu0 0.0
        %528 = vmatpush1.msra.mxu0 0.0
        %529 = vmatprep.subr.mxu0 0.0
        %530 = vmatpush1.msra.mxu0 0.0
        %531 = vmatprep.subr.mxu0 0.0
        %532 = vmatpush1.msra.mxu0 0.0
        %533 = vmatprep.subr.mxu0 0.0
        %534 = vmatpush1.msra.mxu0 0.0
        %535 = vmatprep.subr.mxu0 0.0
        %536 = vmatpush1.msra.mxu0 0.0
        %537 = vmatprep.subr.mxu0 0.0
        %538 = vmatpush1.msra.mxu0 0.0
        %539 = vmatprep.subr.mxu0 0.0
        %540 = vmatpush1.msra.mxu0 0.0
        %541 = vmatprep.subr.mxu0 0.0
        %542 = vmatpush1.msra.mxu0 0.0
        %543 = vmatprep.subr.mxu0 0.0
        %544 = vmatpush1.msra.mxu0 0.0
        %545 = vmatprep.subr.mxu0 0.0
        %546 = vmatpush1.msra.mxu0 0.0
        %547 = vmatprep.subr.mxu0 0.0
        %548 = vmatpush1.msra.mxu0 0.0
        %549 = vmatprep.subr.mxu0 0.0
        %550 = vmatpush1.msra.mxu0 0.0
        %551 = vmatprep.subr.mxu0 0.0
        %552 = vmatpush1.msra.mxu0 0.0
        %553 = vmatprep.subr.mxu0 0.0
        %554 = vmatpush1.msra.mxu0 0.0
        %555 = vmatprep.mubr.f32.mxu0 0.0
        %556 = vmatmul.mubr.f32.gmra.mrb[0].mxu0 %v330
        %v557 = vpop.f32.mrb[0].mxu0
        %v558 = vadd.f32 0.0, %v557
        %v559 = vpop.f32.mrb[0].mxu0
        %560 = vmatprep.mubr.f32.mxu0 0.0
        %561 = vmatmul.mubr.f32.gmra.mrb[0].mxu0 %v333
        %v562 = vpop.f32.mrb[0].mxu0
        %v563 = vadd.f32 0.0, %v562
        %v564 = vpop.f32.mrb[0].mxu0
        %565 = vdwg.mxu0
        %v567 = vsel %vm328, %v558, 0
        %v570 = vsel %vm328, %v563, 0
        %572 = vmatprep.subr.mxu0 0.0
        %573 = vmatpush1.msra.mxu0 %v322
        %574 = vmatprep.subr.mxu0 0.0
        %575 = vmatpush1.msra.mxu0 %v323
        %576 = vmatprep.subr.mxu0 0.0
        %577 = vmatpush1.msra.mxu0 0.0
        %578 = vmatprep.subr.mxu0 0.0
        %579 = vmatpush1.msra.mxu0 0.0
        %580 = vmatprep.subr.mxu0 0.0
        %581 = vmatpush1.msra.mxu0 0.0
        %582 = vmatprep.subr.mxu0 0.0
        %583 = vmatpush1.msra.mxu0 0.0
        %584 = vmatprep.subr.mxu0 0.0
        %585 = vmatpush1.msra.mxu0 0.0
        %586 = vmatprep.subr.mxu0 0.0
        %587 = vmatpush1.msra.mxu0 0.0
        %588 = vmatprep.subr.mxu0 0.0
        %589 = vmatpush1.msra.mxu0 0.0
        %590 = vmatprep.subr.mxu0 0.0
        %591 = vmatpush1.msra.mxu0 0.0
        %592 = vmatprep.subr.mxu0 0.0
        %593 = vmatpush1.msra.mxu0 0.0
        %594 = vmatprep.subr.mxu0 0.0
        %595 = vmatpush1.msra.mxu0 0.0
        %596 = vmatprep.subr.mxu0 0.0
        %597 = vmatpush1.msra.mxu0 0.0
        %598 = vmatprep.subr.mxu0 0.0
        %599 = vmatpush1.msra.mxu0 0.0
        %600 = vmatprep.subr.mxu0 0.0
        %601 = vmatpush1.msra.mxu0 0.0
        %602 = vmatprep.subr.mxu0 0.0
        %603 = vmatpush1.msra.mxu0 0.0
        %604 = vmatprep.subr.mxu0 0.0
        %605 = vmatpush1.msra.mxu0 0.0
        %606 = vmatprep.subr.mxu0 0.0
        %607 = vmatpush1.msra.mxu0 0.0
        %608 = vmatprep.subr.mxu0 0.0
        %609 = vmatpush1.msra.mxu0 0.0
        %610 = vmatprep.subr.mxu0 0.0
        %611 = vmatpush1.msra.mxu0 0.0
        %612 = vmatprep.subr.mxu0 0.0
        %613 = vmatpush1.msra.mxu0 0.0
        %614 = vmatprep.subr.mxu0 0.0
        %615 = vmatpush1.msra.mxu0 0.0
        %616 = vmatprep.subr.mxu0 0.0
        %617 = vmatpush1.msra.mxu0 0.0
        %618 = vmatprep.subr.mxu0 0.0
        %619 = vmatpush1.msra.mxu0 0.0
        %620 = vmatprep.subr.mxu0 0.0
        %621 = vmatpush1.msra.mxu0 0.0
        %622 = vmatprep.subr.mxu0 0.0
        %623 = vmatpush1.msra.mxu0 0.0
        %624 = vmatprep.subr.mxu0 0.0
        %625 = vmatpush1.msra.mxu0 0.0
        %626 = vmatprep.subr.mxu0 0.0
        %627 = vmatpush1.msra.mxu0 0.0
        %628 = vmatprep.subr.mxu0 0.0
        %629 = vmatpush1.msra.mxu0 0.0
        %630 = vmatprep.subr.mxu0 0.0
        %631 = vmatpush1.msra.mxu0 0.0
        %632 = vmatprep.subr.mxu0 0.0
        %633 = vmatpush1.msra.mxu0 0.0
        %634 = vmatprep.subr.mxu0 0.0
        %635 = vmatpush1.msra.mxu0 0.0
        %636 = vmatprep.mubr.f32.mxu0 0.0
        %637 = vmatmul.mubr.f32.gmra.mrb[0].mxu0 %v567
        %v638 = vpop.f32.mrb[0].mxu0
        %v639 = vadd.f32 0.0, %v638
        %v640 = vpop.f32.mrb[0].mxu0
        %641 = vmatprep.mubr.f32.mxu0 0.0
        %642 = vmatmul.mubr.f32.gmra.mrb[0].mxu0 %v570
        %v643 = vpop.f32.mrb[0].mxu0
        %v644 = vadd.f32 0.0, %v643
        %v645 = vpop.f32.mrb[0].mxu0
        %646 = vdwg.mxu0
        %v647 = vmul.f32 %v324, %v324
        %v648 = vmul.f32 %v325, %v325
        %649 = vmatprep.subr.mxu0 0.0
        %650 = vmatpush1.msra.mxu0 %v647
        %651 = vmatprep.subr.mxu0 0.0
        %652 = vmatpush1.msra.mxu0 %v648
        %653 = vmatprep.subr.mxu0 0.0
        %654 = vmatpush1.msra.mxu0 0.0
        %655 = vmatprep.subr.mxu0 0.0
        %656 = vmatpush1.msra.mxu0 0.0
        %657 = vmatprep.subr.mxu0 0.0
        %658 = vmatpush1.msra.mxu0 0.0
        %659 = vmatprep.subr.mxu0 0.0
        %660 = vmatpush1.msra.mxu0 0.0
        %661 = vmatprep.subr.mxu0 0.0
        %662 = vmatpush1.msra.mxu0 0.0
        %663 = vmatprep.subr.mxu0 0.0
        %664 = vmatpush1.msra.mxu0 0.0
        %665 = vmatprep.subr.mxu0 0.0
        %666 = vmatpush1.msra.mxu0 0.0
        %667 = vmatprep.subr.mxu0 0.0
        %668 = vmatpush1.msra.mxu0 0.0
        %669 = vmatprep.subr.mxu0 0.0
        %670 = vmatpush1.msra.mxu0 0.0
        %671 = vmatprep.subr.mxu0 0.0
        %672 = vmatpush1.msra.mxu0 0.0
        %673 = vmatprep.subr.mxu0 0.0
        %674 = vmatpush1.msra.mxu0 0.0
        %675 = vmatprep.subr.mxu0 0.0
        %676 = vmatpush1.msra.mxu0 0.0
        %677 = vmatprep.subr.mxu0 0.0
        %678 = vmatpush1.msra.mxu0 0.0
        %679 = vmatprep.subr.mxu0 0.0
        %680 = vmatpush1.msra.mxu0 0.0
        %681 = vmatprep.subr.mxu0 0.0
        %682 = vmatpush1.msra.mxu0 0.0
        %683 = vmatprep.subr.mxu0 0.0
        %684 = vmatpush1.msra.mxu0 0.0
        %685 = vmatprep.subr.mxu0 0.0
        %686 = vmatpush1.msra.mxu0 0.0
        %687 = vmatprep.subr.mxu0 0.0
        %688 = vmatpush1.msra.mxu0 0.0
        %689 = vmatprep.subr.mxu0 0.0
        %690 = vmatpush1.msra.mxu0 0.0
        %691 = vmatprep.subr.mxu0 0.0
        %692 = vmatpush1.msra.mxu0 0.0
        %693 = vmatprep.subr.mxu0 0.0
        %694 = vmatpush1.msra.mxu0 0.0
        %695 = vmatprep.subr.mxu0 0.0
        %696 = vmatpush1.msra.mxu0 0.0
        %697 = vmatprep.subr.mxu0 0.0
        %698 = vmatpush1.msra.mxu0 0.0
        %699 = vmatprep.subr.mxu0 0.0
        %700 = vmatpush1.msra.mxu0 0.0
        %701 = vmatprep.subr.mxu0 0.0
        %702 = vmatpush1.msra.mxu0 0.0
        %703 = vmatprep.subr.mxu0 0.0
        %704 = vmatpush1.msra.mxu0 0.0
        %705 = vmatprep.subr.mxu0 0.0
        %706 = vmatpush1.msra.mxu0 0.0
        %707 = vmatprep.subr.mxu0 0.0
        %708 = vmatpush1.msra.mxu0 0.0
        %709 = vmatprep.subr.mxu0 0.0
        %710 = vmatpush1.msra.mxu0 0.0
        %711 = vmatprep.subr.mxu0 0.0
        %712 = vmatpush1.msra.mxu0 0.0
        %713 = vmatprep.mubr.f32.mxu0 0.0
        %714 = vmatmul.mubr.f32.gmra.mrb[0].mxu0 %v330
        %v715 = vpop.f32.mrb[0].mxu0
        %v716 = vadd.f32 0.0, %v715
        %v717 = vpop.f32.mrb[0].mxu0
        %718 = vmatprep.mubr.f32.mxu0 0.0
        %719 = vmatmul.mubr.f32.gmra.mrb[0].mxu0 %v333
        %v720 = vpop.f32.mrb[0].mxu0
        %v721 = vadd.f32 0.0, %v720
        %v722 = vpop.f32.mrb[0].mxu0
        %723 = vdwg.mxu0
        %v725 = vsel %vm328, %v716, 0
        %v728 = vsel %vm328, %v721, 0
        %730 = vmatprep.subr.mxu0 0.0
        %731 = vmatpush1.msra.mxu0 %v322
        %732 = vmatprep.subr.mxu0 0.0
        %733 = vmatpush1.msra.mxu0 %v323
        %734 = vmatprep.subr.mxu0 0.0
        %735 = vmatpush1.msra.mxu0 0.0
        %736 = vmatprep.subr.mxu0 0.0
        %737 = vmatpush1.msra.mxu0 0.0
        %738 = vmatprep.subr.mxu0 0.0
        %739 = vmatpush1.msra.mxu0 0.0
        %740 = vmatprep.subr.mxu0 0.0
        %741 = vmatpush1.msra.mxu0 0.0
        %742 = vmatprep.subr.mxu0 0.0
        %743 = vmatpush1.msra.mxu0 0.0
        %744 = vmatprep.subr.mxu0 0.0
        %745 = vmatpush1.msra.mxu0 0.0
        %746 = vmatprep.subr.mxu0 0.0
        %747 = vmatpush1.msra.mxu0 0.0
        %748 = vmatprep.subr.mxu0 0.0
        %749 = vmatpush1.msra.mxu0 0.0
        %750 = vmatprep.subr.mxu0 0.0
        %751 = vmatpush1.msra.mxu0 0.0
        %752 = vmatprep.subr.mxu0 0.0
        %753 = vmatpush1.msra.mxu0 0.0
        %754 = vmatprep.subr.mxu0 0.0
        %755 = vmatpush1.msra.mxu0 0.0
        %756 = vmatprep.subr.mxu0 0.0
        %757 = vmatpush1.msra.mxu0 0.0
        %758 = vmatprep.subr.mxu0 0.0
        %759 = vmatpush1.msra.mxu0 0.0
        %760 = vmatprep.subr.mxu0 0.0
        %761 = vmatpush1.msra.mxu0 0.0
        %762 = vmatprep.subr.mxu0 0.0
        %763 = vmatpush1.msra.mxu0 0.0
        %764 = vmatprep.subr.mxu0 0.0
        %765 = vmatpush1.msra.mxu0 0.0
        %766 = vmatprep.subr.mxu0 0.0
        %767 = vmatpush1.msra.mxu0 0.0
        %768 = vmatprep.subr.mxu0 0.0
        %769 = vmatpush1.msra.mxu0 0.0
        %770 = vmatprep.subr.mxu0 0.0
        %771 = vmatpush1.msra.mxu0 0.0
        %772 = vmatprep.subr.mxu0 0.0
        %773 = vmatpush1.msra.mxu0 0.0
        %774 = vmatprep.subr.mxu0 0.0
        %775 = vmatpush1.msra.mxu0 0.0
        %776 = vmatprep.subr.mxu0 0.0
        %777 = vmatpush1.msra.mxu0 0.0
        %778 = vmatprep.subr.mxu0 0.0
        %779 = vmatpush1.msra.mxu0 0.0
        %780 = vmatprep.subr.mxu0 0.0
        %781 = vmatpush1.msra.mxu0 0.0
        %782 = vmatprep.subr.mxu0 0.0
        %783 = vmatpush1.msra.mxu0 0.0
        %784 = vmatprep.subr.mxu0 0.0
        %785 = vmatpush1.msra.mxu0 0.0
        %786 = vmatprep.subr.mxu0 0.0
        %787 = vmatpush1.msra.mxu0 0.0
        %788 = vmatprep.subr.mxu0 0.0
        %789 = vmatpush1.msra.mxu0 0.0
        %790 = vmatprep.subr.mxu0 0.0
        %791 = vmatpush1.msra.mxu0 0.0
        %792 = vmatprep.subr.mxu0 0.0
        %793 = vmatpush1.msra.mxu0 0.0
        %794 = vmatprep.mubr.f32.mxu0 0.0
        %795 = vmatmul.mubr.f32.gmra.mrb[0].mxu0 %v725
        %v796 = vpop.f32.mrb[0].mxu0
        %v797 = vadd.f32 0.0, %v796
        %v798 = vpop.f32.mrb[0].mxu0
        %799 = vmatprep.mubr.f32.mxu0 0.0
        %800 = vmatmul.mubr.f32.gmra.mrb[0].mxu0 %v728
        %v801 = vpop.f32.mrb[0].mxu0
        %v802 = vadd.f32 0.0, %v801
        %v803 = vpop.f32.mrb[0].mxu0
        %804 = vdwg.mxu0
        %v805 = vmul.f32 %v326, %v326
        %v806 = vmul.f32 %v327, %v327
        %807 = vmatprep.subr.mxu0 0.0
        %808 = vmatpush1.msra.mxu0 %v805
        %809 = vmatprep.subr.mxu0 0.0
        %810 = vmatpush1.msra.mxu0 %v806
        %811 = vmatprep.subr.mxu0 0.0
        %812 = vmatpush1.msra.mxu0 0.0
        %813 = vmatprep.subr.mxu0 0.0
        %814 = vmatpush1.msra.mxu0 0.0
        %815 = vmatprep.subr.mxu0 0.0
        %816 = vmatpush1.msra.mxu0 0.0
        %817 = vmatprep.subr.mxu0 0.0
        %818 = vmatpush1.msra.mxu0 0.0
        %819 = vmatprep.subr.mxu0 0.0
        %820 = vmatpush1.msra.mxu0 0.0
        %821 = vmatprep.subr.mxu0 0.0
        %822 = vmatpush1.msra.mxu0 0.0
        %823 = vmatprep.subr.mxu0 0.0
        %824 = vmatpush1.msra.mxu0 0.0
        %825 = vmatprep.subr.mxu0 0.0
        %826 = vmatpush1.msra.mxu0 0.0
        %827 = vmatprep.subr.mxu0 0.0
        %828 = vmatpush1.msra.mxu0 0.0
        %829 = vmatprep.subr.mxu0 0.0
        %830 = vmatpush1.msra.mxu0 0.0
        %831 = vmatprep.subr.mxu0 0.0
        %832 = vmatpush1.msra.mxu0 0.0
        %833 = vmatprep.subr.mxu0 0.0
        %834 = vmatpush1.msra.mxu0 0.0
        %835 = vmatprep.subr.mxu0 0.0
        %836 = vmatpush1.msra.mxu0 0.0
        %837 = vmatprep.subr.mxu0 0.0
        %838 = vmatpush1.msra.mxu0 0.0
        %839 = vmatprep.subr.mxu0 0.0
        %840 = vmatpush1.msra.mxu0 0.0
        %841 = vmatprep.subr.mxu0 0.0
        %842 = vmatpush1.msra.mxu0 0.0
        %843 = vmatprep.subr.mxu0 0.0
        %844 = vmatpush1.msra.mxu0 0.0
        %845 = vmatprep.subr.mxu0 0.0
        %846 = vmatpush1.msra.mxu0 0.0
        %847 = vmatprep.subr.mxu0 0.0
        %848 = vmatpush1.msra.mxu0 0.0
        %849 = vmatprep.subr.mxu0 0.0
        %850 = vmatpush1.msra.mxu0 0.0
        %851 = vmatprep.subr.mxu0 0.0
        %852 = vmatpush1.msra.mxu0 0.0
        %853 = vmatprep.subr.mxu0 0.0
        %854 = vmatpush1.msra.mxu0 0.0
        %855 = vmatprep.subr.mxu0 0.0
        %856 = vmatpush1.msra.mxu0 0.0
        %857 = vmatprep.subr.mxu0 0.0
        %858 = vmatpush1.msra.mxu0 0.0
        %859 = vmatprep.subr.mxu0 0.0
        %860 = vmatpush1.msra.mxu0 0.0
        %861 = vmatprep.subr.mxu0 0.0
        %862 = vmatpush1.msra.mxu0 0.0
        %863 = vmatprep.subr.mxu0 0.0
        %864 = vmatpush1.msra.mxu0 0.0
        %865 = vmatprep.subr.mxu0 0.0
        %866 = vmatpush1.msra.mxu0 0.0
        %867 = vmatprep.subr.mxu0 0.0
        %868 = vmatpush1.msra.mxu0 0.0
        %869 = vmatprep.subr.mxu0 0.0
        %870 = vmatpush1.msra.mxu0 0.0
        %871 = vmatprep.mubr.f32.mxu0 0.0
        %872 = vmatmul.mubr.f32.gmra.mrb[0].mxu0 %v330
        %v873 = vpop.f32.mrb[0].mxu0
        %v874 = vadd.f32 0.0, %v873
        %v875 = vpop.f32.mrb[0].mxu0
        %876 = vmatprep.mubr.f32.mxu0 0.0
        %877 = vmatmul.mubr.f32.gmra.mrb[0].mxu0 %v333
        %v878 = vpop.f32.mrb[0].mxu0
        %v879 = vadd.f32 0.0, %v878
        %v880 = vpop.f32.mrb[0].mxu0
        %881 = vdwg.mxu0
        %v883 = vsel %vm328, %v874, 0
        %v886 = vsel %vm328, %v879, 0
        %888 = vmatprep.subr.mxu0 0.0
        %889 = vmatpush1.msra.mxu0 %v322
        %890 = vmatprep.subr.mxu0 0.0
        %891 = vmatpush1.msra.mxu0 %v323
        %892 = vmatprep.subr.mxu0 0.0
        %893 = vmatpush1.msra.mxu0 0.0
        %894 = vmatprep.subr.mxu0 0.0
        %895 = vmatpush1.msra.mxu0 0.0
        %896 = vmatprep.subr.mxu0 0.0
        %897 = vmatpush1.msra.mxu0 0.0
        %898 = vmatprep.subr.mxu0 0.0
        %899 = vmatpush1.msra.mxu0 0.0
        %900 = vmatprep.subr.mxu0 0.0
        %901 = vmatpush1.msra.mxu0 0.0
        %902 = vmatprep.subr.mxu0 0.0
        %903 = vmatpush1.msra.mxu0 0.0
        %904 = vmatprep.subr.mxu0 0.0
        %905 = vmatpush1.msra.mxu0 0.0
        %906 = vmatprep.subr.mxu0 0.0
        %907 = vmatpush1.msra.mxu0 0.0
        %908 = vmatprep.subr.mxu0 0.0
        %909 = vmatpush1.msra.mxu0 0.0
        %910 = vmatprep.subr.mxu0 0.0
        %911 = vmatpush1.msra.mxu0 0.0
        %912 = vmatprep.subr.mxu0 0.0
        %913 = vmatpush1.msra.mxu0 0.0
        %914 = vmatprep.subr.mxu0 0.0
        %915 = vmatpush1.msra.mxu0 0.0
        %916 = vmatprep.subr.mxu0 0.0
        %917 = vmatpush1.msra.mxu0 0.0
        %918 = vmatprep.subr.mxu0 0.0
        %919 = vmatpush1.msra.mxu0 0.0
        %920 = vmatprep.subr.mxu0 0.0
        %921 = vmatpush1.msra.mxu0 0.0
        %922 = vmatprep.subr.mxu0 0.0
        %923 = vmatpush1.msra.mxu0 0.0
        %924 = vmatprep.subr.mxu0 0.0
        %925 = vmatpush1.msra.mxu0 0.0
        %926 = vmatprep.subr.mxu0 0.0
        %927 = vmatpush1.msra.mxu0 0.0
        %928 = vmatprep.subr.mxu0 0.0
        %929 = vmatpush1.msra.mxu0 0.0
        %930 = vmatprep.subr.mxu0 0.0
        %931 = vmatpush1.msra.mxu0 0.0
        %932 = vmatprep.subr.mxu0 0.0
        %933 = vmatpush1.msra.mxu0 0.0
        %934 = vmatprep.subr.mxu0 0.0
        %935 = vmatpush1.msra.mxu0 0.0
        %936 = vmatprep.subr.mxu0 0.0
        %937 = vmatpush1.msra.mxu0 0.0
        %938 = vmatprep.subr.mxu0 0.0
        %939 = vmatpush1.msra.mxu0 0.0
        %940 = vmatprep.subr.mxu0 0.0
        %941 = vmatpush1.msra.mxu0 0.0
        %942 = vmatprep.subr.mxu0 0.0
        %943 = vmatpush1.msra.mxu0 0.0
        %944 = vmatprep.subr.mxu0 0.0
        %945 = vmatpush1.msra.mxu0 0.0
        %946 = vmatprep.subr.mxu0 0.0
        %947 = vmatpush1.msra.mxu0 0.0
        %948 = vmatprep.subr.mxu0 0.0
        %949 = vmatpush1.msra.mxu0 0.0
        %950 = vmatprep.subr.mxu0 0.0
        %951 = vmatpush1.msra.mxu0 0.0
        %952 = vmatprep.mubr.f32.mxu0 0.0
        %953 = vmatmul.mubr.f32.gmra.mrb[0].mxu0 %v883
        %v954 = vpop.f32.mrb[0].mxu0
        %v955 = vadd.f32 0.0, %v954
        %v956 = vpop.f32.mrb[0].mxu0
        %957 = vmatprep.mubr.f32.mxu0 0.0
        %958 = vmatmul.mubr.f32.gmra.mrb[0].mxu0 %v886
        %v959 = vpop.f32.mrb[0].mxu0
        %v960 = vadd.f32 0.0, %v959
        %v961 = vpop.f32.mrb[0].mxu0
        %962 = vdwg.mxu0
        %v963 = vmul.f32 %v324, %v326
        %v964 = vmul.f32 %v325, %v327
        %965 = vmatprep.subr.mxu0 0.0
        %966 = vmatpush1.msra.mxu0 %v963
        %967 = vmatprep.subr.mxu0 0.0
        %968 = vmatpush1.msra.mxu0 %v964
        %969 = vmatprep.subr.mxu0 0.0
        %970 = vmatpush1.msra.mxu0 0.0
        %971 = vmatprep.subr.mxu0 0.0
        %972 = vmatpush1.msra.mxu0 0.0
        %973 = vmatprep.subr.mxu0 0.0
        %974 = vmatpush1.msra.mxu0 0.0
        %975 = vmatprep.subr.mxu0 0.0
        %976 = vmatpush1.msra.mxu0 0.0
        %977 = vmatprep.subr.mxu0 0.0
        %978 = vmatpush1.msra.mxu0 0.0
        %979 = vmatprep.subr.mxu0 0.0
        %980 = vmatpush1.msra.mxu0 0.0
        %981 = vmatprep.subr.mxu0 0.0
        %982 = vmatpush1.msra.mxu0 0.0
        %983 = vmatprep.subr.mxu0 0.0
        %984 = vmatpush1.msra.mxu0 0.0
        %985 = vmatprep.subr.mxu0 0.0
        %986 = vmatpush1.msra.mxu0 0.0
        %987 = vmatprep.subr.mxu0 0.0
        %988 = vmatpush1.msra.mxu0 0.0
        %989 = vmatprep.subr.mxu0 0.0
        %990 = vmatpush1.msra.mxu0 0.0
        %991 = vmatprep.subr.mxu0 0.0
        %992 = vmatpush1.msra.mxu0 0.0
        %993 = vmatprep.subr.mxu0 0.0
        %994 = vmatpush1.msra.mxu0 0.0
        %995 = vmatprep.subr.mxu0 0.0
        %996 = vmatpush1.msra.mxu0 0.0
        %997 = vmatprep.subr.mxu0 0.0
        %998 = vmatpush1.msra.mxu0 0.0
        %999 = vmatprep.subr.mxu0 0.0
        %1000 = vmatpush1.msra.mxu0 0.0
        %1001 = vmatprep.subr.mxu0 0.0
        %1002 = vmatpush1.msra.mxu0 0.0
        %1003 = vmatprep.subr.mxu0 0.0
        %1004 = vmatpush1.msra.mxu0 0.0
        %1005 = vmatprep.subr.mxu0 0.0
        %1006 = vmatpush1.msra.mxu0 0.0
        %1007 = vmatprep.subr.mxu0 0.0
        %1008 = vmatpush1.msra.mxu0 0.0
        %1009 = vmatprep.subr.mxu0 0.0
        %1010 = vmatpush1.msra.mxu0 0.0
        %1011 = vmatprep.subr.mxu0 0.0
        %1012 = vmatpush1.msra.mxu0 0.0
        %1013 = vmatprep.subr.mxu0 0.0
        %1014 = vmatpush1.msra.mxu0 0.0
        %1015 = vmatprep.subr.mxu0 0.0
        %1016 = vmatpush1.msra.mxu0 0.0
        %1017 = vmatprep.subr.mxu0 0.0
        %1018 = vmatpush1.msra.mxu0 0.0
        %1019 = vmatprep.subr.mxu0 0.0
        %1020 = vmatpush1.msra.mxu0 0.0
        %1021 = vmatprep.subr.mxu0 0.0
        %1022 = vmatpush1.msra.mxu0 0.0
        %1023 = vmatprep.subr.mxu0 0.0
        %1024 = vmatpush1.msra.mxu0 0.0
        %1025 = vmatprep.subr.mxu0 0.0
        %1026 = vmatpush1.msra.mxu0 0.0
        %1027 = vmatprep.subr.mxu0 0.0
        %1028 = vmatpush1.msra.mxu0 0.0
        %1029 = vmatprep.mubr.f32.mxu0 0.0
        %1030 = vmatmul.mubr.f32.gmra.mrb[0].mxu0 %v330
        %v1031 = vpop.f32.mrb[0].mxu0
        %v1032 = vadd.f32 0.0, %v1031
        %v1033 = vpop.f32.mrb[0].mxu0
        %1034 = vmatprep.mubr.f32.mxu0 0.0
        %1035 = vmatmul.mubr.f32.gmra.mrb[0].mxu0 %v333
        %v1036 = vpop.f32.mrb[0].mxu0
        %v1037 = vadd.f32 0.0, %v1036
        %v1038 = vpop.f32.mrb[0].mxu0
        %1039 = vdwg.mxu0
        %v1041 = vsel %vm328, %v1032, 0
        %v1044 = vsel %vm328, %v1037, 0
        %1046 = vmatprep.subr.mxu0 0.0
        %1047 = vmatpush1.msra.mxu0 %v322
        %1048 = vmatprep.subr.mxu0 0.0
        %1049 = vmatpush1.msra.mxu0 %v323
        %1050 = vmatprep.subr.mxu0 0.0
        %1051 = vmatpush1.msra.mxu0 0.0
        %1052 = vmatprep.subr.mxu0 0.0
        %1053 = vmatpush1.msra.mxu0 0.0
        %1054 = vmatprep.subr.mxu0 0.0
        %1055 = vmatpush1.msra.mxu0 0.0
        %1056 = vmatprep.subr.mxu0 0.0
        %1057 = vmatpush1.msra.mxu0 0.0
        %1058 = vmatprep.subr.mxu0 0.0
        %1059 = vmatpush1.msra.mxu0 0.0
        %1060 = vmatprep.subr.mxu0 0.0
        %1061 = vmatpush1.msra.mxu0 0.0
        %1062 = vmatprep.subr.mxu0 0.0
        %1063 = vmatpush1.msra.mxu0 0.0
        %1064 = vmatprep.subr.mxu0 0.0
        %1065 = vmatpush1.msra.mxu0 0.0
        %1066 = vmatprep.subr.mxu0 0.0
        %1067 = vmatpush1.msra.mxu0 0.0
        %1068 = vmatprep.subr.mxu0 0.0
        %1069 = vmatpush1.msra.mxu0 0.0
        %1070 = vmatprep.subr.mxu0 0.0
        %1071 = vmatpush1.msra.mxu0 0.0
        %1072 = vmatprep.subr.mxu0 0.0
        %1073 = vmatpush1.msra.mxu0 0.0
        %1074 = vmatprep.subr.mxu0 0.0
        %1075 = vmatpush1.msra.mxu0 0.0
        %1076 = vmatprep.subr.mxu0 0.0
        %1077 = vmatpush1.msra.mxu0 0.0
        %1078 = vmatprep.subr.mxu0 0.0
        %1079 = vmatpush1.msra.mxu0 0.0
        %1080 = vmatprep.subr.mxu0 0.0
        %1081 = vmatpush1.msra.mxu0 0.0
        %1082 = vmatprep.subr.mxu0 0.0
        %1083 = vmatpush1.msra.mxu0 0.0
        %1084 = vmatprep.subr.mxu0 0.0
        %1085 = vmatpush1.msra.mxu0 0.0
        %1086 = vmatprep.subr.mxu0 0.0
        %1087 = vmatpush1.msra.mxu0 0.0
        %1088 = vmatprep.subr.mxu0 0.0
        %1089 = vmatpush1.msra.mxu0 0.0
        %1090 = vmatprep.subr.mxu0 0.0
        %1091 = vmatpush1.msra.mxu0 0.0
        %1092 = vmatprep.subr.mxu0 0.0
        %1093 = vmatpush1.msra.mxu0 0.0
        %1094 = vmatprep.subr.mxu0 0.0
        %1095 = vmatpush1.msra.mxu0 0.0
        %1096 = vmatprep.subr.mxu0 0.0
        %1097 = vmatpush1.msra.mxu0 0.0
        %1098 = vmatprep.subr.mxu0 0.0
        %1099 = vmatpush1.msra.mxu0 0.0
        %1100 = vmatprep.subr.mxu0 0.0
        %1101 = vmatpush1.msra.mxu0 0.0
        %1102 = vmatprep.subr.mxu0 0.0
        %1103 = vmatpush1.msra.mxu0 0.0
        %1104 = vmatprep.subr.mxu0 0.0
        %1105 = vmatpush1.msra.mxu0 0.0
        %1106 = vmatprep.subr.mxu0 0.0
        %1107 = vmatpush1.msra.mxu0 0.0
        %1108 = vmatprep.subr.mxu0 0.0
        %1109 = vmatpush1.msra.mxu0 0.0
        %1110 = vmatprep.mubr.f32.mxu0 0.0
        %1111 = vmatmul.mubr.f32.gmra.mrb[0].mxu0 %v1041
        %v1112 = vpop.f32.mrb[0].mxu0
        %v1113 = vadd.f32 0.0, %v1112
        %v1114 = vpop.f32.mrb[0].mxu0
        %1115 = vmatprep.mubr.f32.mxu0 0.0
        %1116 = vmatmul.mubr.f32.gmra.mrb[0].mxu0 %v1044
        %v1117 = vpop.f32.mrb[0].mxu0
        %v1118 = vadd.f32 0.0, %v1117
        %v1119 = vpop.f32.mrb[0].mxu0
        %1120 = vdwg.mxu0
        %v1121 = vmul.f32 %v483, %v483
        %v1122 = vmul.f32 %v488, %v488
        %v1123 = vmul.f32 %v639, %v639
        %v1124 = vmul.f32 %v644, %v644
        %v1125 = vmul.f32 %v483, %v639
        %v1126 = vmul.f32 %v488, %v644
        %v1127 = vsub.f32 %v797, %v1121
        %v1128 = vsub.f32 %v802, %v1122
        %v1129 = vsub.f32 %v955, %v1123
        %v1130 = vsub.f32 %v960, %v1124
        %v1131 = vsub.f32 %v1113, %v1125
        %v1132 = vsub.f32 %v1118, %v1126
        %v1133 = vmul.f32 %v1125, 2.0
        %v1134 = vmul.f32 %v1126, 2.0
        %v1135 = vadd.f32 %v1133, 0.0001
        %v1136 = vadd.f32 %v1134, 0.0001
        %v1137 = vmul.f32 %v1131, 2.0
        %v1138 = vmul.f32 %v1132, 2.0
        %v1139 = vadd.f32 %v1137, 0.0009
        %v1140 = vadd.f32 %v1138, 0.0009
        %v1141 = vmul.f32 %v1135, %v1139
        %v1142 = vmul.f32 %v1136, %v1140
        %v1143 = vadd.f32 %v1121, %v1123
        %v1144 = vadd.f32 %v1122, %v1124
        %v1145 = vadd.f32 %v1143, 0.0001
        %v1146 = vadd.f32 %v1144, 0.0001
        %v1147 = vmul.f32 %v1145, %v1127
        %v1148 = vmul.f32 %v1146, %v1128
        %v1149 = vadd.f32 %v1147, %v1129
        %v1150 = vadd.f32 %v1148, %v1130
        %v1151 = vadd.f32 %v1149, 0.0009
        %v1152 = vadd.f32 %v1150, 0.0009
        %v1153 = vrcp.pop %v1151
        %v1154 = vrcp.pop %v1152
        %v1155 = vmul.f32 %v1141, %v1153
        %v1156 = vmul.f32 %v1142, %v1154
        %v1157 = vsel %vm328, %v1155, 0.0
        %1158 = vadd.xlane.f32.xlu0 %v1157
        %v1159 = vpop.xlane.xlu0 %1158
        %v1160 = vsel %vm328, %v1156, 0.0
        %1161 = vadd.xlane.f32.xlu0 %v1160
        %v1162 = vpop.xlane.xlu0 %1161
        %v1163 = vadd.f32 %v1159, %v1162
        %v1164 = vrot.slane %v1163, 4
        %v1165 = vadd.f32 %v1163, %v1164
        %v1166 = vrot.slane %v1165, 2
        %v1167 = vadd.f32 %v1165, %v1166
        %v1168 = vrot.slane %v1167, 1
        %v1169 = vadd.f32 %v1167, %v1168
        %vm1170 = vcmask 0
        %1171 = vst.msk [vmem:[%s318] sm:$0x1] %vm1170, %v1169
        %s1172 = scalar_lea.vmem %s259, 16 [#allocation2]
        %v1173 = vld [vmem:[%s1172] sm:$0xff]
        %v1174 = vld [vmem:[%s1172 + $0x8] sm:$0xff]
        %s1175 = scalar_lea.vmem %s268, 16 [#allocation4]
        %v1176 = vld [vmem:[%s1175] sm:$0xff]
        %v1177 = vld [vmem:[%s1175 + $0x8] sm:$0xff]
        %1178 = vmatprep.subr.mxu0 0.0
        %1179 = vmatpush1.msra.mxu0 %v1173
        %1180 = vmatprep.subr.mxu0 0.0
        %1181 = vmatpush1.msra.mxu0 %v1174
        %1182 = vmatprep.subr.mxu0 0.0
        %1183 = vmatpush1.msra.mxu0 0.0
        %1184 = vmatprep.subr.mxu0 0.0
        %1185 = vmatpush1.msra.mxu0 0.0
        %1186 = vmatprep.subr.mxu0 0.0
        %1187 = vmatpush1.msra.mxu0 0.0
        %1188 = vmatprep.subr.mxu0 0.0
        %1189 = vmatpush1.msra.mxu0 0.0
        %1190 = vmatprep.subr.mxu0 0.0
        %1191 = vmatpush1.msra.mxu0 0.0
        %1192 = vmatprep.subr.mxu0 0.0
        %1193 = vmatpush1.msra.mxu0 0.0
        %1194 = vmatprep.subr.mxu0 0.0
        %1195 = vmatpush1.msra.mxu0 0.0
        %1196 = vmatprep.subr.mxu0 0.0
        %1197 = vmatpush1.msra.mxu0 0.0
        %1198 = vmatprep.subr.mxu0 0.0
        %1199 = vmatpush1.msra.mxu0 0.0
        %1200 = vmatprep.subr.mxu0 0.0
        %1201 = vmatpush1.msra.mxu0 0.0
        %1202 = vmatprep.subr.mxu0 0.0
        %1203 = vmatpush1.msra.mxu0 0.0
        %1204 = vmatprep.subr.mxu0 0.0
        %1205 = vmatpush1.msra.mxu0 0.0
        %1206 = vmatprep.subr.mxu0 0.0
        %1207 = vmatpush1.msra.mxu0 0.0
        %1208 = vmatprep.subr.mxu0 0.0
        %1209 = vmatpush1.msra.mxu0 0.0
        %1210 = vmatprep.subr.mxu0 0.0
        %1211 = vmatpush1.msra.mxu0 0.0
        %1212 = vmatprep.subr.mxu0 0.0
        %1213 = vmatpush1.msra.mxu0 0.0
        %1214 = vmatprep.subr.mxu0 0.0
        %1215 = vmatpush1.msra.mxu0 0.0
        %1216 = vmatprep.subr.mxu0 0.0
        %1217 = vmatpush1.msra.mxu0 0.0
        %1218 = vmatprep.subr.mxu0 0.0
        %1219 = vmatpush1.msra.mxu0 0.0
        %1220 = vmatprep.subr.mxu0 0.0
        %1221 = vmatpush1.msra.mxu0 0.0
        %1222 = vmatprep.subr.mxu0 0.0
        %1223 = vmatpush1.msra.mxu0 0.0
        %1224 = vmatprep.subr.mxu0 0.0
        %1225 = vmatpush1.msra.mxu0 0.0
        %1226 = vmatprep.subr.mxu0 0.0
        %1227 = vmatpush1.msra.mxu0 0.0
        %1228 = vmatprep.subr.mxu0 0.0
        %1229 = vmatpush1.msra.mxu0 0.0
        %1230 = vmatprep.subr.mxu0 0.0
        %1231 = vmatpush1.msra.mxu0 0.0
        %1232 = vmatprep.subr.mxu0 0.0
        %1233 = vmatpush1.msra.mxu0 0.0
        %1234 = vmatprep.subr.mxu0 0.0
        %1235 = vmatpush1.msra.mxu0 0.0
        %1236 = vmatprep.subr.mxu0 0.0
        %1237 = vmatpush1.msra.mxu0 0.0
        %1238 = vmatprep.subr.mxu0 0.0
        %1239 = vmatpush1.msra.mxu0 0.0
        %1240 = vmatprep.subr.mxu0 0.0
        %1241 = vmatpush1.msra.mxu0 0.0
        %1242 = vmatprep.mubr.f32.mxu0 0.0
        %1243 = vmatmul.mubr.f32.gmra.mrb[0].mxu0 %v330
        %v1244 = vpop.f32.mrb[0].mxu0
        %v1245 = vadd.f32 0.0, %v1244
        %v1246 = vpop.f32.mrb[0].mxu0
        %1247 = vmatprep.mubr.f32.mxu0 0.0
        %1248 = vmatmul.mubr.f32.gmra.mrb[0].mxu0 %v333
        %v1249 = vpop.f32.mrb[0].mxu0
        %v1250 = vadd.f32 0.0, %v1249
        %v1251 = vpop.f32.mrb[0].mxu0
        %1252 = vdwg.mxu0
        %v1254 = vsel %vm328, %v1245, 0
        %v1257 = vsel %vm328, %v1250, 0
        %1259 = vmatprep.subr.mxu0 0.0
        %1260 = vmatpush1.msra.mxu0 %v322
        %1261 = vmatprep.subr.mxu0 0.0
        %1262 = vmatpush1.msra.mxu0 %v323
        %1263 = vmatprep.subr.mxu0 0.0
        %1264 = vmatpush1.msra.mxu0 0.0
        %1265 = vmatprep.subr.mxu0 0.0
        %1266 = vmatpush1.msra.mxu0 0.0
        %1267 = vmatprep.subr.mxu0 0.0
        %1268 = vmatpush1.msra.mxu0 0.0
        %1269 = vmatprep.subr.mxu0 0.0
        %1270 = vmatpush1.msra.mxu0 0.0
        %1271 = vmatprep.subr.mxu0 0.0
        %1272 = vmatpush1.msra.mxu0 0.0
        %1273 = vmatprep.subr.mxu0 0.0
        %1274 = vmatpush1.msra.mxu0 0.0
        %1275 = vmatprep.subr.mxu0 0.0
        %1276 = vmatpush1.msra.mxu0 0.0
        %1277 = vmatprep.subr.mxu0 0.0
        %1278 = vmatpush1.msra.mxu0 0.0
        %1279 = vmatprep.subr.mxu0 0.0
        %1280 = vmatpush1.msra.mxu0 0.0
        %1281 = vmatprep.subr.mxu0 0.0
        %1282 = vmatpush1.msra.mxu0 0.0
        %1283 = vmatprep.subr.mxu0 0.0
        %1284 = vmatpush1.msra.mxu0 0.0
        %1285 = vmatprep.subr.mxu0 0.0
        %1286 = vmatpush1.msra.mxu0 0.0
        %1287 = vmatprep.subr.mxu0 0.0
        %1288 = vmatpush1.msra.mxu0 0.0
        %1289 = vmatprep.subr.mxu0 0.0
        %1290 = vmatpush1.msra.mxu0 0.0
        %1291 = vmatprep.subr.mxu0 0.0
        %1292 = vmatpush1.msra.mxu0 0.0
        %1293 = vmatprep.subr.mxu0 0.0
        %1294 = vmatpush1.msra.mxu0 0.0
        %1295 = vmatprep.subr.mxu0 0.0
        %1296 = vmatpush1.msra.mxu0 0.0
        %1297 = vmatprep.subr.mxu0 0.0
        %1298 = vmatpush1.msra.mxu0 0.0
        %1299 = vmatprep.subr.mxu0 0.0
        %1300 = vmatpush1.msra.mxu0 0.0
        %1301 = vmatprep.subr.mxu0 0.0
        %1302 = vmatpush1.msra.mxu0 0.0
        %1303 = vmatprep.subr.mxu0 0.0
        %1304 = vmatpush1.msra.mxu0 0.0
        %1305 = vmatprep.subr.mxu0 0.0
        %1306 = vmatpush1.msra.mxu0 0.0
        %1307 = vmatprep.subr.mxu0 0.0
        %1308 = vmatpush1.msra.mxu0 0.0
        %1309 = vmatprep.subr.mxu0 0.0
        %1310 = vmatpush1.msra.mxu0 0.0
        %1311 = vmatprep.subr.mxu0 0.0
        %1312 = vmatpush1.msra.mxu0 0.0
        %1313 = vmatprep.subr.mxu0 0.0
        %1314 = vmatpush1.msra.mxu0 0.0
        %1315 = vmatprep.subr.mxu0 0.0
        %1316 = vmatpush1.msra.mxu0 0.0
        %1317 = vmatprep.subr.mxu0 0.0
        %1318 = vmatpush1.msra.mxu0 0.0
        %1319 = vmatprep.subr.mxu0 0.0
        %1320 = vmatpush1.msra.mxu0 0.0
        %1321 = vmatprep.subr.mxu0 0.0
        %1322 = vmatpush1.msra.mxu0 0.0
        %1323 = vmatprep.mubr.f32.mxu0 0.0
        %1324 = vmatmul.mubr.f32.gmra.mrb[0].mxu0 %v1254
        %v1325 = vpop.f32.mrb[0].mxu0
        %v1326 = vadd.f32 0.0, %v1325
        %v1327 = vpop.f32.mrb[0].mxu0
        %1328 = vmatprep.mubr.f32.mxu0 0.0
        %1329 = vmatmul.mubr.f32.gmra.mrb[0].mxu0 %v1257
        %v1330 = vpop.f32.mrb[0].mxu0
        %v1331 = vadd.f32 0.0, %v1330
        %v1332 = vpop.f32.mrb[0].mxu0
        %1333 = vdwg.mxu0
        %1334 = vmatprep.subr.mxu0 0.0
        %1335 = vmatpush1.msra.mxu0 %v1176
        %1336 = vmatprep.subr.mxu0 0.0
        %1337 = vmatpush1.msra.mxu0 %v1177
        %1338 = vmatprep.subr.mxu0 0.0
        %1339 = vmatpush1.msra.mxu0 0.0
        %1340 = vmatprep.subr.mxu0 0.0
        %1341 = vmatpush1.msra.mxu0 0.0
        %1342 = vmatprep.subr.mxu0 0.0
        %1343 = vmatpush1.msra.mxu0 0.0
        %1344 = vmatprep.subr.mxu0 0.0
        %1345 = vmatpush1.msra.mxu0 0.0
        %1346 = vmatprep.subr.mxu0 0.0
        %1347 = vmatpush1.msra.mxu0 0.0
        %1348 = vmatprep.subr.mxu0 0.0
        %1349 = vmatpush1.msra.mxu0 0.0
        %1350 = vmatprep.subr.mxu0 0.0
        %1351 = vmatpush1.msra.mxu0 0.0
        %1352 = vmatprep.subr.mxu0 0.0
        %1353 = vmatpush1.msra.mxu0 0.0
        %1354 = vmatprep.subr.mxu0 0.0
        %1355 = vmatpush1.msra.mxu0 0.0
        %1356 = vmatprep.subr.mxu0 0.0
        %1357 = vmatpush1.msra.mxu0 0.0
        %1358 = vmatprep.subr.mxu0 0.0
        %1359 = vmatpush1.msra.mxu0 0.0
        %1360 = vmatprep.subr.mxu0 0.0
        %1361 = vmatpush1.msra.mxu0 0.0
        %1362 = vmatprep.subr.mxu0 0.0
        %1363 = vmatpush1.msra.mxu0 0.0
        %1364 = vmatprep.subr.mxu0 0.0
        %1365 = vmatpush1.msra.mxu0 0.0
        %1366 = vmatprep.subr.mxu0 0.0
        %1367 = vmatpush1.msra.mxu0 0.0
        %1368 = vmatprep.subr.mxu0 0.0
        %1369 = vmatpush1.msra.mxu0 0.0
        %1370 = vmatprep.subr.mxu0 0.0
        %1371 = vmatpush1.msra.mxu0 0.0
        %1372 = vmatprep.subr.mxu0 0.0
        %1373 = vmatpush1.msra.mxu0 0.0
        %1374 = vmatprep.subr.mxu0 0.0
        %1375 = vmatpush1.msra.mxu0 0.0
        %1376 = vmatprep.subr.mxu0 0.0
        %1377 = vmatpush1.msra.mxu0 0.0
        %1378 = vmatprep.subr.mxu0 0.0
        %1379 = vmatpush1.msra.mxu0 0.0
        %1380 = vmatprep.subr.mxu0 0.0
        %1381 = vmatpush1.msra.mxu0 0.0
        %1382 = vmatprep.subr.mxu0 0.0
        %1383 = vmatpush1.msra.mxu0 0.0
        %1384 = vmatprep.subr.mxu0 0.0
        %1385 = vmatpush1.msra.mxu0 0.0
        %1386 = vmatprep.subr.mxu0 0.0
        %1387 = vmatpush1.msra.mxu0 0.0
        %1388 = vmatprep.subr.mxu0 0.0
        %1389 = vmatpush1.msra.mxu0 0.0
        %1390 = vmatprep.subr.mxu0 0.0
        %1391 = vmatpush1.msra.mxu0 0.0
        %1392 = vmatprep.subr.mxu0 0.0
        %1393 = vmatpush1.msra.mxu0 0.0
        %1394 = vmatprep.subr.mxu0 0.0
        %1395 = vmatpush1.msra.mxu0 0.0
        %1396 = vmatprep.subr.mxu0 0.0
        %1397 = vmatpush1.msra.mxu0 0.0
        %1398 = vmatprep.mubr.f32.mxu0 0.0
        %1399 = vmatmul.mubr.f32.gmra.mrb[0].mxu0 %v330
        %v1400 = vpop.f32.mrb[0].mxu0
        %v1401 = vadd.f32 0.0, %v1400
        %v1402 = vpop.f32.mrb[0].mxu0
        %1403 = vmatprep.mubr.f32.mxu0 0.0
        %1404 = vmatmul.mubr.f32.gmra.mrb[0].mxu0 %v333
        %v1405 = vpop.f32.mrb[0].mxu0
        %v1406 = vadd.f32 0.0, %v1405
        %v1407 = vpop.f32.mrb[0].mxu0
        %1408 = vdwg.mxu0
        %v1410 = vsel %vm328, %v1401, 0
        %v1413 = vsel %vm328, %v1406, 0
        %1415 = vmatprep.subr.mxu0 0.0
        %1416 = vmatpush1.msra.mxu0 %v322
        %1417 = vmatprep.subr.mxu0 0.0
        %1418 = vmatpush1.msra.mxu0 %v323
        %1419 = vmatprep.subr.mxu0 0.0
        %1420 = vmatpush1.msra.mxu0 0.0
        %1421 = vmatprep.subr.mxu0 0.0
        %1422 = vmatpush1.msra.mxu0 0.0
        %1423 = vmatprep.subr.mxu0 0.0
        %1424 = vmatpush1.msra.mxu0 0.0
        %1425 = vmatprep.subr.mxu0 0.0
        %1426 = vmatpush1.msra.mxu0 0.0
        %1427 = vmatprep.subr.mxu0 0.0
        %1428 = vmatpush1.msra.mxu0 0.0
        %1429 = vmatprep.subr.mxu0 0.0
        %1430 = vmatpush1.msra.mxu0 0.0
        %1431 = vmatprep.subr.mxu0 0.0
        %1432 = vmatpush1.msra.mxu0 0.0
        %1433 = vmatprep.subr.mxu0 0.0
        %1434 = vmatpush1.msra.mxu0 0.0
        %1435 = vmatprep.subr.mxu0 0.0
        %1436 = vmatpush1.msra.mxu0 0.0
        %1437 = vmatprep.subr.mxu0 0.0
        %1438 = vmatpush1.msra.mxu0 0.0
        %1439 = vmatprep.subr.mxu0 0.0
        %1440 = vmatpush1.msra.mxu0 0.0
        %1441 = vmatprep.subr.mxu0 0.0
        %1442 = vmatpush1.msra.mxu0 0.0
        %1443 = vmatprep.subr.mxu0 0.0
        %1444 = vmatpush1.msra.mxu0 0.0
        %1445 = vmatprep.subr.mxu0 0.0
        %1446 = vmatpush1.msra.mxu0 0.0
        %1447 = vmatprep.subr.mxu0 0.0
        %1448 = vmatpush1.msra.mxu0 0.0
        %1449 = vmatprep.subr.mxu0 0.0
        %1450 = vmatpush1.msra.mxu0 0.0
        %1451 = vmatprep.subr.mxu0 0.0
        %1452 = vmatpush1.msra.mxu0 0.0
        %1453 = vmatprep.subr.mxu0 0.0
        %1454 = vmatpush1.msra.mxu0 0.0
        %1455 = vmatprep.subr.mxu0 0.0
        %1456 = vmatpush1.msra.mxu0 0.0
        %1457 = vmatprep.subr.mxu0 0.0
        %1458 = vmatpush1.msra.mxu0 0.0
        %1459 = vmatprep.subr.mxu0 0.0
        %1460 = vmatpush1.msra.mxu0 0.0
        %1461 = vmatprep.subr.mxu0 0.0
        %1462 = vmatpush1.msra.mxu0 0.0
        %1463 = vmatprep.subr.mxu0 0.0
        %1464 = vmatpush1.msra.mxu0 0.0
        %1465 = vmatprep.subr.mxu0 0.0
        %1466 = vmatpush1.msra.mxu0 0.0
        %1467 = vmatprep.subr.mxu0 0.0
        %1468 = vmatpush1.msra.mxu0 0.0
        %1469 = vmatprep.subr.mxu0 0.0
        %1470 = vmatpush1.msra.mxu0 0.0
        %1471 = vmatprep.subr.mxu0 0.0
        %1472 = vmatpush1.msra.mxu0 0.0
        %1473 = vmatprep.subr.mxu0 0.0
        %1474 = vmatpush1.msra.mxu0 0.0
        %1475 = vmatprep.subr.mxu0 0.0
        %1476 = vmatpush1.msra.mxu0 0.0
        %1477 = vmatprep.subr.mxu0 0.0
        %1478 = vmatpush1.msra.mxu0 0.0
        %1479 = vmatprep.mubr.f32.mxu0 0.0
        %1480 = vmatmul.mubr.f32.gmra.mrb[0].mxu0 %v1410
        %v1481 = vpop.f32.mrb[0].mxu0
        %v1482 = vadd.f32 0.0, %v1481
        %v1483 = vpop.f32.mrb[0].mxu0
        %1484 = vmatprep.mubr.f32.mxu0 0.0
        %1485 = vmatmul.mubr.f32.gmra.mrb[0].mxu0 %v1413
        %v1486 = vpop.f32.mrb[0].mxu0
        %v1487 = vadd.f32 0.0, %v1486
        %v1488 = vpop.f32.mrb[0].mxu0
        %1489 = vdwg.mxu0
        %v1490 = vmul.f32 %v1173, %v1173
        %v1491 = vmul.f32 %v1174, %v1174
        %1492 = vmatprep.subr.mxu0 0.0
        %1493 = vmatpush1.msra.mxu0 %v1490
        %1494 = vmatprep.subr.mxu0 0.0
        %1495 = vmatpush1.msra.mxu0 %v1491
        %1496 = vmatprep.subr.mxu0 0.0
        %1497 = vmatpush1.msra.mxu0 0.0
        %1498 = vmatprep.subr.mxu0 0.0
        %1499 = vmatpush1.msra.mxu0 0.0
        %1500 = vmatprep.subr.mxu0 0.0
        %1501 = vmatpush1.msra.mxu0 0.0
        %1502 = vmatprep.subr.mxu0 0.0
        %1503 = vmatpush1.msra.mxu0 0.0
        %1504 = vmatprep.subr.mxu0 0.0
        %1505 = vmatpush1.msra.mxu0 0.0
        %1506 = vmatprep.subr.mxu0 0.0
        %1507 = vmatpush1.msra.mxu0 0.0
        %1508 = vmatprep.subr.mxu0 0.0
        %1509 = vmatpush1.msra.mxu0 0.0
        %1510 = vmatprep.subr.mxu0 0.0
        %1511 = vmatpush1.msra.mxu0 0.0
        %1512 = vmatprep.subr.mxu0 0.0
        %1513 = vmatpush1.msra.mxu0 0.0
        %1514 = vmatprep.subr.mxu0 0.0
        %1515 = vmatpush1.msra.mxu0 0.0
        %1516 = vmatprep.subr.mxu0 0.0
        %1517 = vmatpush1.msra.mxu0 0.0
        %1518 = vmatprep.subr.mxu0 0.0
        %1519 = vmatpush1.msra.mxu0 0.0
        %1520 = vmatprep.subr.mxu0 0.0
        %1521 = vmatpush1.msra.mxu0 0.0
        %1522 = vmatprep.subr.mxu0 0.0
        %1523 = vmatpush1.msra.mxu0 0.0
        %1524 = vmatprep.subr.mxu0 0.0
        %1525 = vmatpush1.msra.mxu0 0.0
        %1526 = vmatprep.subr.mxu0 0.0
        %1527 = vmatpush1.msra.mxu0 0.0
        %1528 = vmatprep.subr.mxu0 0.0
        %1529 = vmatpush1.msra.mxu0 0.0
        %1530 = vmatprep.subr.mxu0 0.0
        %1531 = vmatpush1.msra.mxu0 0.0
        %1532 = vmatprep.subr.mxu0 0.0
        %1533 = vmatpush1.msra.mxu0 0.0
        %1534 = vmatprep.subr.mxu0 0.0
        %1535 = vmatpush1.msra.mxu0 0.0
        %1536 = vmatprep.subr.mxu0 0.0
        %1537 = vmatpush1.msra.mxu0 0.0
        %1538 = vmatprep.subr.mxu0 0.0
        %1539 = vmatpush1.msra.mxu0 0.0
        %1540 = vmatprep.subr.mxu0 0.0
        %1541 = vmatpush1.msra.mxu0 0.0
        %1542 = vmatprep.subr.mxu0 0.0
        %1543 = vmatpush1.msra.mxu0 0.0
        %1544 = vmatprep.subr.mxu0 0.0
        %1545 = vmatpush1.msra.mxu0 0.0
        %1546 = vmatprep.subr.mxu0 0.0
        %1547 = vmatpush1.msra.mxu0 0.0
        %1548 = vmatprep.subr.mxu0 0.0
        %1549 = vmatpush1.msra.mxu0 0.0
        %1550 = vmatprep.subr.mxu0 0.0
        %1551 = vmatpush1.msra.mxu0 0.0
        %1552 = vmatprep.subr.mxu0 0.0
        %1553 = vmatpush1.msra.mxu0 0.0
        %1554 = vmatprep.subr.mxu0 0.0
        %1555 = vmatpush1.msra.mxu0 0.0
        %1556 = vmatprep.mubr.f32.mxu0 0.0
        %1557 = vmatmul.mubr.f32.gmra.mrb[0].mxu0 %v330
        %v1558 = vpop.f32.mrb[0].mxu0
        %v1559 = vadd.f32 0.0, %v1558
        %v1560 = vpop.f32.mrb[0].mxu0
        %1561 = vmatprep.mubr.f32.mxu0 0.0
        %1562 = vmatmul.mubr.f32.gmra.mrb[0].mxu0 %v333
        %v1563 = vpop.f32.mrb[0].mxu0
        %v1564 = vadd.f32 0.0, %v1563
        %v1565 = vpop.f32.mrb[0].mxu0
        %1566 = vdwg.mxu0
        %v1568 = vsel %vm328, %v1559, 0
        %v1571 = vsel %vm328, %v1564, 0
        %1573 = vmatprep.subr.mxu0 0.0
        %1574 = vmatpush1.msra.mxu0 %v322
        %1575 = vmatprep.subr.mxu0 0.0
        %1576 = vmatpush1.msra.mxu0 %v323
        %1577 = vmatprep.subr.mxu0 0.0
        %1578 = vmatpush1.msra.mxu0 0.0
        %1579 = vmatprep.subr.mxu0 0.0
        %1580 = vmatpush1.msra.mxu0 0.0
        %1581 = vmatprep.subr.mxu0 0.0
        %1582 = vmatpush1.msra.mxu0 0.0
        %1583 = vmatprep.subr.mxu0 0.0
        %1584 = vmatpush1.msra.mxu0 0.0
        %1585 = vmatprep.subr.mxu0 0.0
        %1586 = vmatpush1.msra.mxu0 0.0
        %1587 = vmatprep.subr.mxu0 0.0
        %1588 = vmatpush1.msra.mxu0 0.0
        %1589 = vmatprep.subr.mxu0 0.0
        %1590 = vmatpush1.msra.mxu0 0.0
        %1591 = vmatprep.subr.mxu0 0.0
        %1592 = vmatpush1.msra.mxu0 0.0
        %1593 = vmatprep.subr.mxu0 0.0
        %1594 = vmatpush1.msra.mxu0 0.0
        %1595 = vmatprep.subr.mxu0 0.0
        %1596 = vmatpush1.msra.mxu0 0.0
        %1597 = vmatprep.subr.mxu0 0.0
        %1598 = vmatpush1.msra.mxu0 0.0
        %1599 = vmatprep.subr.mxu0 0.0
        %1600 = vmatpush1.msra.mxu0 0.0
        %1601 = vmatprep.subr.mxu0 0.0
        %1602 = vmatpush1.msra.mxu0 0.0
        %1603 = vmatprep.subr.mxu0 0.0
        %1604 = vmatpush1.msra.mxu0 0.0
        %1605 = vmatprep.subr.mxu0 0.0
        %1606 = vmatpush1.msra.mxu0 0.0
        %1607 = vmatprep.subr.mxu0 0.0
        %1608 = vmatpush1.msra.mxu0 0.0
        %1609 = vmatprep.subr.mxu0 0.0
        %1610 = vmatpush1.msra.mxu0 0.0
        %1611 = vmatprep.subr.mxu0 0.0
        %1612 = vmatpush1.msra.mxu0 0.0
        %1613 = vmatprep.subr.mxu0 0.0
        %1614 = vmatpush1.msra.mxu0 0.0
        %1615 = vmatprep.subr.mxu0 0.0
        %1616 = vmatpush1.msra.mxu0 0.0
        %1617 = vmatprep.subr.mxu0 0.0
        %1618 = vmatpush1.msra.mxu0 0.0
        %1619 = vmatprep.subr.mxu0 0.0
        %1620 = vmatpush1.msra.mxu0 0.0
        %1621 = vmatprep.subr.mxu0 0.0
        %1622 = vmatpush1.msra.mxu0 0.0
        %1623 = vmatprep.subr.mxu0 0.0
        %1624 = vmatpush1.msra.mxu0 0.0
        %1625 = vmatprep.subr.mxu0 0.0
        %1626 = vmatpush1.msra.mxu0 0.0
        %1627 = vmatprep.subr.mxu0 0.0
        %1628 = vmatpush1.msra.mxu0 0.0
        %1629 = vmatprep.subr.mxu0 0.0
        %1630 = vmatpush1.msra.mxu0 0.0
        %1631 = vmatprep.subr.mxu0 0.0
        %1632 = vmatpush1.msra.mxu0 0.0
        %1633 = vmatprep.subr.mxu0 0.0
        %1634 = vmatpush1.msra.mxu0 0.0
        %1635 = vmatprep.subr.mxu0 0.0
        %1636 = vmatpush1.msra.mxu0 0.0
        %1637 = vmatprep.mubr.f32.mxu0 0.0
        %1638 = vmatmul.mubr.f32.gmra.mrb[0].mxu0 %v1568
        %v1639 = vpop.f32.mrb[0].mxu0
        %v1640 = vadd.f32 0.0, %v1639
        %v1641 = vpop.f32.mrb[0].mxu0
        %1642 = vmatprep.mubr.f32.mxu0 0.0
        %1643 = vmatmul.mubr.f32.gmra.mrb[0].mxu0 %v1571
        %v1644 = vpop.f32.mrb[0].mxu0
        %v1645 = vadd.f32 0.0, %v1644
        %v1646 = vpop.f32.mrb[0].mxu0
        %1647 = vdwg.mxu0
        %v1648 = vmul.f32 %v1176, %v1176
        %v1649 = vmul.f32 %v1177, %v1177
        %1650 = vmatprep.subr.mxu0 0.0
        %1651 = vmatpush1.msra.mxu0 %v1648
        %1652 = vmatprep.subr.mxu0 0.0
        %1653 = vmatpush1.msra.mxu0 %v1649
        %1654 = vmatprep.subr.mxu0 0.0
        %1655 = vmatpush1.msra.mxu0 0.0
        %1656 = vmatprep.subr.mxu0 0.0
        %1657 = vmatpush1.msra.mxu0 0.0
        %1658 = vmatprep.subr.mxu0 0.0
        %1659 = vmatpush1.msra.mxu0 0.0
        %1660 = vmatprep.subr.mxu0 0.0
        %1661 = vmatpush1.msra.mxu0 0.0
        %1662 = vmatprep.subr.mxu0 0.0
        %1663 = vmatpush1.msra.mxu0 0.0
        %1664 = vmatprep.subr.mxu0 0.0
        %1665 = vmatpush1.msra.mxu0 0.0
        %1666 = vmatprep.subr.mxu0 0.0
        %1667 = vmatpush1.msra.mxu0 0.0
        %1668 = vmatprep.subr.mxu0 0.0
        %1669 = vmatpush1.msra.mxu0 0.0
        %1670 = vmatprep.subr.mxu0 0.0
        %1671 = vmatpush1.msra.mxu0 0.0
        %1672 = vmatprep.subr.mxu0 0.0
        %1673 = vmatpush1.msra.mxu0 0.0
        %1674 = vmatprep.subr.mxu0 0.0
        %1675 = vmatpush1.msra.mxu0 0.0
        %1676 = vmatprep.subr.mxu0 0.0
        %1677 = vmatpush1.msra.mxu0 0.0
        %1678 = vmatprep.subr.mxu0 0.0
        %1679 = vmatpush1.msra.mxu0 0.0
        %1680 = vmatprep.subr.mxu0 0.0
        %1681 = vmatpush1.msra.mxu0 0.0
        %1682 = vmatprep.subr.mxu0 0.0
        %1683 = vmatpush1.msra.mxu0 0.0
        %1684 = vmatprep.subr.mxu0 0.0
        %1685 = vmatpush1.msra.mxu0 0.0
        %1686 = vmatprep.subr.mxu0 0.0
        %1687 = vmatpush1.msra.mxu0 0.0
        %1688 = vmatprep.subr.mxu0 0.0
        %1689 = vmatpush1.msra.mxu0 0.0
        %1690 = vmatprep.subr.mxu0 0.0
        %1691 = vmatpush1.msra.mxu0 0.0
        %1692 = vmatprep.subr.mxu0 0.0
        %1693 = vmatpush1.msra.mxu0 0.0
        %1694 = vmatprep.subr.mxu0 0.0
        %1695 = vmatpush1.msra.mxu0 0.0
        %1696 = vmatprep.subr.mxu0 0.0
        %1697 = vmatpush1.msra.mxu0 0.0
        %1698 = vmatprep.subr.mxu0 0.0
        %1699 = vmatpush1.msra.mxu0 0.0
        %1700 = vmatprep.subr.mxu0 0.0
        %1701 = vmatpush1.msra.mxu0 0.0
        %1702 = vmatprep.subr.mxu0 0.0
        %1703 = vmatpush1.msra.mxu0 0.0
        %1704 = vmatprep.subr.mxu0 0.0
        %1705 = vmatpush1.msra.mxu0 0.0
        %1706 = vmatprep.subr.mxu0 0.0
        %1707 = vmatpush1.msra.mxu0 0.0
        %1708 = vmatprep.subr.mxu0 0.0
        %1709 = vmatpush1.msra.mxu0 0.0
        %1710 = vmatprep.subr.mxu0 0.0
        %1711 = vmatpush1.msra.mxu0 0.0
        %1712 = vmatprep.subr.mxu0 0.0
        %1713 = vmatpush1.msra.mxu0 0.0
        %1714 = vmatprep.mubr.f32.mxu0 0.0
        %1715 = vmatmul.mubr.f32.gmra.mrb[0].mxu0 %v330
        %v1716 = vpop.f32.mrb[0].mxu0
        %v1717 = vadd.f32 0.0, %v1716
        %v1718 = vpop.f32.mrb[0].mxu0
        %1719 = vmatprep.mubr.f32.mxu0 0.0
        %1720 = vmatmul.mubr.f32.gmra.mrb[0].mxu0 %v333
        %v1721 = vpop.f32.mrb[0].mxu0
        %v1722 = vadd.f32 0.0, %v1721
        %v1723 = vpop.f32.mrb[0].mxu0
        %1724 = vdwg.mxu0
        %v1726 = vsel %vm328, %v1717, 0
        %v1729 = vsel %vm328, %v1722, 0
        %1731 = vmatprep.subr.mxu0 0.0
        %1732 = vmatpush1.msra.mxu0 %v322
        %1733 = vmatprep.subr.mxu0 0.0
        %1734 = vmatpush1.msra.mxu0 %v323
        %1735 = vmatprep.subr.mxu0 0.0
        %1736 = vmatpush1.msra.mxu0 0.0
        %1737 = vmatprep.subr.mxu0 0.0
        %1738 = vmatpush1.msra.mxu0 0.0
        %1739 = vmatprep.subr.mxu0 0.0
        %1740 = vmatpush1.msra.mxu0 0.0
        %1741 = vmatprep.subr.mxu0 0.0
        %1742 = vmatpush1.msra.mxu0 0.0
        %1743 = vmatprep.subr.mxu0 0.0
        %1744 = vmatpush1.msra.mxu0 0.0
        %1745 = vmatprep.subr.mxu0 0.0
        %1746 = vmatpush1.msra.mxu0 0.0
        %1747 = vmatprep.subr.mxu0 0.0
        %1748 = vmatpush1.msra.mxu0 0.0
        %1749 = vmatprep.subr.mxu0 0.0
        %1750 = vmatpush1.msra.mxu0 0.0
        %1751 = vmatprep.subr.mxu0 0.0
        %1752 = vmatpush1.msra.mxu0 0.0
        %1753 = vmatprep.subr.mxu0 0.0
        %1754 = vmatpush1.msra.mxu0 0.0
        %1755 = vmatprep.subr.mxu0 0.0
        %1756 = vmatpush1.msra.mxu0 0.0
        %1757 = vmatprep.subr.mxu0 0.0
        %1758 = vmatpush1.msra.mxu0 0.0
        %1759 = vmatprep.subr.mxu0 0.0
        %1760 = vmatpush1.msra.mxu0 0.0
        %1761 = vmatprep.subr.mxu0 0.0
        %1762 = vmatpush1.msra.mxu0 0.0
        %1763 = vmatprep.subr.mxu0 0.0
        %1764 = vmatpush1.msra.mxu0 0.0
        %1765 = vmatprep.subr.mxu0 0.0
        %1766 = vmatpush1.msra.mxu0 0.0
        %1767 = vmatprep.subr.mxu0 0.0
        %1768 = vmatpush1.msra.mxu0 0.0
        %1769 = vmatprep.subr.mxu0 0.0
        %1770 = vmatpush1.msra.mxu0 0.0
        %1771 = vmatprep.subr.mxu0 0.0
        %1772 = vmatpush1.msra.mxu0 0.0
        %1773 = vmatprep.subr.mxu0 0.0
        %1774 = vmatpush1.msra.mxu0 0.0
        %1775 = vmatprep.subr.mxu0 0.0
        %1776 = vmatpush1.msra.mxu0 0.0
        %1777 = vmatprep.subr.mxu0 0.0
        %1778 = vmatpush1.msra.mxu0 0.0
        %1779 = vmatprep.subr.mxu0 0.0
        %1780 = vmatpush1.msra.mxu0 0.0
        %1781 = vmatprep.subr.mxu0 0.0
        %1782 = vmatpush1.msra.mxu0 0.0
        %1783 = vmatprep.subr.mxu0 0.0
        %1784 = vmatpush1.msra.mxu0 0.0
        %1785 = vmatprep.subr.mxu0 0.0
        %1786 = vmatpush1.msra.mxu0 0.0
        %1787 = vmatprep.subr.mxu0 0.0
        %1788 = vmatpush1.msra.mxu0 0.0
        %1789 = vmatprep.subr.mxu0 0.0
        %1790 = vmatpush1.msra.mxu0 0.0
        %1791 = vmatprep.subr.mxu0 0.0
        %1792 = vmatpush1.msra.mxu0 0.0
        %1793 = vmatprep.subr.mxu0 0.0
        %1794 = vmatpush1.msra.mxu0 0.0
        %1795 = vmatprep.mubr.f32.mxu0 0.0
        %1796 = vmatmul.mubr.f32.gmra.mrb[0].mxu0 %v1726
        %v1797 = vpop.f32.mrb[0].mxu0
        %v1798 = vadd.f32 0.0, %v1797
        %v1799 = vpop.f32.mrb[0].mxu0
        %1800 = vmatprep.mubr.f32.mxu0 0.0
        %1801 = vmatmul.mubr.f32.gmra.mrb[0].mxu0 %v1729
        %v1802 = vpop.f32.mrb[0].mxu0
        %v1803 = vadd.f32 0.0, %v1802
        %v1804 = vpop.f32.mrb[0].mxu0
        %1805 = vdwg.mxu0
        %v1806 = vmul.f32 %v1173, %v1176
        %v1807 = vmul.f32 %v1174, %v1177
        %1808 = vmatprep.subr.mxu0 0.0
        %1809 = vmatpush1.msra.mxu0 %v1806
        %1810 = vmatprep.subr.mxu0 0.0
        %1811 = vmatpush1.msra.mxu0 %v1807
        %1812 = vmatprep.subr.mxu0 0.0
        %1813 = vmatpush1.msra.mxu0 0.0
        %1814 = vmatprep.subr.mxu0 0.0
        %1815 = vmatpush1.msra.mxu0 0.0
        %1816 = vmatprep.subr.mxu0 0.0
        %1817 = vmatpush1.msra.mxu0 0.0
        %1818 = vmatprep.subr.mxu0 0.0
        %1819 = vmatpush1.msra.mxu0 0.0
        %1820 = vmatprep.subr.mxu0 0.0
        %1821 = vmatpush1.msra.mxu0 0.0
        %1822 = vmatprep.subr.mxu0 0.0
        %1823 = vmatpush1.msra.mxu0 0.0
        %1824 = vmatprep.subr.mxu0 0.0
        %1825 = vmatpush1.msra.mxu0 0.0
        %1826 = vmatprep.subr.mxu0 0.0
        %1827 = vmatpush1.msra.mxu0 0.0
        %1828 = vmatprep.subr.mxu0 0.0
        %1829 = vmatpush1.msra.mxu0 0.0
        %1830 = vmatprep.subr.mxu0 0.0
        %1831 = vmatpush1.msra.mxu0 0.0
        %1832 = vmatprep.subr.mxu0 0.0
        %1833 = vmatpush1.msra.mxu0 0.0
        %1834 = vmatprep.subr.mxu0 0.0
        %1835 = vmatpush1.msra.mxu0 0.0
        %1836 = vmatprep.subr.mxu0 0.0
        %1837 = vmatpush1.msra.mxu0 0.0
        %1838 = vmatprep.subr.mxu0 0.0
        %1839 = vmatpush1.msra.mxu0 0.0
        %1840 = vmatprep.subr.mxu0 0.0
        %1841 = vmatpush1.msra.mxu0 0.0
        %1842 = vmatprep.subr.mxu0 0.0
        %1843 = vmatpush1.msra.mxu0 0.0
        %1844 = vmatprep.subr.mxu0 0.0
        %1845 = vmatpush1.msra.mxu0 0.0
        %1846 = vmatprep.subr.mxu0 0.0
        %1847 = vmatpush1.msra.mxu0 0.0
        %1848 = vmatprep.subr.mxu0 0.0
        %1849 = vmatpush1.msra.mxu0 0.0
        %1850 = vmatprep.subr.mxu0 0.0
        %1851 = vmatpush1.msra.mxu0 0.0
        %1852 = vmatprep.subr.mxu0 0.0
        %1853 = vmatpush1.msra.mxu0 0.0
        %1854 = vmatprep.subr.mxu0 0.0
        %1855 = vmatpush1.msra.mxu0 0.0
        %1856 = vmatprep.subr.mxu0 0.0
        %1857 = vmatpush1.msra.mxu0 0.0
        %1858 = vmatprep.subr.mxu0 0.0
        %1859 = vmatpush1.msra.mxu0 0.0
        %1860 = vmatprep.subr.mxu0 0.0
        %1861 = vmatpush1.msra.mxu0 0.0
        %1862 = vmatprep.subr.mxu0 0.0
        %1863 = vmatpush1.msra.mxu0 0.0
        %1864 = vmatprep.subr.mxu0 0.0
        %1865 = vmatpush1.msra.mxu0 0.0
        %1866 = vmatprep.subr.mxu0 0.0
        %1867 = vmatpush1.msra.mxu0 0.0
        %1868 = vmatprep.subr.mxu0 0.0
        %1869 = vmatpush1.msra.mxu0 0.0
        %1870 = vmatprep.subr.mxu0 0.0
        %1871 = vmatpush1.msra.mxu0 0.0
        %1872 = vmatprep.mubr.f32.mxu0 0.0
        %1873 = vmatmul.mubr.f32.gmra.mrb[0].mxu0 %v330
        %v1874 = vpop.f32.mrb[0].mxu0
        %v1875 = vadd.f32 0.0, %v1874
        %v1876 = vpop.f32.mrb[0].mxu0
        %1877 = vmatprep.mubr.f32.mxu0 0.0
        %1878 = vmatmul.mubr.f32.gmra.mrb[0].mxu0 %v333
        %v1879 = vpop.f32.mrb[0].mxu0
        %v1880 = vadd.f32 0.0, %v1879
        %v1881 = vpop.f32.mrb[0].mxu0
        %1882 = vdwg.mxu0
        %v1884 = vsel %vm328, %v1875, 0
        %v1887 = vsel %vm328, %v1880, 0
        %1889 = vmatprep.subr.mxu0 0.0
        %1890 = vmatpush1.msra.mxu0 %v322
        %1891 = vmatprep.subr.mxu0 0.0
        %1892 = vmatpush1.msra.mxu0 %v323
        %1893 = vmatprep.subr.mxu0 0.0
        %1894 = vmatpush1.msra.mxu0 0.0
        %1895 = vmatprep.subr.mxu0 0.0
        %1896 = vmatpush1.msra.mxu0 0.0
        %1897 = vmatprep.subr.mxu0 0.0
        %1898 = vmatpush1.msra.mxu0 0.0
        %1899 = vmatprep.subr.mxu0 0.0
        %1900 = vmatpush1.msra.mxu0 0.0
        %1901 = vmatprep.subr.mxu0 0.0
        %1902 = vmatpush1.msra.mxu0 0.0
        %1903 = vmatprep.subr.mxu0 0.0
        %1904 = vmatpush1.msra.mxu0 0.0
        %1905 = vmatprep.subr.mxu0 0.0
        %1906 = vmatpush1.msra.mxu0 0.0
        %1907 = vmatprep.subr.mxu0 0.0
        %1908 = vmatpush1.msra.mxu0 0.0
        %1909 = vmatprep.subr.mxu0 0.0
        %1910 = vmatpush1.msra.mxu0 0.0
        %1911 = vmatprep.subr.mxu0 0.0
        %1912 = vmatpush1.msra.mxu0 0.0
        %1913 = vmatprep.subr.mxu0 0.0
        %1914 = vmatpush1.msra.mxu0 0.0
        %1915 = vmatprep.subr.mxu0 0.0
        %1916 = vmatpush1.msra.mxu0 0.0
        %1917 = vmatprep.subr.mxu0 0.0
        %1918 = vmatpush1.msra.mxu0 0.0
        %1919 = vmatprep.subr.mxu0 0.0
        %1920 = vmatpush1.msra.mxu0 0.0
        %1921 = vmatprep.subr.mxu0 0.0
        %1922 = vmatpush1.msra.mxu0 0.0
        %1923 = vmatprep.subr.mxu0 0.0
        %1924 = vmatpush1.msra.mxu0 0.0
        %1925 = vmatprep.subr.mxu0 0.0
        %1926 = vmatpush1.msra.mxu0 0.0
        %1927 = vmatprep.subr.mxu0 0.0
        %1928 = vmatpush1.msra.mxu0 0.0
        %1929 = vmatprep.subr.mxu0 0.0
        %1930 = vmatpush1.msra.mxu0 0.0
        %1931 = vmatprep.subr.mxu0 0.0
        %1932 = vmatpush1.msra.mxu0 0.0
        %1933 = vmatprep.subr.mxu0 0.0
        %1934 = vmatpush1.msra.mxu0 0.0
        %1935 = vmatprep.subr.mxu0 0.0
        %1936 = vmatpush1.msra.mxu0 0.0
        %1937 = vmatprep.subr.mxu0 0.0
        %1938 = vmatpush1.msra.mxu0 0.0
        %1939 = vmatprep.subr.mxu0 0.0
        %1940 = vmatpush1.msra.mxu0 0.0
        %1941 = vmatprep.subr.mxu0 0.0
        %1942 = vmatpush1.msra.mxu0 0.0
        %1943 = vmatprep.subr.mxu0 0.0
        %1944 = vmatpush1.msra.mxu0 0.0
        %1945 = vmatprep.subr.mxu0 0.0
        %1946 = vmatpush1.msra.mxu0 0.0
        %1947 = vmatprep.subr.mxu0 0.0
        %1948 = vmatpush1.msra.mxu0 0.0
        %1949 = vmatprep.subr.mxu0 0.0
        %1950 = vmatpush1.msra.mxu0 0.0
        %1951 = vmatprep.subr.mxu0 0.0
        %1952 = vmatpush1.msra.mxu0 0.0
        %1953 = vmatprep.mubr.f32.mxu0 0.0
        %1954 = vmatmul.mubr.f32.gmra.mrb[0].mxu0 %v1884
        %v1955 = vpop.f32.mrb[0].mxu0
        %v1956 = vadd.f32 0.0, %v1955
        %v1957 = vpop.f32.mrb[0].mxu0
        %1958 = vmatprep.mubr.f32.mxu0 0.0
        %1959 = vmatmul.mubr.f32.gmra.mrb[0].mxu0 %v1887
        %v1960 = vpop.f32.mrb[0].mxu0
        %v1961 = vadd.f32 0.0, %v1960
        %v1962 = vpop.f32.mrb[0].mxu0
        %1963 = vdwg.mxu0
        %v1964 = vmul.f32 %v1326, %v1326
        %v1965 = vmul.f32 %v1331, %v1331
        %v1966 = vmul.f32 %v1482, %v1482
        %v1967 = vmul.f32 %v1487, %v1487
        %v1968 = vmul.f32 %v1326, %v1482
        %v1969 = vmul.f32 %v1331, %v1487
        %v1970 = vsub.f32 %v1640, %v1964
        %v1971 = vsub.f32 %v1645, %v1965
        %v1972 = vsub.f32 %v1798, %v1966
        %v1973 = vsub.f32 %v1803, %v1967
        %v1974 = vsub.f32 %v1956, %v1968
        %v1975 = vsub.f32 %v1961, %v1969
        %v1976 = vmul.f32 %v1968, 2.0
        %v1977 = vmul.f32 %v1969, 2.0
        %v1978 = vadd.f32 %v1976, 0.0001
        %v1979 = vadd.f32 %v1977, 0.0001
        %v1980 = vmul.f32 %v1974, 2.0
        %v1981 = vmul.f32 %v1975, 2.0
        %v1982 = vadd.f32 %v1980, 0.0009
        %v1983 = vadd.f32 %v1981, 0.0009
        %v1984 = vmul.f32 %v1978, %v1982
        %v1985 = vmul.f32 %v1979, %v1983
        %v1986 = vadd.f32 %v1964, %v1966
        %v1987 = vadd.f32 %v1965, %v1967
        %v1988 = vadd.f32 %v1986, 0.0001
        %v1989 = vadd.f32 %v1987, 0.0001
        %v1990 = vmul.f32 %v1988, %v1970
        %v1991 = vmul.f32 %v1989, %v1971
        %v1992 = vadd.f32 %v1990, %v1972
        %v1993 = vadd.f32 %v1991, %v1973
        %v1994 = vadd.f32 %v1992, 0.0009
        %v1995 = vadd.f32 %v1993, 0.0009
        %v1996 = vrcp.pop %v1994
        %v1997 = vrcp.pop %v1995
        %v1998 = vmul.f32 %v1984, %v1996
        %v1999 = vmul.f32 %v1985, %v1997
        %v2000 = vsel %vm328, %v1998, 0.0
        %2001 = vadd.xlane.f32.xlu0 %v2000
        %v2002 = vpop.xlane.xlu0 %2001
        %v2003 = vsel %vm328, %v1999, 0.0
        %2004 = vadd.xlane.f32.xlu0 %v2003
        %v2005 = vpop.xlane.xlu0 %2004
        %v2006 = vadd.f32 %v2002, %v2005
        %v2007 = vrot.slane %v2006, 4
        %v2008 = vadd.f32 %v2006, %v2007
        %v2009 = vrot.slane %v2008, 2
        %v2010 = vadd.f32 %v2008, %v2009
        %v2011 = vrot.slane %v2010, 1
        %v2012 = vadd.f32 %v2010, %v2011
        %s2013 = scalar_lea.vmem %s318, 1
        %2014 = vst.msk [vmem:[%s2013] sm:$0x1] %vm1170, %v2012
        %s2015 = scalar_lea.vmem %s259, 32 [#allocation2]
        %v2016 = vld [vmem:[%s2015] sm:$0xff]
        %v2017 = vld [vmem:[%s2015 + $0x8] sm:$0xff]
        %s2018 = scalar_lea.vmem %s268, 32 [#allocation4]
        %v2019 = vld [vmem:[%s2018] sm:$0xff]
        %v2020 = vld [vmem:[%s2018 + $0x8] sm:$0xff]
        %2021 = vmatprep.subr.mxu0 0.0
        %2022 = vmatpush1.msra.mxu0 %v2016
        %2023 = vmatprep.subr.mxu0 0.0
        %2024 = vmatpush1.msra.mxu0 %v2017
        %2025 = vmatprep.subr.mxu0 0.0
        %2026 = vmatpush1.msra.mxu0 0.0
        %2027 = vmatprep.subr.mxu0 0.0
        %2028 = vmatpush1.msra.mxu0 0.0
        %2029 = vmatprep.subr.mxu0 0.0
        %2030 = vmatpush1.msra.mxu0 0.0
        %2031 = vmatprep.subr.mxu0 0.0
        %2032 = vmatpush1.msra.mxu0 0.0
        %2033 = vmatprep.subr.mxu0 0.0
        %2034 = vmatpush1.msra.mxu0 0.0
        %2035 = vmatprep.subr.mxu0 0.0
        %2036 = vmatpush1.msra.mxu0 0.0
        %2037 = vmatprep.subr.mxu0 0.0
        %2038 = vmatpush1.msra.mxu0 0.0
        %2039 = vmatprep.subr.mxu0 0.0
        %2040 = vmatpush1.msra.mxu0 0.0
        %2041 = vmatprep.subr.mxu0 0.0
        %2042 = vmatpush1.msra.mxu0 0.0
        %2043 = vmatprep.subr.mxu0 0.0
        %2044 = vmatpush1.msra.mxu0 0.0
        %2045 = vmatprep.subr.mxu0 0.0
        %2046 = vmatpush1.msra.mxu0 0.0
        %2047 = vmatprep.subr.mxu0 0.0
        %2048 = vmatpush1.msra.mxu0 0.0
        %2049 = vmatprep.subr.mxu0 0.0
        %2050 = vmatpush1.msra.mxu0 0.0
        %2051 = vmatprep.subr.mxu0 0.0
        %2052 = vmatpush1.msra.mxu0 0.0
        %2053 = vmatprep.subr.mxu0 0.0
        %2054 = vmatpush1.msra.mxu0 0.0
        %2055 = vmatprep.subr.mxu0 0.0
        %2056 = vmatpush1.msra.mxu0 0.0
        %2057 = vmatprep.subr.mxu0 0.0
        %2058 = vmatpush1.msra.mxu0 0.0
        %2059 = vmatprep.subr.mxu0 0.0
        %2060 = vmatpush1.msra.mxu0 0.0
        %2061 = vmatprep.subr.mxu0 0.0
        %2062 = vmatpush1.msra.mxu0 0.0
        %2063 = vmatprep.subr.mxu0 0.0
        %2064 = vmatpush1.msra.mxu0 0.0
        %2065 = vmatprep.subr.mxu0 0.0
        %2066 = vmatpush1.msra.mxu0 0.0
        %2067 = vmatprep.subr.mxu0 0.0
        %2068 = vmatpush1.msra.mxu0 0.0
        %2069 = vmatprep.subr.mxu0 0.0
        %2070 = vmatpush1.msra.mxu0 0.0
        %2071 = vmatprep.subr.mxu0 0.0
        %2072 = vmatpush1.msra.mxu0 0.0
        %2073 = vmatprep.subr.mxu0 0.0
        %2074 = vmatpush1.msra.mxu0 0.0
        %2075 = vmatprep.subr.mxu0 0.0
        %2076 = vmatpush1.msra.mxu0 0.0
        %2077 = vmatprep.subr.mxu0 0.0
        %2078 = vmatpush1.msra.mxu0 0.0
        %2079 = vmatprep.subr.mxu0 0.0
        %2080 = vmatpush1.msra.mxu0 0.0
        %2081 = vmatprep.subr.mxu0 0.0
        %2082 = vmatpush1.msra.mxu0 0.0
        %2083 = vmatprep.subr.mxu0 0.0
        %2084 = vmatpush1.msra.mxu0 0.0
        %2085 = vmatprep.mubr.f32.mxu0 0.0
        %2086 = vmatmul.mubr.f32.gmra.mrb[0].mxu0 %v330
        %v2087 = vpop.f32.mrb[0].mxu0
        %v2088 = vadd.f32 0.0, %v2087
        %v2089 = vpop.f32.mrb[0].mxu0
        %2090 = vmatprep.mubr.f32.mxu0 0.0
        %2091 = vmatmul.mubr.f32.gmra.mrb[0].mxu0 %v333
        %v2092 = vpop.f32.mrb[0].mxu0
        %v2093 = vadd.f32 0.0, %v2092
        %v2094 = vpop.f32.mrb[0].mxu0
        %2095 = vdwg.mxu0
        %v2097 = vsel %vm328, %v2088, 0
        %v2100 = vsel %vm328, %v2093, 0
        %2102 = vmatprep.subr.mxu0 0.0
        %2103 = vmatpush1.msra.mxu0 %v322
        %2104 = vmatprep.subr.mxu0 0.0
        %2105 = vmatpush1.msra.mxu0 %v323
        %2106 = vmatprep.subr.mxu0 0.0
        %2107 = vmatpush1.msra.mxu0 0.0
        %2108 = vmatprep.subr.mxu0 0.0
        %2109 = vmatpush1.msra.mxu0 0.0
        %2110 = vmatprep.subr.mxu0 0.0
        %2111 = vmatpush1.msra.mxu0 0.0
        %2112 = vmatprep.subr.mxu0 0.0
        %2113 = vmatpush1.msra.mxu0 0.0
        %2114 = vmatprep.subr.mxu0 0.0
        %2115 = vmatpush1.msra.mxu0 0.0
        %2116 = vmatprep.subr.mxu0 0.0
        %2117 = vmatpush1.msra.mxu0 0.0
        %2118 = vmatprep.subr.mxu0 0.0
        %2119 = vmatpush1.msra.mxu0 0.0
        %2120 = vmatprep.subr.mxu0 0.0
        %2121 = vmatpush1.msra.mxu0 0.0
        %2122 = vmatprep.subr.mxu0 0.0
        %2123 = vmatpush1.msra.mxu0 0.0
        %2124 = vmatprep.subr.mxu0 0.0
        %2125 = vmatpush1.msra.mxu0 0.0
        %2126 = vmatprep.subr.mxu0 0.0
        %2127 = vmatpush1.msra.mxu0 0.0
        %2128 = vmatprep.subr.mxu0 0.0
        %2129 = vmatpush1.msra.mxu0 0.0
        %2130 = vmatprep.subr.mxu0 0.0
        %2131 = vmatpush1.msra.mxu0 0.0
        %2132 = vmatprep.subr.mxu0 0.0
        %2133 = vmatpush1.msra.mxu0 0.0
        %2134 = vmatprep.subr.mxu0 0.0
        %2135 = vmatpush1.msra.mxu0 0.0
        %2136 = vmatprep.subr.mxu0 0.0
        %2137 = vmatpush1.msra.mxu0 0.0
        %2138 = vmatprep.subr.mxu0 0.0
        %2139 = vmatpush1.msra.mxu0 0.0
        %2140 = vmatprep.subr.mxu0 0.0
        %2141 = vmatpush1.msra.mxu0 0.0
        %2142 = vmatprep.subr.mxu0 0.0
        %2143 = vmatpush1.msra.mxu0 0.0
        %2144 = vmatprep.subr.mxu0 0.0
        %2145 = vmatpush1.msra.mxu0 0.0
        %2146 = vmatprep.subr.mxu0 0.0
        %2147 = vmatpush1.msra.mxu0 0.0
        %2148 = vmatprep.subr.mxu0 0.0
        %2149 = vmatpush1.msra.mxu0 0.0
        %2150 = vmatprep.subr.mxu0 0.0
        %2151 = vmatpush1.msra.mxu0 0.0
        %2152 = vmatprep.subr.mxu0 0.0
        %2153 = vmatpush1.msra.mxu0 0.0
        %2154 = vmatprep.subr.mxu0 0.0
        %2155 = vmatpush1.msra.mxu0 0.0
        %2156 = vmatprep.subr.mxu0 0.0
        %2157 = vmatpush1.msra.mxu0 0.0
        %2158 = vmatprep.subr.mxu0 0.0
        %2159 = vmatpush1.msra.mxu0 0.0
        %2160 = vmatprep.subr.mxu0 0.0
        %2161 = vmatpush1.msra.mxu0 0.0
        %2162 = vmatprep.subr.mxu0 0.0
        %2163 = vmatpush1.msra.mxu0 0.0
        %2164 = vmatprep.subr.mxu0 0.0
        %2165 = vmatpush1.msra.mxu0 0.0
        %2166 = vmatprep.mubr.f32.mxu0 0.0
        %2167 = vmatmul.mubr.f32.gmra.mrb[0].mxu0 %v2097
        %v2168 = vpop.f32.mrb[0].mxu0
        %v2169 = vadd.f32 0.0, %v2168
        %v2170 = vpop.f32.mrb[0].mxu0
        %2171 = vmatprep.mubr.f32.mxu0 0.0
        %2172 = vmatmul.mubr.f32.gmra.mrb[0].mxu0 %v2100
        %v2173 = vpop.f32.mrb[0].mxu0
        %v2174 = vadd.f32 0.0, %v2173
        %v2175 = vpop.f32.mrb[0].mxu0
        %2176 = vdwg.mxu0
        %2177 = vmatprep.subr.mxu0 0.0
        %2178 = vmatpush1.msra.mxu0 %v2019
        %2179 = vmatprep.subr.mxu0 0.0
        %2180 = vmatpush1.msra.mxu0 %v2020
        %2181 = vmatprep.subr.mxu0 0.0
        %2182 = vmatpush1.msra.mxu0 0.0
        %2183 = vmatprep.subr.mxu0 0.0
        %2184 = vmatpush1.msra.mxu0 0.0
        %2185 = vmatprep.subr.mxu0 0.0
        %2186 = vmatpush1.msra.mxu0 0.0
        %2187 = vmatprep.subr.mxu0 0.0
        %2188 = vmatpush1.msra.mxu0 0.0
        %2189 = vmatprep.subr.mxu0 0.0
        %2190 = vmatpush1.msra.mxu0 0.0
        %2191 = vmatprep.subr.mxu0 0.0
        %2192 = vmatpush1.msra.mxu0 0.0
        %2193 = vmatprep.subr.mxu0 0.0
        %2194 = vmatpush1.msra.mxu0 0.0
        %2195 = vmatprep.subr.mxu0 0.0
        %2196 = vmatpush1.msra.mxu0 0.0
        %2197 = vmatprep.subr.mxu0 0.0
        %2198 = vmatpush1.msra.mxu0 0.0
        %2199 = vmatprep.subr.mxu0 0.0
        %2200 = vmatpush1.msra.mxu0 0.0
        %2201 = vmatprep.subr.mxu0 0.0
        %2202 = vmatpush1.msra.mxu0 0.0
        %2203 = vmatprep.subr.mxu0 0.0
        %2204 = vmatpush1.msra.mxu0 0.0
        %2205 = vmatprep.subr.mxu0 0.0
        %2206 = vmatpush1.msra.mxu0 0.0
        %2207 = vmatprep.subr.mxu0 0.0
        %2208 = vmatpush1.msra.mxu0 0.0
        %2209 = vmatprep.subr.mxu0 0.0
        %2210 = vmatpush1.msra.mxu0 0.0
        %2211 = vmatprep.subr.mxu0 0.0
        %2212 = vmatpush1.msra.mxu0 0.0
        %2213 = vmatprep.subr.mxu0 0.0
        %2214 = vmatpush1.msra.mxu0 0.0
        %2215 = vmatprep.subr.mxu0 0.0
        %2216 = vmatpush1.msra.mxu0 0.0
        %2217 = vmatprep.subr.mxu0 0.0
        %2218 = vmatpush1.msra.mxu0 0.0
        %2219 = vmatprep.subr.mxu0 0.0
        %2220 = vmatpush1.msra.mxu0 0.0
        %2221 = vmatprep.subr.mxu0 0.0
        %2222 = vmatpush1.msra.mxu0 0.0
        %2223 = vmatprep.subr.mxu0 0.0
        %2224 = vmatpush1.msra.mxu0 0.0
        %2225 = vmatprep.subr.mxu0 0.0
        %2226 = vmatpush1.msra.mxu0 0.0
        %2227 = vmatprep.subr.mxu0 0.0
        %2228 = vmatpush1.msra.mxu0 0.0
        %2229 = vmatprep.subr.mxu0 0.0
        %2230 = vmatpush1.msra.mxu0 0.0
        %2231 = vmatprep.subr.mxu0 0.0
        %2232 = vmatpush1.msra.mxu0 0.0
        %2233 = vmatprep.subr.mxu0 0.0
        %2234 = vmatpush1.msra.mxu0 0.0
        %2235 = vmatprep.subr.mxu0 0.0
        %2236 = vmatpush1.msra.mxu0 0.0
        %2237 = vmatprep.subr.mxu0 0.0
        %2238 = vmatpush1.msra.mxu0 0.0
        %2239 = vmatprep.subr.mxu0 0.0
        %2240 = vmatpush1.msra.mxu0 0.0
        %2241 = vmatprep.mubr.f32.mxu0 0.0
        %2242 = vmatmul.mubr.f32.gmra.mrb[0].mxu0 %v330
        %v2243 = vpop.f32.mrb[0].mxu0
        %v2244 = vadd.f32 0.0, %v2243
        %v2245 = vpop.f32.mrb[0].mxu0
        %2246 = vmatprep.mubr.f32.mxu0 0.0
        %2247 = vmatmul.mubr.f32.gmra.mrb[0].mxu0 %v333
        %v2248 = vpop.f32.mrb[0].mxu0
        %v2249 = vadd.f32 0.0, %v2248
        %v2250 = vpop.f32.mrb[0].mxu0
        %2251 = vdwg.mxu0
        %v2253 = vsel %vm328, %v2244, 0
        %v2256 = vsel %vm328, %v2249, 0
        %2258 = vmatprep.subr.mxu0 0.0
        %2259 = vmatpush1.msra.mxu0 %v322
        %2260 = vmatprep.subr.mxu0 0.0
        %2261 = vmatpush1.msra.mxu0 %v323
        %2262 = vmatprep.subr.mxu0 0.0
        %2263 = vmatpush1.msra.mxu0 0.0
        %2264 = vmatprep.subr.mxu0 0.0
        %2265 = vmatpush1.msra.mxu0 0.0
        %2266 = vmatprep.subr.mxu0 0.0
        %2267 = vmatpush1.msra.mxu0 0.0
        %2268 = vmatprep.subr.mxu0 0.0
        %2269 = vmatpush1.msra.mxu0 0.0
        %2270 = vmatprep.subr.mxu0 0.0
        %2271 = vmatpush1.msra.mxu0 0.0
        %2272 = vmatprep.subr.mxu0 0.0
        %2273 = vmatpush1.msra.mxu0 0.0
        %2274 = vmatprep.subr.mxu0 0.0
        %2275 = vmatpush1.msra.mxu0 0.0
        %2276 = vmatprep.subr.mxu0 0.0
        %2277 = vmatpush1.msra.mxu0 0.0
        %2278 = vmatprep.subr.mxu0 0.0
        %2279 = vmatpush1.msra.mxu0 0.0
        %2280 = vmatprep.subr.mxu0 0.0
        %2281 = vmatpush1.msra.mxu0 0.0
        %2282 = vmatprep.subr.mxu0 0.0
        %2283 = vmatpush1.msra.mxu0 0.0
        %2284 = vmatprep.subr.mxu0 0.0
        %2285 = vmatpush1.msra.mxu0 0.0
        %2286 = vmatprep.subr.mxu0 0.0
        %2287 = vmatpush1.msra.mxu0 0.0
        %2288 = vmatprep.subr.mxu0 0.0
        %2289 = vmatpush1.msra.mxu0 0.0
        %2290 = vmatprep.subr.mxu0 0.0
        %2291 = vmatpush1.msra.mxu0 0.0
        %2292 = vmatprep.subr.mxu0 0.0
        %2293 = vmatpush1.msra.mxu0 0.0
        %2294 = vmatprep.subr.mxu0 0.0
        %2295 = vmatpush1.msra.mxu0 0.0
        %2296 = vmatprep.subr.mxu0 0.0
        %2297 = vmatpush1.msra.mxu0 0.0
        %2298 = vmatprep.subr.mxu0 0.0
        %2299 = vmatpush1.msra.mxu0 0.0
        %2300 = vmatprep.subr.mxu0 0.0
        %2301 = vmatpush1.msra.mxu0 0.0
        %2302 = vmatprep.subr.mxu0 0.0
        %2303 = vmatpush1.msra.mxu0 0.0
        %2304 = vmatprep.subr.mxu0 0.0
        %2305 = vmatpush1.msra.mxu0 0.0
        %2306 = vmatprep.subr.mxu0 0.0
        %2307 = vmatpush1.msra.mxu0 0.0
        %2308 = vmatprep.subr.mxu0 0.0
        %2309 = vmatpush1.msra.mxu0 0.0
        %2310 = vmatprep.subr.mxu0 0.0
        %2311 = vmatpush1.msra.mxu0 0.0
        %2312 = vmatprep.subr.mxu0 0.0
        %2313 = vmatpush1.msra.mxu0 0.0
        %2314 = vmatprep.subr.mxu0 0.0
        %2315 = vmatpush1.msra.mxu0 0.0
        %2316 = vmatprep.subr.mxu0 0.0
        %2317 = vmatpush1.msra.mxu0 0.0
        %2318 = vmatprep.subr.mxu0 0.0
        %2319 = vmatpush1.msra.mxu0 0.0
        %2320 = vmatprep.subr.mxu0 0.0
        %2321 = vmatpush1.msra.mxu0 0.0
        %2322 = vmatprep.mubr.f32.mxu0 0.0
        %2323 = vmatmul.mubr.f32.gmra.mrb[0].mxu0 %v2253
        %v2324 = vpop.f32.mrb[0].mxu0
        %v2325 = vadd.f32 0.0, %v2324
        %v2326 = vpop.f32.mrb[0].mxu0
        %2327 = vmatprep.mubr.f32.mxu0 0.0
        %2328 = vmatmul.mubr.f32.gmra.mrb[0].mxu0 %v2256
        %v2329 = vpop.f32.mrb[0].mxu0
        %v2330 = vadd.f32 0.0, %v2329
        %v2331 = vpop.f32.mrb[0].mxu0
        %2332 = vdwg.mxu0
        %v2333 = vmul.f32 %v2016, %v2016
        %v2334 = vmul.f32 %v2017, %v2017
        %2335 = vmatprep.subr.mxu0 0.0
        %2336 = vmatpush1.msra.mxu0 %v2333
        %2337 = vmatprep.subr.mxu0 0.0
        %2338 = vmatpush1.msra.mxu0 %v2334
        %2339 = vmatprep.subr.mxu0 0.0
        %2340 = vmatpush1.msra.mxu0 0.0
        %2341 = vmatprep.subr.mxu0 0.0
        %2342 = vmatpush1.msra.mxu0 0.0
        %2343 = vmatprep.subr.mxu0 0.0
        %2344 = vmatpush1.msra.mxu0 0.0
        %2345 = vmatprep.subr.mxu0 0.0
        %2346 = vmatpush1.msra.mxu0 0.0
        %2347 = vmatprep.subr.mxu0 0.0
        %2348 = vmatpush1.msra.mxu0 0.0
        %2349 = vmatprep.subr.mxu0 0.0
        %2350 = vmatpush1.msra.mxu0 0.0
        %2351 = vmatprep.subr.mxu0 0.0
        %2352 = vmatpush1.msra.mxu0 0.0
        %2353 = vmatprep.subr.mxu0 0.0
        %2354 = vmatpush1.msra.mxu0 0.0
        %2355 = vmatprep.subr.mxu0 0.0
        %2356 = vmatpush1.msra.mxu0 0.0
        %2357 = vmatprep.subr.mxu0 0.0
        %2358 = vmatpush1.msra.mxu0 0.0
        %2359 = vmatprep.subr.mxu0 0.0
        %2360 = vmatpush1.msra.mxu0 0.0
        %2361 = vmatprep.subr.mxu0 0.0
        %2362 = vmatpush1.msra.mxu0 0.0
        %2363 = vmatprep.subr.mxu0 0.0
        %2364 = vmatpush1.msra.mxu0 0.0
        %2365 = vmatprep.subr.mxu0 0.0
        %2366 = vmatpush1.msra.mxu0 0.0
        %2367 = vmatprep.subr.mxu0 0.0
        %2368 = vmatpush1.msra.mxu0 0.0
        %2369 = vmatprep.subr.mxu0 0.0
        %2370 = vmatpush1.msra.mxu0 0.0
        %2371 = vmatprep.subr.mxu0 0.0
        %2372 = vmatpush1.msra.mxu0 0.0
        %2373 = vmatprep.subr.mxu0 0.0
        %2374 = vmatpush1.msra.mxu0 0.0
        %2375 = vmatprep.subr.mxu0 0.0
        %2376 = vmatpush1.msra.mxu0 0.0
        %2377 = vmatprep.subr.mxu0 0.0
        %2378 = vmatpush1.msra.mxu0 0.0
        %2379 = vmatprep.subr.mxu0 0.0
        %2380 = vmatpush1.msra.mxu0 0.0
        %2381 = vmatprep.subr.mxu0 0.0
        %2382 = vmatpush1.msra.mxu0 0.0
        %2383 = vmatprep.subr.mxu0 0.0
        %2384 = vmatpush1.msra.mxu0 0.0
        %2385 = vmatprep.subr.mxu0 0.0
        %2386 = vmatpush1.msra.mxu0 0.0
        %2387 = vmatprep.subr.mxu0 0.0
        %2388 = vmatpush1.msra.mxu0 0.0
        %2389 = vmatprep.subr.mxu0 0.0
        %2390 = vmatpush1.msra.mxu0 0.0
        %2391 = vmatprep.subr.mxu0 0.0
        %2392 = vmatpush1.msra.mxu0 0.0
        %2393 = vmatprep.subr.mxu0 0.0
        %2394 = vmatpush1.msra.mxu0 0.0
        %2395 = vmatprep.subr.mxu0 0.0
        %2396 = vmatpush1.msra.mxu0 0.0
        %2397 = vmatprep.subr.mxu0 0.0
        %2398 = vmatpush1.msra.mxu0 0.0
        %2399 = vmatprep.mubr.f32.mxu0 0.0
        %2400 = vmatmul.mubr.f32.gmra.mrb[0].mxu0 %v330
        %v2401 = vpop.f32.mrb[0].mxu0
        %v2402 = vadd.f32 0.0, %v2401
        %v2403 = vpop.f32.mrb[0].mxu0
        %2404 = vmatprep.mubr.f32.mxu0 0.0
        %2405 = vmatmul.mubr.f32.gmra.mrb[0].mxu0 %v333
        %v2406 = vpop.f32.mrb[0].mxu0
        %v2407 = vadd.f32 0.0, %v2406
        %v2408 = vpop.f32.mrb[0].mxu0
        %2409 = vdwg.mxu0
        %v2411 = vsel %vm328, %v2402, 0
        %v2414 = vsel %vm328, %v2407, 0
        %2416 = vmatprep.subr.mxu0 0.0
        %2417 = vmatpush1.msra.mxu0 %v322
        %2418 = vmatprep.subr.mxu0 0.0
        %2419 = vmatpush1.msra.mxu0 %v323
        %2420 = vmatprep.subr.mxu0 0.0
        %2421 = vmatpush1.msra.mxu0 0.0
        %2422 = vmatprep.subr.mxu0 0.0
        %2423 = vmatpush1.msra.mxu0 0.0
        %2424 = vmatprep.subr.mxu0 0.0
        %2425 = vmatpush1.msra.mxu0 0.0
        %2426 = vmatprep.subr.mxu0 0.0
        %2427 = vmatpush1.msra.mxu0 0.0
        %2428 = vmatprep.subr.mxu0 0.0
        %2429 = vmatpush1.msra.mxu0 0.0
        %2430 = vmatprep.subr.mxu0 0.0
        %2431 = vmatpush1.msra.mxu0 0.0
        %2432 = vmatprep.subr.mxu0 0.0
        %2433 = vmatpush1.msra.mxu0 0.0
        %2434 = vmatprep.subr.mxu0 0.0
        %2435 = vmatpush1.msra.mxu0 0.0
        %2436 = vmatprep.subr.mxu0 0.0
        %2437 = vmatpush1.msra.mxu0 0.0
        %2438 = vmatprep.subr.mxu0 0.0
        %2439 = vmatpush1.msra.mxu0 0.0
        %2440 = vmatprep.subr.mxu0 0.0
        %2441 = vmatpush1.msra.mxu0 0.0
        %2442 = vmatprep.subr.mxu0 0.0
        %2443 = vmatpush1.msra.mxu0 0.0
        %2444 = vmatprep.subr.mxu0 0.0
        %2445 = vmatpush1.msra.mxu0 0.0
        %2446 = vmatprep.subr.mxu0 0.0
        %2447 = vmatpush1.msra.mxu0 0.0
        %2448 = vmatprep.subr.mxu0 0.0
        %2449 = vmatpush1.msra.mxu0 0.0
        %2450 = vmatprep.subr.mxu0 0.0
        %2451 = vmatpush1.msra.mxu0 0.0
        %2452 = vmatprep.subr.mxu0 0.0
        %2453 = vmatpush1.msra.mxu0 0.0
        %2454 = vmatprep.subr.mxu0 0.0
        %2455 = vmatpush1.msra.mxu0 0.0
        %2456 = vmatprep.subr.mxu0 0.0
        %2457 = vmatpush1.msra.mxu0 0.0
        %2458 = vmatprep.subr.mxu0 0.0
        %2459 = vmatpush1.msra.mxu0 0.0
        %2460 = vmatprep.subr.mxu0 0.0
        %2461 = vmatpush1.msra.mxu0 0.0
        %2462 = vmatprep.subr.mxu0 0.0
        %2463 = vmatpush1.msra.mxu0 0.0
        %2464 = vmatprep.subr.mxu0 0.0
        %2465 = vmatpush1.msra.mxu0 0.0
        %2466 = vmatprep.subr.mxu0 0.0
        %2467 = vmatpush1.msra.mxu0 0.0
        %2468 = vmatprep.subr.mxu0 0.0
        %2469 = vmatpush1.msra.mxu0 0.0
        %2470 = vmatprep.subr.mxu0 0.0
        %2471 = vmatpush1.msra.mxu0 0.0
        %2472 = vmatprep.subr.mxu0 0.0
        %2473 = vmatpush1.msra.mxu0 0.0
        %2474 = vmatprep.subr.mxu0 0.0
        %2475 = vmatpush1.msra.mxu0 0.0
        %2476 = vmatprep.subr.mxu0 0.0
        %2477 = vmatpush1.msra.mxu0 0.0
        %2478 = vmatprep.subr.mxu0 0.0
        %2479 = vmatpush1.msra.mxu0 0.0
        %2480 = vmatprep.mubr.f32.mxu0 0.0
        %2481 = vmatmul.mubr.f32.gmra.mrb[0].mxu0 %v2411
        %v2482 = vpop.f32.mrb[0].mxu0
        %v2483 = vadd.f32 0.0, %v2482
        %v2484 = vpop.f32.mrb[0].mxu0
        %2485 = vmatprep.mubr.f32.mxu0 0.0
        %2486 = vmatmul.mubr.f32.gmra.mrb[0].mxu0 %v2414
        %v2487 = vpop.f32.mrb[0].mxu0
        %v2488 = vadd.f32 0.0, %v2487
        %v2489 = vpop.f32.mrb[0].mxu0
        %2490 = vdwg.mxu0
        %v2491 = vmul.f32 %v2019, %v2019
        %v2492 = vmul.f32 %v2020, %v2020
        %2493 = vmatprep.subr.mxu0 0.0
        %2494 = vmatpush1.msra.mxu0 %v2491
        %2495 = vmatprep.subr.mxu0 0.0
        %2496 = vmatpush1.msra.mxu0 %v2492
        %2497 = vmatprep.subr.mxu0 0.0
        %2498 = vmatpush1.msra.mxu0 0.0
        %2499 = vmatprep.subr.mxu0 0.0
        %2500 = vmatpush1.msra.mxu0 0.0
        %2501 = vmatprep.subr.mxu0 0.0
        %2502 = vmatpush1.msra.mxu0 0.0
        %2503 = vmatprep.subr.mxu0 0.0
        %2504 = vmatpush1.msra.mxu0 0.0
        %2505 = vmatprep.subr.mxu0 0.0
        %2506 = vmatpush1.msra.mxu0 0.0
        %2507 = vmatprep.subr.mxu0 0.0
        %2508 = vmatpush1.msra.mxu0 0.0
        %2509 = vmatprep.subr.mxu0 0.0
        %2510 = vmatpush1.msra.mxu0 0.0
        %2511 = vmatprep.subr.mxu0 0.0
        %2512 = vmatpush1.msra.mxu0 0.0
        %2513 = vmatprep.subr.mxu0 0.0
        %2514 = vmatpush1.msra.mxu0 0.0
        %2515 = vmatprep.subr.mxu0 0.0
        %2516 = vmatpush1.msra.mxu0 0.0
        %2517 = vmatprep.subr.mxu0 0.0
        %2518 = vmatpush1.msra.mxu0 0.0
        %2519 = vmatprep.subr.mxu0 0.0
        %2520 = vmatpush1.msra.mxu0 0.0
        %2521 = vmatprep.subr.mxu0 0.0
        %2522 = vmatpush1.msra.mxu0 0.0
        %2523 = vmatprep.subr.mxu0 0.0
        %2524 = vmatpush1.msra.mxu0 0.0
        %2525 = vmatprep.subr.mxu0 0.0
        %2526 = vmatpush1.msra.mxu0 0.0
        %2527 = vmatprep.subr.mxu0 0.0
        %2528 = vmatpush1.msra.mxu0 0.0
        %2529 = vmatprep.subr.mxu0 0.0
        %2530 = vmatpush1.msra.mxu0 0.0
        %2531 = vmatprep.subr.mxu0 0.0
        %2532 = vmatpush1.msra.mxu0 0.0
        %2533 = vmatprep.subr.mxu0 0.0
        %2534 = vmatpush1.msra.mxu0 0.0
        %2535 = vmatprep.subr.mxu0 0.0
        %2536 = vmatpush1.msra.mxu0 0.0
        %2537 = vmatprep.subr.mxu0 0.0
        %2538 = vmatpush1.msra.mxu0 0.0
        %2539 = vmatprep.subr.mxu0 0.0
        %2540 = vmatpush1.msra.mxu0 0.0
        %2541 = vmatprep.subr.mxu0 0.0
        %2542 = vmatpush1.msra.mxu0 0.0
        %2543 = vmatprep.subr.mxu0 0.0
        %2544 = vmatpush1.msra.mxu0 0.0
        %2545 = vmatprep.subr.mxu0 0.0
        %2546 = vmatpush1.msra.mxu0 0.0
        %2547 = vmatprep.subr.mxu0 0.0
        %2548 = vmatpush1.msra.mxu0 0.0
        %2549 = vmatprep.subr.mxu0 0.0
        %2550 = vmatpush1.msra.mxu0 0.0
        %2551 = vmatprep.subr.mxu0 0.0
        %2552 = vmatpush1.msra.mxu0 0.0
        %2553 = vmatprep.subr.mxu0 0.0
        %2554 = vmatpush1.msra.mxu0 0.0
        %2555 = vmatprep.subr.mxu0 0.0
        %2556 = vmatpush1.msra.mxu0 0.0
        %2557 = vmatprep.mubr.f32.mxu0 0.0
        %2558 = vmatmul.mubr.f32.gmra.mrb[0].mxu0 %v330
        %v2559 = vpop.f32.mrb[0].mxu0
        %v2560 = vadd.f32 0.0, %v2559
        %v2561 = vpop.f32.mrb[0].mxu0
        %2562 = vmatprep.mubr.f32.mxu0 0.0
        %2563 = vmatmul.mubr.f32.gmra.mrb[0].mxu0 %v333
        %v2564 = vpop.f32.mrb[0].mxu0
        %v2565 = vadd.f32 0.0, %v2564
        %v2566 = vpop.f32.mrb[0].mxu0
        %2567 = vdwg.mxu0
        %v2569 = vsel %vm328, %v2560, 0
        %v2572 = vsel %vm328, %v2565, 0
        %2574 = vmatprep.subr.mxu0 0.0
        %2575 = vmatpush1.msra.mxu0 %v322
        %2576 = vmatprep.subr.mxu0 0.0
        %2577 = vmatpush1.msra.mxu0 %v323
        %2578 = vmatprep.subr.mxu0 0.0
        %2579 = vmatpush1.msra.mxu0 0.0
        %2580 = vmatprep.subr.mxu0 0.0
        %2581 = vmatpush1.msra.mxu0 0.0
        %2582 = vmatprep.subr.mxu0 0.0
        %2583 = vmatpush1.msra.mxu0 0.0
        %2584 = vmatprep.subr.mxu0 0.0
        %2585 = vmatpush1.msra.mxu0 0.0
        %2586 = vmatprep.subr.mxu0 0.0
        %2587 = vmatpush1.msra.mxu0 0.0
        %2588 = vmatprep.subr.mxu0 0.0
        %2589 = vmatpush1.msra.mxu0 0.0
        %2590 = vmatprep.subr.mxu0 0.0
        %2591 = vmatpush1.msra.mxu0 0.0
        %2592 = vmatprep.subr.mxu0 0.0
        %2593 = vmatpush1.msra.mxu0 0.0
        %2594 = vmatprep.subr.mxu0 0.0
        %2595 = vmatpush1.msra.mxu0 0.0
        %2596 = vmatprep.subr.mxu0 0.0
        %2597 = vmatpush1.msra.mxu0 0.0
        %2598 = vmatprep.subr.mxu0 0.0
        %2599 = vmatpush1.msra.mxu0 0.0
        %2600 = vmatprep.subr.mxu0 0.0
        %2601 = vmatpush1.msra.mxu0 0.0
        %2602 = vmatprep.subr.mxu0 0.0
        %2603 = vmatpush1.msra.mxu0 0.0
        %2604 = vmatprep.subr.mxu0 0.0
        %2605 = vmatpush1.msra.mxu0 0.0
        %2606 = vmatprep.subr.mxu0 0.0
        %2607 = vmatpush1.msra.mxu0 0.0
        %2608 = vmatprep.subr.mxu0 0.0
        %2609 = vmatpush1.msra.mxu0 0.0
        %2610 = vmatprep.subr.mxu0 0.0
        %2611 = vmatpush1.msra.mxu0 0.0
        %2612 = vmatprep.subr.mxu0 0.0
        %2613 = vmatpush1.msra.mxu0 0.0
        %2614 = vmatprep.subr.mxu0 0.0
        %2615 = vmatpush1.msra.mxu0 0.0
        %2616 = vmatprep.subr.mxu0 0.0
        %2617 = vmatpush1.msra.mxu0 0.0
        %2618 = vmatprep.subr.mxu0 0.0
        %2619 = vmatpush1.msra.mxu0 0.0
        %2620 = vmatprep.subr.mxu0 0.0
        %2621 = vmatpush1.msra.mxu0 0.0
        %2622 = vmatprep.subr.mxu0 0.0
        %2623 = vmatpush1.msra.mxu0 0.0
        %2624 = vmatprep.subr.mxu0 0.0
        %2625 = vmatpush1.msra.mxu0 0.0
        %2626 = vmatprep.subr.mxu0 0.0
        %2627 = vmatpush1.msra.mxu0 0.0
        %2628 = vmatprep.subr.mxu0 0.0
        %2629 = vmatpush1.msra.mxu0 0.0
        %2630 = vmatprep.subr.mxu0 0.0
        %2631 = vmatpush1.msra.mxu0 0.0
        %2632 = vmatprep.subr.mxu0 0.0
        %2633 = vmatpush1.msra.mxu0 0.0
        %2634 = vmatprep.subr.mxu0 0.0
        %2635 = vmatpush1.msra.mxu0 0.0
        %2636 = vmatprep.subr.mxu0 0.0
        %2637 = vmatpush1.msra.mxu0 0.0
        %2638 = vmatprep.mubr.f32.mxu0 0.0
        %2639 = vmatmul.mubr.f32.gmra.mrb[0].mxu0 %v2569
        %v2640 = vpop.f32.mrb[0].mxu0
        %v2641 = vadd.f32 0.0, %v2640
        %v2642 = vpop.f32.mrb[0].mxu0
        %2643 = vmatprep.mubr.f32.mxu0 0.0
        %2644 = vmatmul.mubr.f32.gmra.mrb[0].mxu0 %v2572
        %v2645 = vpop.f32.mrb[0].mxu0
        %v2646 = vadd.f32 0.0, %v2645
        %v2647 = vpop.f32.mrb[0].mxu0
        %2648 = vdwg.mxu0
        %v2649 = vmul.f32 %v2016, %v2019
        %v2650 = vmul.f32 %v2017, %v2020
        %2651 = vmatprep.subr.mxu0 0.0
        %2652 = vmatpush1.msra.mxu0 %v2649
        %2653 = vmatprep.subr.mxu0 0.0
        %2654 = vmatpush1.msra.mxu0 %v2650
        %2655 = vmatprep.subr.mxu0 0.0
        %2656 = vmatpush1.msra.mxu0 0.0
        %2657 = vmatprep.subr.mxu0 0.0
        %2658 = vmatpush1.msra.mxu0 0.0
        %2659 = vmatprep.subr.mxu0 0.0
        %2660 = vmatpush1.msra.mxu0 0.0
        %2661 = vmatprep.subr.mxu0 0.0
        %2662 = vmatpush1.msra.mxu0 0.0
        %2663 = vmatprep.subr.mxu0 0.0
        %2664 = vmatpush1.msra.mxu0 0.0
        %2665 = vmatprep.subr.mxu0 0.0
        %2666 = vmatpush1.msra.mxu0 0.0
        %2667 = vmatprep.subr.mxu0 0.0
        %2668 = vmatpush1.msra.mxu0 0.0
        %2669 = vmatprep.subr.mxu0 0.0
        %2670 = vmatpush1.msra.mxu0 0.0
        %2671 = vmatprep.subr.mxu0 0.0
        %2672 = vmatpush1.msra.mxu0 0.0
        %2673 = vmatprep.subr.mxu0 0.0
        %2674 = vmatpush1.msra.mxu0 0.0
        %2675 = vmatprep.subr.mxu0 0.0
        %2676 = vmatpush1.msra.mxu0 0.0
        %2677 = vmatprep.subr.mxu0 0.0
        %2678 = vmatpush1.msra.mxu0 0.0
        %2679 = vmatprep.subr.mxu0 0.0
        %2680 = vmatpush1.msra.mxu0 0.0
        %2681 = vmatprep.subr.mxu0 0.0
        %2682 = vmatpush1.msra.mxu0 0.0
        %2683 = vmatprep.subr.mxu0 0.0
        %2684 = vmatpush1.msra.mxu0 0.0
        %2685 = vmatprep.subr.mxu0 0.0
        %2686 = vmatpush1.msra.mxu0 0.0
        %2687 = vmatprep.subr.mxu0 0.0
        %2688 = vmatpush1.msra.mxu0 0.0
        %2689 = vmatprep.subr.mxu0 0.0
        %2690 = vmatpush1.msra.mxu0 0.0
        %2691 = vmatprep.subr.mxu0 0.0
        %2692 = vmatpush1.msra.mxu0 0.0
        %2693 = vmatprep.subr.mxu0 0.0
        %2694 = vmatpush1.msra.mxu0 0.0
        %2695 = vmatprep.subr.mxu0 0.0
        %2696 = vmatpush1.msra.mxu0 0.0
        %2697 = vmatprep.subr.mxu0 0.0
        %2698 = vmatpush1.msra.mxu0 0.0
        %2699 = vmatprep.subr.mxu0 0.0
        %2700 = vmatpush1.msra.mxu0 0.0
        %2701 = vmatprep.subr.mxu0 0.0
        %2702 = vmatpush1.msra.mxu0 0.0
        %2703 = vmatprep.subr.mxu0 0.0
        %2704 = vmatpush1.msra.mxu0 0.0
        %2705 = vmatprep.subr.mxu0 0.0
        %2706 = vmatpush1.msra.mxu0 0.0
        %2707 = vmatprep.subr.mxu0 0.0
        %2708 = vmatpush1.msra.mxu0 0.0
        %2709 = vmatprep.subr.mxu0 0.0
        %2710 = vmatpush1.msra.mxu0 0.0
        %2711 = vmatprep.subr.mxu0 0.0
        %2712 = vmatpush1.msra.mxu0 0.0
        %2713 = vmatprep.subr.mxu0 0.0
        %2714 = vmatpush1.msra.mxu0 0.0
        %2715 = vmatprep.mubr.f32.mxu0 0.0
        %2716 = vmatmul.mubr.f32.gmra.mrb[0].mxu0 %v330
        %v2717 = vpop.f32.mrb[0].mxu0
        %v2718 = vadd.f32 0.0, %v2717
        %v2719 = vpop.f32.mrb[0].mxu0
        %2720 = vmatprep.mubr.f32.mxu0 0.0
        %2721 = vmatmul.mubr.f32.gmra.mrb[0].mxu0 %v333
        %v2722 = vpop.f32.mrb[0].mxu0
        %v2723 = vadd.f32 0.0, %v2722
        %v2724 = vpop.f32.mrb[0].mxu0
        %2725 = vdwg.mxu0
        %v2727 = vsel %vm328, %v2718, 0
        %v2730 = vsel %vm328, %v2723, 0
        %2732 = vmatprep.subr.mxu0 0.0
        %2733 = vmatpush1.msra.mxu0 %v322
        %2734 = vmatprep.subr.mxu0 0.0
        %2735 = vmatpush1.msra.mxu0 %v323
        %2736 = vmatprep.subr.mxu0 0.0
        %2737 = vmatpush1.msra.mxu0 0.0
        %2738 = vmatprep.subr.mxu0 0.0
        %2739 = vmatpush1.msra.mxu0 0.0
        %2740 = vmatprep.subr.mxu0 0.0
        %2741 = vmatpush1.msra.mxu0 0.0
        %2742 = vmatprep.subr.mxu0 0.0
        %2743 = vmatpush1.msra.mxu0 0.0
        %2744 = vmatprep.subr.mxu0 0.0
        %2745 = vmatpush1.msra.mxu0 0.0
        %2746 = vmatprep.subr.mxu0 0.0
        %2747 = vmatpush1.msra.mxu0 0.0
        %2748 = vmatprep.subr.mxu0 0.0
        %2749 = vmatpush1.msra.mxu0 0.0
        %2750 = vmatprep.subr.mxu0 0.0
        %2751 = vmatpush1.msra.mxu0 0.0
        %2752 = vmatprep.subr.mxu0 0.0
        %2753 = vmatpush1.msra.mxu0 0.0
        %2754 = vmatprep.subr.mxu0 0.0
        %2755 = vmatpush1.msra.mxu0 0.0
        %2756 = vmatprep.subr.mxu0 0.0
        %2757 = vmatpush1.msra.mxu0 0.0
        %2758 = vmatprep.subr.mxu0 0.0
        %2759 = vmatpush1.msra.mxu0 0.0
        %2760 = vmatprep.subr.mxu0 0.0
        %2761 = vmatpush1.msra.mxu0 0.0
        %2762 = vmatprep.subr.mxu0 0.0
        %2763 = vmatpush1.msra.mxu0 0.0
        %2764 = vmatprep.subr.mxu0 0.0
        %2765 = vmatpush1.msra.mxu0 0.0
        %2766 = vmatprep.subr.mxu0 0.0
        %2767 = vmatpush1.msra.mxu0 0.0
        %2768 = vmatprep.subr.mxu0 0.0
        %2769 = vmatpush1.msra.mxu0 0.0
        %2770 = vmatprep.subr.mxu0 0.0
        %2771 = vmatpush1.msra.mxu0 0.0
        %2772 = vmatprep.subr.mxu0 0.0
        %2773 = vmatpush1.msra.mxu0 0.0
        %2774 = vmatprep.subr.mxu0 0.0
        %2775 = vmatpush1.msra.mxu0 0.0
        %2776 = vmatprep.subr.mxu0 0.0
        %2777 = vmatpush1.msra.mxu0 0.0
        %2778 = vmatprep.subr.mxu0 0.0
        %2779 = vmatpush1.msra.mxu0 0.0
        %2780 = vmatprep.subr.mxu0 0.0
        %2781 = vmatpush1.msra.mxu0 0.0
        %2782 = vmatprep.subr.mxu0 0.0
        %2783 = vmatpush1.msra.mxu0 0.0
        %2784 = vmatprep.subr.mxu0 0.0
        %2785 = vmatpush1.msra.mxu0 0.0
        %2786 = vmatprep.subr.mxu0 0.0
        %2787 = vmatpush1.msra.mxu0 0.0
        %2788 = vmatprep.subr.mxu0 0.0
        %2789 = vmatpush1.msra.mxu0 0.0
        %2790 = vmatprep.subr.mxu0 0.0
        %2791 = vmatpush1.msra.mxu0 0.0
        %2792 = vmatprep.subr.mxu0 0.0
        %2793 = vmatpush1.msra.mxu0 0.0
        %2794 = vmatprep.subr.mxu0 0.0
        %2795 = vmatpush1.msra.mxu0 0.0
        %2796 = vmatprep.mubr.f32.mxu0 0.0
        %2797 = vmatmul.mubr.f32.gmra.mrb[0].mxu0 %v2727
        %v2798 = vpop.f32.mrb[0].mxu0
        %v2799 = vadd.f32 0.0, %v2798
        %v2800 = vpop.f32.mrb[0].mxu0
        %2801 = vmatprep.mubr.f32.mxu0 0.0
        %2802 = vmatmul.mubr.f32.gmra.mrb[0].mxu0 %v2730
        %v2803 = vpop.f32.mrb[0].mxu0
        %v2804 = vadd.f32 0.0, %v2803
        %v2805 = vpop.f32.mrb[0].mxu0
        %2806 = vdwg.mxu0
        %v2807 = vmul.f32 %v2169, %v2169
        %v2808 = vmul.f32 %v2174, %v2174
        %v2809 = vmul.f32 %v2325, %v2325
        %v2810 = vmul.f32 %v2330, %v2330
        %v2811 = vmul.f32 %v2169, %v2325
        %v2812 = vmul.f32 %v2174, %v2330
        %v2813 = vsub.f32 %v2483, %v2807
        %v2814 = vsub.f32 %v2488, %v2808
        %v2815 = vsub.f32 %v2641, %v2809
        %v2816 = vsub.f32 %v2646, %v2810
        %v2817 = vsub.f32 %v2799, %v2811
        %v2818 = vsub.f32 %v2804, %v2812
        %v2819 = vmul.f32 %v2811, 2.0
        %v2820 = vmul.f32 %v2812, 2.0
        %v2821 = vadd.f32 %v2819, 0.0001
        %v2822 = vadd.f32 %v2820, 0.0001
        %v2823 = vmul.f32 %v2817, 2.0
        %v2824 = vmul.f32 %v2818, 2.0
        %v2825 = vadd.f32 %v2823, 0.0009
        %v2826 = vadd.f32 %v2824, 0.0009
        %v2827 = vmul.f32 %v2821, %v2825
        %v2828 = vmul.f32 %v2822, %v2826
        %v2829 = vadd.f32 %v2807, %v2809
        %v2830 = vadd.f32 %v2808, %v2810
        %v2831 = vadd.f32 %v2829, 0.0001
        %v2832 = vadd.f32 %v2830, 0.0001
        %v2833 = vmul.f32 %v2831, %v2813
        %v2834 = vmul.f32 %v2832, %v2814
        %v2835 = vadd.f32 %v2833, %v2815
        %v2836 = vadd.f32 %v2834, %v2816
        %v2837 = vadd.f32 %v2835, 0.0009
        %v2838 = vadd.f32 %v2836, 0.0009
        %v2839 = vrcp.pop %v2837
        %v2840 = vrcp.pop %v2838
        %v2841 = vmul.f32 %v2827, %v2839
        %v2842 = vmul.f32 %v2828, %v2840
        %v2843 = vsel %vm328, %v2841, 0.0
        %2844 = vadd.xlane.f32.xlu0 %v2843
        %v2845 = vpop.xlane.xlu0 %2844
        %v2846 = vsel %vm328, %v2842, 0.0
        %2847 = vadd.xlane.f32.xlu0 %v2846
        %v2848 = vpop.xlane.xlu0 %2847
        %v2849 = vadd.f32 %v2845, %v2848
        %v2850 = vrot.slane %v2849, 4
        %v2851 = vadd.f32 %v2849, %v2850
        %v2852 = vrot.slane %v2851, 2
        %v2853 = vadd.f32 %v2851, %v2852
        %v2854 = vrot.slane %v2853, 1
        %v2855 = vadd.f32 %v2853, %v2854
        %s2856 = scalar_lea.vmem %s318, 2
        %2857 = vst.msk [vmem:[%s2856] sm:$0x1] %vm1170, %v2855
        %s2858 = smul.u32 3, %s27
        %p2859 = scmp.lt.s32.totalorder %s26, 1
        %s2860 = scalar_select %p2859, %s26, 1
        %p2861 = scmp.lt.s32.totalorder %s2858, 2
        %s2862 = scalar_select %p2861, %s2858, 2
        %s2863 = smul.addr %s2860, 3
        %s2864 = sadd.s32 %s2862, %s2863
        %s2865 = scalar_lea.vmem %s4, %s2864
        // Predicated region
        $region53: #{tpu_custom_call.1} parent=35 // pred_check
          %p2866 = pneg %p152
        $region54: #{tpu_custom_call.1} parent=35 // pred_check_branch
          %2868 = sbr.rel (%p2866) target = $region56
        $region55: #{tpu_custom_call.1} parent=35 // pred_region
          %s2869 = smul.u32 3, %s27
        $region56: #{tpu_custom_call.1} parent=35 // pred_fallthru
          _
      $region36: #{tpu_custom_call.1} parent=5 // pred_fallthru
        _
      %p2870 = scmp.le.s32.totalorder 2, %s17
      // Predicated region
      $region57: #{tpu_custom_call.1} parent=5 // pred_check
        %p2871 = pneg %p2870
      $region58: #{tpu_custom_call.1} parent=5 // pred_check_branch
        %2873 = sbr.rel (%p2871) target = $region60
      $region59: #{tpu_custom_call.1} parent=5 // pred_region
        %s2874 = ssub.s32 %s17, 2
        // Predicated region
        $region61: #{tpu_custom_call.1} parent=59 // pred_check
          %p2875 = pneg %p158
        $region62: #{tpu_custom_call.1} parent=59 // pred_check_branch
          %2877 = sbr.rel (%p2875) target = $region64
        $region63: #{tpu_custom_call.1} parent=59 // pred_region
          %s2878 = smul.u32 3, %s29
          %p2879 = scmp.lt.s32.totalorder %s28, 1
          %s2880 = scalar_select %p2879, %s28, 1
          %p2881 = scmp.lt.s32.totalorder %s2878, 2
          %s2882 = scalar_select %p2881, %s2878, 2
          %s2883 = smul.addr %s2880, 3
          %s2884 = sadd.s32 %s2882, %s2883
          %s2885 = scalar_lea.vmem %s4, %s2884
        $region64: #{tpu_custom_call.1} parent=59 // pred_fallthru
          _
      $region60: #{tpu_custom_call.1} parent=5 // pred_fallthru
        _
    $region6: #{tpu_custom_call.1} parent=1 // loop_footer
      %s21 = sadd.s32 1, %s17
    $region7: #{tpu_custom_call.1} parent=1 // loop_footer_branch
      %16 = sbr.rel target = $region3
    $region8: #{tpu_custom_call.1} parent=1 // loop_exit
      _
    %2886 = vsyncpa [#allocation3], 1
    %s2887 = scalar_lea.sflag [#allocation3], 1
    %2888 = vsyncpa %s2887, 1
    %2889 = vsyncpa [#allocation5], 1
    %s2890 = scalar_lea.sflag [#allocation5], 1
    %2891 = vsyncpa %s2890, 1
    %2892 = vsyncpa [#allocation8], 1

</llo_original>
